<compile_context>
chip_gen: v6e
topology: v6e:2x2x1
jax: 0.10.0
libtpu: 0.0.40
codegen_flags: <defaults>
</compile_context>

<pallas_src>
import math
import numpy as np
import jax
import jax.numpy as jnp
from jax.experimental import pallas as pl
from jax.experimental.pallas import tpu as pltpu


def make_lstm_attention_kernel(Bb, S, I, H, L, K):
    G = 4 * H

    def kernel(*refs):
        x_ref = refs[0]                     # (Bb, S, I)
        layer_refs = refs[1:1 + 3 * L]      # per layer: w_ih^T, w_hh^T, bias
        fcw_ref = refs[1 + 3 * L]           # (H, K)
        fcb_ref = refs[2 + 3 * L]           # (1, K)
        out_ref = refs[3 + 3 * L]           # (1, Bb, K)
        gx_buf = refs[4 + 3 * L]            # VMEM scratch (Bb, S, 4H)
        h_buf = refs[5 + 3 * L]             # VMEM scratch (Bb, S, H)

        h = jnp.zeros((Bb, H), jnp.float32)

        for layer in range(L):
            wih_ref, whh_ref, b_ref = layer_refs[3 * layer:3 * layer + 3]
            in_dim = I if layer == 0 else H
            inp2d = (x_ref[...] if layer == 0 else h_buf[...]).reshape(Bb * S, in_dim)

            # Input->gate projection for ALL timesteps in one MXU matmul (off the
            # serial recurrence chain).  Default (single-pass) MXU precision.
            gx = jnp.dot(inp2d, wih_ref[...], preferred_element_type=jnp.float32)
            gx_buf[...] = (gx + b_ref[...]).reshape(Bb, S, G)

            whh = whh_ref[...]               # (H, 4H)

            # Hoist the per-step gate inputs: they don't depend on h/c, so with the
            # unrolled loop these loads overlap the latency-bound recurrence.
            gx_ts = [gx_buf[:, pl.ds(t, 1), :].reshape(Bb, G) for t in range(S)]

            h = jnp.zeros((Bb, H), jnp.float32)
            c = jnp.zeros((Bb, H), jnp.float32)
            for t in range(S):               # fully unrolled: S is small and static
                gates = gx_ts[t] + jnp.dot(h, whh, preferred_element_type=jnp.float32)
                i_g = jax.nn.sigmoid(gates[:, 0:H])
                f_g = jax.nn.sigmoid(gates[:, H:2 * H])
                g_g = jnp.tanh(gates[:, 2 * H:3 * H])
                o_g = jax.nn.sigmoid(gates[:, 3 * H:4 * H])
                c = f_g * c + i_g * g_g
                h = o_g * jnp.tanh(c)
                # Off-chain store of this step's hidden state (layer output history).
                h_buf[:, pl.ds(t, 1), :] = h[:, None, :]

        lstm_out = h_buf[...]                # (Bb, S, H) -- last layer outputs
        hidden = h                           # (Bb, H)    -- h_n[-1]

        # attn_weights = bmm(lstm_out, hidden.unsqueeze(2)).squeeze(2) -> (Bb, S)
        attn = jnp.sum(lstm_out * hidden[:, None, :], axis=2)
        attn_max = jnp.max(attn, axis=1, keepdims=True)
        e = jnp.exp(attn - attn_max)
        soft = e * pl.reciprocal(jnp.sum(e, axis=1, keepdims=True), approx=True)
        # new_hidden = bmm(lstm_out^T, soft.unsqueeze(2)).squeeze(2) -> (Bb, H)
        new_hidden = jnp.sum(lstm_out * soft[:, :, None], axis=1)

        res = jnp.dot(new_hidden, fcw_ref[...],
                      preferred_element_type=jnp.float32) + fcb_ref[...]
        out_ref[...] = res[None]

    return kernel


def _num_batch_blocks(B):
    """Split the batch across both TensorCores on v7x; single block elsewhere."""
    try:
        kind = jax.devices()[0].device_kind.lower()
    except Exception:
        kind = ""
    if ("v7" in kind or "7x" in kind) and B % 2 == 0:
        return 2
    return 1


def lstm_attention_forward(x, layer_params, fc_w_t, fc_b, batch_blocks=None):
    B, S, I = x.shape
    H = layer_params[0][1].shape[0]
    L = len(layer_params)
    K = fc_w_t.shape[1]
    G = 4 * H

    nb = _num_batch_blocks(B) if batch_blocks is None else batch_blocks
    assert B % nb == 0
    Bb = B // nb

    flat_params = []
    for (wih_t, whh_t, b) in layer_params:
        flat_params += [wih_t, whh_t, b]

    def full_spec(arr):
        nd = arr.ndim
        return pl.BlockSpec(arr.shape, lambda i, _nd=nd: (0,) * _nd)

    in_specs = [pl.BlockSpec((Bb, S, I), lambda i: (i, 0, 0))]
    in_specs += [full_spec(p) for p in flat_params]
    in_specs += [full_spec(fc_w_t), full_spec(fc_b)]

    kernel = make_lstm_attention_kernel(Bb, S, I, H, L, K)

    out3 = pl.pallas_call(
        kernel,
        out_shape=jax.ShapeDtypeStruct((nb, Bb, K), jnp.float32),
        grid=(nb,),
        in_specs=in_specs,
        out_specs=pl.BlockSpec((1, Bb, K), lambda i: (i, 0, 0)),
        scratch_shapes=[
            pltpu.VMEM((Bb, S, G), jnp.float32),   # precomputed input gates
            pltpu.VMEM((Bb, S, H), jnp.float32),   # per-layer hidden outputs
        ],
        compiler_params=pltpu.CompilerParams(
            dimension_semantics=("parallel",)),
    )(x, *flat_params, fc_w_t, fc_b)
    return out3.reshape(B, K)


def reference_forward(x, layer_params, fc_w_t, fc_b):
    """Pure-JAX reference matching PyTorch nn.LSTM + attention + fc semantics
    (same default matmul precision as the kernel)."""
    B, S, _ = x.shape
    H = layer_params[0][1].shape[0]
    inp = x
    h = None
    for (wih_t, whh_t, b) in layer_params:
        h = jnp.zeros((B, H), jnp.float32)
        c = jnp.zeros((B, H), jnp.float32)
        outs = []
        for t in range(S):
            gates = jnp.dot(inp[:, t, :], wih_t) + jnp.dot(h, whh_t) + b
            i_g = jax.nn.sigmoid(gates[:, :H])
            f_g = jax.nn.sigmoid(gates[:, H:2 * H])
            g_g = jnp.tanh(gates[:, 2 * H:3 * H])
            o_g = jax.nn.sigmoid(gates[:, 3 * H:])
            c = f_g * c + i_g * g_g
            h = o_g * jnp.tanh(c)
            outs.append(h)
        inp = jnp.stack(outs, axis=1)
    attn = jnp.sum(inp * h[:, None, :], axis=2)
    soft = jax.nn.softmax(attn, axis=1)
    new_h = jnp.sum(inp * soft[:, :, None], axis=1)
    return jnp.dot(new_h, fc_w_t) + fc_b


if __name__ == "__main__":
    B, S = 4, 8
    input_size, hidden_size, num_layers, num_keys = 4, 32, 2, 16

    key = jax.random.PRNGKey(0)
    scale = 1.0 / math.sqrt(hidden_size)

    def uni(k, shape):
        return jax.random.uniform(k, shape, jnp.float32, -scale, scale)

    keys = jax.random.split(key, 4 * num_layers + 3)
    ki = 0
    layer_params = []
    for layer in range(num_layers):
        in_dim = input_size if layer == 0 else hidden_size
        w_ih = uni(keys[ki], (4 * hidden_size, in_dim)); ki += 1
        w_hh = uni(keys[ki], (4 * hidden_size, hidden_size)); ki += 1
        b_ih = uni(keys[ki], (4 * hidden_size,)); ki += 1
        b_hh = uni(keys[ki], (4 * hidden_size,)); ki += 1
        layer_params.append((w_ih.T, w_hh.T,
                             (b_ih + b_hh).reshape(1, 4 * hidden_size)))
    fc_w = uni(keys[ki], (num_keys, hidden_size)); ki += 1
    fc_b = uni(keys[ki], (num_keys,)); ki += 1
    x = jax.random.normal(keys[ki], (B, S, input_size), jnp.float32)

    fc_w_t = fc_w.T
    fc_b2 = fc_b.reshape(1, num_keys)

    out = lstm_attention_forward(x, layer_params, fc_w_t, fc_b2)
    out = jax.block_until_ready(out)

    ref = jax.block_until_ready(reference_forward(x, layer_params, fc_w_t, fc_b2))

    assert out.shape == (B, num_keys)
    if not np.allclose(np.asarray(out), np.asarray(ref), atol=2e-3, rtol=2e-3):
        raise AssertionError("Pallas kernel output mismatch vs JAX reference")
    print("KERNEL_OK")
</pallas_src>

<mosaic_0001>
module attributes {stable_mosaic.version = 11 : i64} {
  func.func @kernel(%arg0: i32, %arg1: memref<4x8x4xf32, #tpu.memory_space<vmem>>, %arg2: memref<4x128xf32, #tpu.memory_space<vmem>>, %arg3: memref<32x128xf32, #tpu.memory_space<vmem>>, %arg4: memref<1x128xf32, #tpu.memory_space<vmem>>, %arg5: memref<32x128xf32, #tpu.memory_space<vmem>>, %arg6: memref<32x128xf32, #tpu.memory_space<vmem>>, %arg7: memref<1x128xf32, #tpu.memory_space<vmem>>, %arg8: memref<32x16xf32, #tpu.memory_space<vmem>>, %arg9: memref<1x16xf32, #tpu.memory_space<vmem>>, %arg10: memref<1x4x16xf32, #tpu.memory_space<vmem>>, %arg11: memref<4x8x128xf32, #tpu.memory_space<vmem>>, %arg12: memref<4x8x32xf32, #tpu.memory_space<vmem>>) attributes {dimension_semantics = [#tpu.dimension_semantics<parallel>], iteration_bounds = array<i64: 1>, scalar_prefetch = 0 : i64, scratch_operands = 2 : i64, tpu.core_type = #tpu.core_type<tc>, window_params = [{transform_indices = @transform_0, window_bounds = array<i64: 4, 8, 4>}, {pipeline_mode = #tpu.pipeline_mode<synchronous>, transform_indices = @transform_1, window_bounds = array<i64: 4, 128>}, {pipeline_mode = #tpu.pipeline_mode<synchronous>, transform_indices = @transform_2, window_bounds = array<i64: 32, 128>}, {pipeline_mode = #tpu.pipeline_mode<synchronous>, transform_indices = @transform_3, window_bounds = array<i64: 1, 128>}, {pipeline_mode = #tpu.pipeline_mode<synchronous>, transform_indices = @transform_4, window_bounds = array<i64: 32, 128>}, {pipeline_mode = #tpu.pipeline_mode<synchronous>, transform_indices = @transform_5, window_bounds = array<i64: 32, 128>}, {pipeline_mode = #tpu.pipeline_mode<synchronous>, transform_indices = @transform_6, window_bounds = array<i64: 1, 128>}, {pipeline_mode = #tpu.pipeline_mode<synchronous>, transform_indices = @transform_7, window_bounds = array<i64: 32, 16>}, {pipeline_mode = #tpu.pipeline_mode<synchronous>, transform_indices = @transform_8, window_bounds = array<i64: 1, 16>}, {transform_indices = @transform_9, window_bounds = array<i64: 1, 4, 16>}]} {
    %c0 = arith.constant 0 : index
    %c0_0 = arith.constant 0 : index
    %c0_1 = arith.constant 0 : index
    %0 = vector.load %arg1[%c0, %c0_0, %c0_1] : memref<4x8x4xf32, #tpu.memory_space<vmem>>, vector<4x8x4xf32>
    %1 = vector.shape_cast %0 : vector<4x8x4xf32> to vector<32x4xf32>
    %c0_2 = arith.constant 0 : index
    %c0_3 = arith.constant 0 : index
    %2 = vector.load %arg2[%c0_2, %c0_3] : memref<4x128xf32, #tpu.memory_space<vmem>>, vector<4x128xf32>
    %cst = arith.constant dense<0.000000e+00> : vector<32x128xf32>
    %3 = tpu.matmul %1, %2, %cst {dimension_numbers = #tpu.dot_dimension_numbers<[1], [0], [0], [1], [0, 0, 1, 1], [], []>} : vector<32x4xf32>, vector<4x128xf32>, vector<32x128xf32> -> vector<32x128xf32>
    %c0_4 = arith.constant 0 : index
    %c0_5 = arith.constant 0 : index
    %4 = vector.load %arg4[%c0_4, %c0_5] : memref<1x128xf32, #tpu.memory_space<vmem>>, vector<1x128xf32>
    %5 = vector.broadcast %4 : vector<1x128xf32> to vector<32x128xf32>
    %6 = arith.addf %3, %5 : vector<32x128xf32>
    %7 = vector.shape_cast %6 : vector<32x128xf32> to vector<4x8x128xf32>
    %c0_6 = arith.constant 0 : index
    %c0_7 = arith.constant 0 : index
    %c0_8 = arith.constant 0 : index
    %8 = vector.load %arg11[%c0_6, %c0_7, %c0_8] : memref<4x8x128xf32, #tpu.memory_space<vmem>>, vector<4x8x128xf32>
    tpu.vector_store %arg11[%c0_6, %c0_7, %c0_8], %7 {strides = array<i32>} : memref<4x8x128xf32, #tpu.memory_space<vmem>>, vector<4x8x128xf32>,
    %c0_9 = arith.constant 0 : index
    %c0_10 = arith.constant 0 : index
    %9 = vector.load %arg3[%c0_9, %c0_10] : memref<32x128xf32, #tpu.memory_space<vmem>>, vector<32x128xf32>
    %c0_11 = arith.constant 0 : index
    %c0_12 = arith.constant 0 : index
    %c0_13 = arith.constant 0 : index
    %10 = vector.load %arg11[%c0_11, %c0_12, %c0_13] : memref<4x8x128xf32, #tpu.memory_space<vmem>>, vector<4x1x128xf32>
    %11 = vector.shape_cast %10 : vector<4x1x128xf32> to vector<4x128xf32>
    %c0_14 = arith.constant 0 : index
    %c1 = arith.constant 1 : index
    %c0_15 = arith.constant 0 : index
    %12 = vector.load %arg11[%c0_14, %c1, %c0_15] : memref<4x8x128xf32, #tpu.memory_space<vmem>>, vector<4x1x128xf32>
    %13 = vector.shape_cast %12 : vector<4x1x128xf32> to vector<4x128xf32>
    %c0_16 = arith.constant 0 : index
    %c2 = arith.constant 2 : index
    %c0_17 = arith.constant 0 : index
    %14 = vector.load %arg11[%c0_16, %c2, %c0_17] : memref<4x8x128xf32, #tpu.memory_space<vmem>>, vector<4x1x128xf32>
    %15 = vector.shape_cast %14 : vector<4x1x128xf32> to vector<4x128xf32>
    %c0_18 = arith.constant 0 : index
    %c3 = arith.constant 3 : index
    %c0_19 = arith.constant 0 : index
    %16 = vector.load %arg11[%c0_18, %c3, %c0_19] : memref<4x8x128xf32, #tpu.memory_space<vmem>>, vector<4x1x128xf32>
    %17 = vector.shape_cast %16 : vector<4x1x128xf32> to vector<4x128xf32>
    %c0_20 = arith.constant 0 : index
    %c4 = arith.constant 4 : index
    %c0_21 = arith.constant 0 : index
    %18 = vector.load %arg11[%c0_20, %c4, %c0_21] : memref<4x8x128xf32, #tpu.memory_space<vmem>>, vector<4x1x128xf32>
    %19 = vector.shape_cast %18 : vector<4x1x128xf32> to vector<4x128xf32>
    %c0_22 = arith.constant 0 : index
    %c5 = arith.constant 5 : index
    %c0_23 = arith.constant 0 : index
    %20 = vector.load %arg11[%c0_22, %c5, %c0_23] : memref<4x8x128xf32, #tpu.memory_space<vmem>>, vector<4x1x128xf32>
    %21 = vector.shape_cast %20 : vector<4x1x128xf32> to vector<4x128xf32>
    %c0_24 = arith.constant 0 : index
    %c6 = arith.constant 6 : index
    %c0_25 = arith.constant 0 : index
    %22 = vector.load %arg11[%c0_24, %c6, %c0_25] : memref<4x8x128xf32, #tpu.memory_space<vmem>>, vector<4x1x128xf32>
    %23 = vector.shape_cast %22 : vector<4x1x128xf32> to vector<4x128xf32>
    %c0_26 = arith.constant 0 : index
    %c7 = arith.constant 7 : index
    %c0_27 = arith.constant 0 : index
    %24 = vector.load %arg11[%c0_26, %c7, %c0_27] : memref<4x8x128xf32, #tpu.memory_space<vmem>>, vector<4x1x128xf32>
    %25 = vector.shape_cast %24 : vector<4x1x128xf32> to vector<4x128xf32>
    %cst_28 = arith.constant 0.000000e+00 : f32
    %26 = vector.broadcast %cst_28 : f32 to vector<4x32xf32>
    %cst_29 = arith.constant 0.000000e+00 : f32
    %27 = vector.broadcast %cst_29 : f32 to vector<4x32xf32>
    %cst_30 = arith.constant dense<0.000000e+00> : vector<4x128xf32>
    %28 = tpu.matmul %26, %9, %cst_30 {dimension_numbers = #tpu.dot_dimension_numbers<[1], [0], [0], [1], [0, 0, 1, 1], [], []>} : vector<4x32xf32>, vector<32x128xf32>, vector<4x128xf32> -> vector<4x128xf32>
    %29 = arith.addf %11, %28 : vector<4x128xf32>
    %30 = vector.extract_strided_slice %29 {offsets = [0, 0], sizes = [4, 32], strides = [1, 1]} : vector<4x128xf32> to vector<4x32xf32>
    %31 = arith.negf %30 : vector<4x32xf32>
    %32 = math.exp %31 : vector<4x32xf32>
    %cst_31 = arith.constant 1.000000e+00 : f32
    %33 = vector.broadcast %cst_31 : f32 to vector<4x32xf32>
    %34 = arith.addf %33, %32 : vector<4x32xf32>
    %35 = arith.divf %33, %34 : vector<4x32xf32>
    %36 = vector.extract_strided_slice %29 {offsets = [0, 32], sizes = [4, 32], strides = [1, 1]} : vector<4x128xf32> to vector<4x32xf32>
    %37 = arith.negf %36 : vector<4x32xf32>
    %38 = math.exp %37 : vector<4x32xf32>
    %cst_32 = arith.constant 1.000000e+00 : f32
    %39 = vector.broadcast %cst_32 : f32 to vector<4x32xf32>
    %40 = arith.addf %39, %38 : vector<4x32xf32>
    %41 = arith.divf %39, %40 : vector<4x32xf32>
    %42 = vector.extract_strided_slice %29 {offsets = [0, 64], sizes = [4, 32], strides = [1, 1]} : vector<4x128xf32> to vector<4x32xf32>
    %43 = math.tanh %42 : vector<4x32xf32>
    %44 = vector.extract_strided_slice %29 {offsets = [0, 96], sizes = [4, 32], strides = [1, 1]} : vector<4x128xf32> to vector<4x32xf32>
    %45 = arith.negf %44 : vector<4x32xf32>
    %46 = math.exp %45 : vector<4x32xf32>
    %cst_33 = arith.constant 1.000000e+00 : f32
    %47 = vector.broadcast %cst_33 : f32 to vector<4x32xf32>
    %48 = arith.addf %47, %46 : vector<4x32xf32>
    %49 = arith.divf %47, %48 : vector<4x32xf32>
    %50 = arith.mulf %41, %27 : vector<4x32xf32>
    %51 = arith.mulf %35, %43 : vector<4x32xf32>
    %52 = arith.addf %50, %51 : vector<4x32xf32>
    %53 = math.tanh %52 : vector<4x32xf32>
    %54 = arith.mulf %49, %53 : vector<4x32xf32>
    %55 = vector.shape_cast %54 : vector<4x32xf32> to vector<4x1x32xf32>
    %c0_34 = arith.constant 0 : index
    %c0_35 = arith.constant 0 : index
    %c0_36 = arith.constant 0 : index
    %56 = vector.load %arg12[%c0_34, %c0_35, %c0_36] : memref<4x8x32xf32, #tpu.memory_space<vmem>>, vector<4x1x32xf32>
    tpu.vector_store %arg12[%c0_34, %c0_35, %c0_36], %55 {strides = array<i32>} : memref<4x8x32xf32, #tpu.memory_space<vmem>>, vector<4x1x32xf32>,
    %cst_37 = arith.constant dense<0.000000e+00> : vector<4x128xf32>
    %57 = tpu.matmul %54, %9, %cst_37 {dimension_numbers = #tpu.dot_dimension_numbers<[1], [0], [0], [1], [0, 0, 1, 1], [], []>} : vector<4x32xf32>, vector<32x128xf32>, vector<4x128xf32> -> vector<4x128xf32>
    %58 = arith.addf %13, %57 : vector<4x128xf32>
    %59 = vector.extract_strided_slice %58 {offsets = [0, 0], sizes = [4, 32], strides = [1, 1]} : vector<4x128xf32> to vector<4x32xf32>
    %60 = arith.negf %59 : vector<4x32xf32>
    %61 = math.exp %60 : vector<4x32xf32>
    %cst_38 = arith.constant 1.000000e+00 : f32
    %62 = vector.broadcast %cst_38 : f32 to vector<4x32xf32>
    %63 = arith.addf %62, %61 : vector<4x32xf32>
    %64 = arith.divf %62, %63 : vector<4x32xf32>
    %65 = vector.extract_strided_slice %58 {offsets = [0, 32], sizes = [4, 32], strides = [1, 1]} : vector<4x128xf32> to vector<4x32xf32>
    %66 = arith.negf %65 : vector<4x32xf32>
    %67 = math.exp %66 : vector<4x32xf32>
    %cst_39 = arith.constant 1.000000e+00 : f32
    %68 = vector.broadcast %cst_39 : f32 to vector<4x32xf32>
    %69 = arith.addf %68, %67 : vector<4x32xf32>
    %70 = arith.divf %68, %69 : vector<4x32xf32>
    %71 = vector.extract_strided_slice %58 {offsets = [0, 64], sizes = [4, 32], strides = [1, 1]} : vector<4x128xf32> to vector<4x32xf32>
    %72 = math.tanh %71 : vector<4x32xf32>
    %73 = vector.extract_strided_slice %58 {offsets = [0, 96], sizes = [4, 32], strides = [1, 1]} : vector<4x128xf32> to vector<4x32xf32>
    %74 = arith.negf %73 : vector<4x32xf32>
    %75 = math.exp %74 : vector<4x32xf32>
    %cst_40 = arith.constant 1.000000e+00 : f32
    %76 = vector.broadcast %cst_40 : f32 to vector<4x32xf32>
    %77 = arith.addf %76, %75 : vector<4x32xf32>
    %78 = arith.divf %76, %77 : vector<4x32xf32>
    %79 = arith.mulf %70, %52 : vector<4x32xf32>
    %80 = arith.mulf %64, %72 : vector<4x32xf32>
    %81 = arith.addf %79, %80 : vector<4x32xf32>
    %82 = math.tanh %81 : vector<4x32xf32>
    %83 = arith.mulf %78, %82 : vector<4x32xf32>
    %84 = vector.shape_cast %83 : vector<4x32xf32> to vector<4x1x32xf32>
    %c0_41 = arith.constant 0 : index
    %c1_42 = arith.constant 1 : index
    %c0_43 = arith.constant 0 : index
    %85 = vector.load %arg12[%c0_41, %c1_42, %c0_43] : memref<4x8x32xf32, #tpu.memory_space<vmem>>, vector<4x1x32xf32>
    tpu.vector_store %arg12[%c0_41, %c1_42, %c0_43], %84 {strides = array<i32>} : memref<4x8x32xf32, #tpu.memory_space<vmem>>, vector<4x1x32xf32>,
    %cst_44 = arith.constant dense<0.000000e+00> : vector<4x128xf32>
    %86 = tpu.matmul %83, %9, %cst_44 {dimension_numbers = #tpu.dot_dimension_numbers<[1], [0], [0], [1], [0, 0, 1, 1], [], []>} : vector<4x32xf32>, vector<32x128xf32>, vector<4x128xf32> -> vector<4x128xf32>
    %87 = arith.addf %15, %86 : vector<4x128xf32>
    %88 = vector.extract_strided_slice %87 {offsets = [0, 0], sizes = [4, 32], strides = [1, 1]} : vector<4x128xf32> to vector<4x32xf32>
    %89 = arith.negf %88 : vector<4x32xf32>
    %90 = math.exp %89 : vector<4x32xf32>
    %cst_45 = arith.constant 1.000000e+00 : f32
    %91 = vector.broadcast %cst_45 : f32 to vector<4x32xf32>
    %92 = arith.addf %91, %90 : vector<4x32xf32>
    %93 = arith.divf %91, %92 : vector<4x32xf32>
    %94 = vector.extract_strided_slice %87 {offsets = [0, 32], sizes = [4, 32], strides = [1, 1]} : vector<4x128xf32> to vector<4x32xf32>
    %95 = arith.negf %94 : vector<4x32xf32>
    %96 = math.exp %95 : vector<4x32xf32>
    %cst_46 = arith.constant 1.000000e+00 : f32
    %97 = vector.broadcast %cst_46 : f32 to vector<4x32xf32>
    %98 = arith.addf %97, %96 : vector<4x32xf32>
    %99 = arith.divf %97, %98 : vector<4x32xf32>
    %100 = vector.extract_strided_slice %87 {offsets = [0, 64], sizes = [4, 32], strides = [1, 1]} : vector<4x128xf32> to vector<4x32xf32>
    %101 = math.tanh %100 : vector<4x32xf32>
    %102 = vector.extract_strided_slice %87 {offsets = [0, 96], sizes = [4, 32], strides = [1, 1]} : vector<4x128xf32> to vector<4x32xf32>
    %103 = arith.negf %102 : vector<4x32xf32>
    %104 = math.exp %103 : vector<4x32xf32>
    %cst_47 = arith.constant 1.000000e+00 : f32
    %105 = vector.broadcast %cst_47 : f32 to vector<4x32xf32>
    %106 = arith.addf %105, %104 : vector<4x32xf32>
    %107 = arith.divf %105, %106 : vector<4x32xf32>
    %108 = arith.mulf %99, %81 : vector<4x32xf32>
    %109 = arith.mulf %93, %101 : vector<4x32xf32>
    %110 = arith.addf %108, %109 : vector<4x32xf32>
    %111 = math.tanh %110 : vector<4x32xf32>
    %112 = arith.mulf %107, %111 : vector<4x32xf32>
    %113 = vector.shape_cast %112 : vector<4x32xf32> to vector<4x1x32xf32>
    %c0_48 = arith.constant 0 : index
    %c2_49 = arith.constant 2 : index
    %c0_50 = arith.constant 0 : index
    %114 = vector.load %arg12[%c0_48, %c2_49, %c0_50] : memref<4x8x32xf32, #tpu.memory_space<vmem>>, vector<4x1x32xf32>
    tpu.vector_store %arg12[%c0_48, %c2_49, %c0_50], %113 {strides = array<i32>} : memref<4x8x32xf32, #tpu.memory_space<vmem>>, vector<4x1x32xf32>,
    %cst_51 = arith.constant dense<0.000000e+00> : vector<4x128xf32>
    %115 = tpu.matmul %112, %9, %cst_51 {dimension_numbers = #tpu.dot_dimension_numbers<[1], [0], [0], [1], [0, 0, 1, 1], [], []>} : vector<4x32xf32>, vector<32x128xf32>, vector<4x128xf32> -> vector<4x128xf32>
    %116 = arith.addf %17, %115 : vector<4x128xf32>
    %117 = vector.extract_strided_slice %116 {offsets = [0, 0], sizes = [4, 32], strides = [1, 1]} : vector<4x128xf32> to vector<4x32xf32>
    %118 = arith.negf %117 : vector<4x32xf32>
    %119 = math.exp %118 : vector<4x32xf32>
    %cst_52 = arith.constant 1.000000e+00 : f32
    %120 = vector.broadcast %cst_52 : f32 to vector<4x32xf32>
    %121 = arith.addf %120, %119 : vector<4x32xf32>
    %122 = arith.divf %120, %121 : vector<4x32xf32>
    %123 = vector.extract_strided_slice %116 {offsets = [0, 32], sizes = [4, 32], strides = [1, 1]} : vector<4x128xf32> to vector<4x32xf32>
    %124 = arith.negf %123 : vector<4x32xf32>
    %125 = math.exp %124 : vector<4x32xf32>
    %cst_53 = arith.constant 1.000000e+00 : f32
    %126 = vector.broadcast %cst_53 : f32 to vector<4x32xf32>
    %127 = arith.addf %126, %125 : vector<4x32xf32>
    %128 = arith.divf %126, %127 : vector<4x32xf32>
    %129 = vector.extract_strided_slice %116 {offsets = [0, 64], sizes = [4, 32], strides = [1, 1]} : vector<4x128xf32> to vector<4x32xf32>
    %130 = math.tanh %129 : vector<4x32xf32>
    %131 = vector.extract_strided_slice %116 {offsets = [0, 96], sizes = [4, 32], strides = [1, 1]} : vector<4x128xf32> to vector<4x32xf32>
    %132 = arith.negf %131 : vector<4x32xf32>
    %133 = math.exp %132 : vector<4x32xf32>
    %cst_54 = arith.constant 1.000000e+00 : f32
    %134 = vector.broadcast %cst_54 : f32 to vector<4x32xf32>
    %135 = arith.addf %134, %133 : vector<4x32xf32>
    %136 = arith.divf %134, %135 : vector<4x32xf32>
    %137 = arith.mulf %128, %110 : vector<4x32xf32>
    %138 = arith.mulf %122, %130 : vector<4x32xf32>
    %139 = arith.addf %137, %138 : vector<4x32xf32>
    %140 = math.tanh %139 : vector<4x32xf32>
    %141 = arith.mulf %136, %140 : vector<4x32xf32>
    %142 = vector.shape_cast %141 : vector<4x32xf32> to vector<4x1x32xf32>
    %c0_55 = arith.constant 0 : index
    %c3_56 = arith.constant 3 : index
    %c0_57 = arith.constant 0 : index
    %143 = vector.load %arg12[%c0_55, %c3_56, %c0_57] : memref<4x8x32xf32, #tpu.memory_space<vmem>>, vector<4x1x32xf32>
    tpu.vector_store %arg12[%c0_55, %c3_56, %c0_57], %142 {strides = array<i32>} : memref<4x8x32xf32, #tpu.memory_space<vmem>>, vector<4x1x32xf32>,
    %cst_58 = arith.constant dense<0.000000e+00> : vector<4x128xf32>
    %144 = tpu.matmul %141, %9, %cst_58 {dimension_numbers = #tpu.dot_dimension_numbers<[1], [0], [0], [1], [0, 0, 1, 1], [], []>} : vector<4x32xf32>, vector<32x128xf32>, vector<4x128xf32> -> vector<4x128xf32>
    %145 = arith.addf %19, %144 : vector<4x128xf32>
    %146 = vector.extract_strided_slice %145 {offsets = [0, 0], sizes = [4, 32], strides = [1, 1]} : vector<4x128xf32> to vector<4x32xf32>
    %147 = arith.negf %146 : vector<4x32xf32>
    %148 = math.exp %147 : vector<4x32xf32>
    %cst_59 = arith.constant 1.000000e+00 : f32
    %149 = vector.broadcast %cst_59 : f32 to vector<4x32xf32>
    %150 = arith.addf %149, %148 : vector<4x32xf32>
    %151 = arith.divf %149, %150 : vector<4x32xf32>
    %152 = vector.extract_strided_slice %145 {offsets = [0, 32], sizes = [4, 32], strides = [1, 1]} : vector<4x128xf32> to vector<4x32xf32>
    %153 = arith.negf %152 : vector<4x32xf32>
    %154 = math.exp %153 : vector<4x32xf32>
    %cst_60 = arith.constant 1.000000e+00 : f32
    %155 = vector.broadcast %cst_60 : f32 to vector<4x32xf32>
    %156 = arith.addf %155, %154 : vector<4x32xf32>
    %157 = arith.divf %155, %156 : vector<4x32xf32>
    %158 = vector.extract_strided_slice %145 {offsets = [0, 64], sizes = [4, 32], strides = [1, 1]} : vector<4x128xf32> to vector<4x32xf32>
    %159 = math.tanh %158 : vector<4x32xf32>
    %160 = vector.extract_strided_slice %145 {offsets = [0, 96], sizes = [4, 32], strides = [1, 1]} : vector<4x128xf32> to vector<4x32xf32>
    %161 = arith.negf %160 : vector<4x32xf32>
    %162 = math.exp %161 : vector<4x32xf32>
    %cst_61 = arith.constant 1.000000e+00 : f32
    %163 = vector.broadcast %cst_61 : f32 to vector<4x32xf32>
    %164 = arith.addf %163, %162 : vector<4x32xf32>
    %165 = arith.divf %163, %164 : vector<4x32xf32>
    %166 = arith.mulf %157, %139 : vector<4x32xf32>
    %167 = arith.mulf %151, %159 : vector<4x32xf32>
    %168 = arith.addf %166, %167 : vector<4x32xf32>
    %169 = math.tanh %168 : vector<4x32xf32>
    %170 = arith.mulf %165, %169 : vector<4x32xf32>
    %171 = vector.shape_cast %170 : vector<4x32xf32> to vector<4x1x32xf32>
    %c0_62 = arith.constant 0 : index
    %c4_63 = arith.constant 4 : index
    %c0_64 = arith.constant 0 : index
    %172 = vector.load %arg12[%c0_62, %c4_63, %c0_64] : memref<4x8x32xf32, #tpu.memory_space<vmem>>, vector<4x1x32xf32>
    tpu.vector_store %arg12[%c0_62, %c4_63, %c0_64], %171 {strides = array<i32>} : memref<4x8x32xf32, #tpu.memory_space<vmem>>, vector<4x1x32xf32>,
    %cst_65 = arith.constant dense<0.000000e+00> : vector<4x128xf32>
    %173 = tpu.matmul %170, %9, %cst_65 {dimension_numbers = #tpu.dot_dimension_numbers<[1], [0], [0], [1], [0, 0, 1, 1], [], []>} : vector<4x32xf32>, vector<32x128xf32>, vector<4x128xf32> -> vector<4x128xf32>
    %174 = arith.addf %21, %173 : vector<4x128xf32>
    %175 = vector.extract_strided_slice %174 {offsets = [0, 0], sizes = [4, 32], strides = [1, 1]} : vector<4x128xf32> to vector<4x32xf32>
    %176 = arith.negf %175 : vector<4x32xf32>
    %177 = math.exp %176 : vector<4x32xf32>
    %cst_66 = arith.constant 1.000000e+00 : f32
    %178 = vector.broadcast %cst_66 : f32 to vector<4x32xf32>
    %179 = arith.addf %178, %177 : vector<4x32xf32>
    %180 = arith.divf %178, %179 : vector<4x32xf32>
    %181 = vector.extract_strided_slice %174 {offsets = [0, 32], sizes = [4, 32], strides = [1, 1]} : vector<4x128xf32> to vector<4x32xf32>
    %182 = arith.negf %181 : vector<4x32xf32>
    %183 = math.exp %182 : vector<4x32xf32>
    %cst_67 = arith.constant 1.000000e+00 : f32
    %184 = vector.broadcast %cst_67 : f32 to vector<4x32xf32>
    %185 = arith.addf %184, %183 : vector<4x32xf32>
    %186 = arith.divf %184, %185 : vector<4x32xf32>
    %187 = vector.extract_strided_slice %174 {offsets = [0, 64], sizes = [4, 32], strides = [1, 1]} : vector<4x128xf32> to vector<4x32xf32>
    %188 = math.tanh %187 : vector<4x32xf32>
    %189 = vector.extract_strided_slice %174 {offsets = [0, 96], sizes = [4, 32], strides = [1, 1]} : vector<4x128xf32> to vector<4x32xf32>
    %190 = arith.negf %189 : vector<4x32xf32>
    %191 = math.exp %190 : vector<4x32xf32>
    %cst_68 = arith.constant 1.000000e+00 : f32
    %192 = vector.broadcast %cst_68 : f32 to vector<4x32xf32>
    %193 = arith.addf %192, %191 : vector<4x32xf32>
    %194 = arith.divf %192, %193 : vector<4x32xf32>
    %195 = arith.mulf %186, %168 : vector<4x32xf32>
    %196 = arith.mulf %180, %188 : vector<4x32xf32>
    %197 = arith.addf %195, %196 : vector<4x32xf32>
    %198 = math.tanh %197 : vector<4x32xf32>
    %199 = arith.mulf %194, %198 : vector<4x32xf32>
    %200 = vector.shape_cast %199 : vector<4x32xf32> to vector<4x1x32xf32>
    %c0_69 = arith.constant 0 : index
    %c5_70 = arith.constant 5 : index
    %c0_71 = arith.constant 0 : index
    %201 = vector.load %arg12[%c0_69, %c5_70, %c0_71] : memref<4x8x32xf32, #tpu.memory_space<vmem>>, vector<4x1x32xf32>
    tpu.vector_store %arg12[%c0_69, %c5_70, %c0_71], %200 {strides = array<i32>} : memref<4x8x32xf32, #tpu.memory_space<vmem>>, vector<4x1x32xf32>,
    %cst_72 = arith.constant dense<0.000000e+00> : vector<4x128xf32>
    %202 = tpu.matmul %199, %9, %cst_72 {dimension_numbers = #tpu.dot_dimension_numbers<[1], [0], [0], [1], [0, 0, 1, 1], [], []>} : vector<4x32xf32>, vector<32x128xf32>, vector<4x128xf32> -> vector<4x128xf32>
    %203 = arith.addf %23, %202 : vector<4x128xf32>
    %204 = vector.extract_strided_slice %203 {offsets = [0, 0], sizes = [4, 32], strides = [1, 1]} : vector<4x128xf32> to vector<4x32xf32>
    %205 = arith.negf %204 : vector<4x32xf32>
    %206 = math.exp %205 : vector<4x32xf32>
    %cst_73 = arith.constant 1.000000e+00 : f32
    %207 = vector.broadcast %cst_73 : f32 to vector<4x32xf32>
    %208 = arith.addf %207, %206 : vector<4x32xf32>
    %209 = arith.divf %207, %208 : vector<4x32xf32>
    %210 = vector.extract_strided_slice %203 {offsets = [0, 32], sizes = [4, 32], strides = [1, 1]} : vector<4x128xf32> to vector<4x32xf32>
    %211 = arith.negf %210 : vector<4x32xf32>
    %212 = math.exp %211 : vector<4x32xf32>
    %cst_74 = arith.constant 1.000000e+00 : f32
    %213 = vector.broadcast %cst_74 : f32 to vector<4x32xf32>
    %214 = arith.addf %213, %212 : vector<4x32xf32>
    %215 = arith.divf %213, %214 : vector<4x32xf32>
    %216 = vector.extract_strided_slice %203 {offsets = [0, 64], sizes = [4, 32], strides = [1, 1]} : vector<4x128xf32> to vector<4x32xf32>
    %217 = math.tanh %216 : vector<4x32xf32>
    %218 = vector.extract_strided_slice %203 {offsets = [0, 96], sizes = [4, 32], strides = [1, 1]} : vector<4x128xf32> to vector<4x32xf32>
    %219 = arith.negf %218 : vector<4x32xf32>
    %220 = math.exp %219 : vector<4x32xf32>
    %cst_75 = arith.constant 1.000000e+00 : f32
    %221 = vector.broadcast %cst_75 : f32 to vector<4x32xf32>
    %222 = arith.addf %221, %220 : vector<4x32xf32>
    %223 = arith.divf %221, %222 : vector<4x32xf32>
    %224 = arith.mulf %215, %197 : vector<4x32xf32>
    %225 = arith.mulf %209, %217 : vector<4x32xf32>
    %226 = arith.addf %224, %225 : vector<4x32xf32>
    %227 = math.tanh %226 : vector<4x32xf32>
    %228 = arith.mulf %223, %227 : vector<4x32xf32>
    %229 = vector.shape_cast %228 : vector<4x32xf32> to vector<4x1x32xf32>
    %c0_76 = arith.constant 0 : index
    %c6_77 = arith.constant 6 : index
    %c0_78 = arith.constant 0 : index
    %230 = vector.load %arg12[%c0_76, %c6_77, %c0_78] : memref<4x8x32xf32, #tpu.memory_space<vmem>>, vector<4x1x32xf32>
    tpu.vector_store %arg12[%c0_76, %c6_77, %c0_78], %229 {strides = array<i32>} : memref<4x8x32xf32, #tpu.memory_space<vmem>>, vector<4x1x32xf32>,
    %cst_79 = arith.constant dense<0.000000e+00> : vector<4x128xf32>
    %231 = tpu.matmul %228, %9, %cst_79 {dimension_numbers = #tpu.dot_dimension_numbers<[1], [0], [0], [1], [0, 0, 1, 1], [], []>} : vector<4x32xf32>, vector<32x128xf32>, vector<4x128xf32> -> vector<4x128xf32>
    %232 = arith.addf %25, %231 : vector<4x128xf32>
    %233 = vector.extract_strided_slice %232 {offsets = [0, 0], sizes = [4, 32], strides = [1, 1]} : vector<4x128xf32> to vector<4x32xf32>
    %234 = arith.negf %233 : vector<4x32xf32>
    %235 = math.exp %234 : vector<4x32xf32>
    %cst_80 = arith.constant 1.000000e+00 : f32
    %236 = vector.broadcast %cst_80 : f32 to vector<4x32xf32>
    %237 = arith.addf %236, %235 : vector<4x32xf32>
    %238 = arith.divf %236, %237 : vector<4x32xf32>
    %239 = vector.extract_strided_slice %232 {offsets = [0, 32], sizes = [4, 32], strides = [1, 1]} : vector<4x128xf32> to vector<4x32xf32>
    %240 = arith.negf %239 : vector<4x32xf32>
    %241 = math.exp %240 : vector<4x32xf32>
    %cst_81 = arith.constant 1.000000e+00 : f32
    %242 = vector.broadcast %cst_81 : f32 to vector<4x32xf32>
    %243 = arith.addf %242, %241 : vector<4x32xf32>
    %244 = arith.divf %242, %243 : vector<4x32xf32>
    %245 = vector.extract_strided_slice %232 {offsets = [0, 64], sizes = [4, 32], strides = [1, 1]} : vector<4x128xf32> to vector<4x32xf32>
    %246 = math.tanh %245 : vector<4x32xf32>
    %247 = vector.extract_strided_slice %232 {offsets = [0, 96], sizes = [4, 32], strides = [1, 1]} : vector<4x128xf32> to vector<4x32xf32>
    %248 = arith.negf %247 : vector<4x32xf32>
    %249 = math.exp %248 : vector<4x32xf32>
    %cst_82 = arith.constant 1.000000e+00 : f32
    %250 = vector.broadcast %cst_82 : f32 to vector<4x32xf32>
    %251 = arith.addf %250, %249 : vector<4x32xf32>
    %252 = arith.divf %250, %251 : vector<4x32xf32>
    %253 = arith.mulf %244, %226 : vector<4x32xf32>
    %254 = arith.mulf %238, %246 : vector<4x32xf32>
    %255 = arith.addf %253, %254 : vector<4x32xf32>
    %256 = math.tanh %255 : vector<4x32xf32>
    %257 = arith.mulf %252, %256 : vector<4x32xf32>
    %258 = vector.shape_cast %257 : vector<4x32xf32> to vector<4x1x32xf32>
    %c0_83 = arith.constant 0 : index
    %c7_84 = arith.constant 7 : index
    %c0_85 = arith.constant 0 : index
    %259 = vector.load %arg12[%c0_83, %c7_84, %c0_85] : memref<4x8x32xf32, #tpu.memory_space<vmem>>, vector<4x1x32xf32>
    tpu.vector_store %arg12[%c0_83, %c7_84, %c0_85], %258 {strides = array<i32>} : memref<4x8x32xf32, #tpu.memory_space<vmem>>, vector<4x1x32xf32>,
    %c0_86 = arith.constant 0 : index
    %c0_87 = arith.constant 0 : index
    %c0_88 = arith.constant 0 : index
    %260 = vector.load %arg12[%c0_86, %c0_87, %c0_88] : memref<4x8x32xf32, #tpu.memory_space<vmem>>, vector<4x8x32xf32>
    %261 = vector.shape_cast %260 : vector<4x8x32xf32> to vector<32x32xf32>
    %c0_89 = arith.constant 0 : index
    %c0_90 = arith.constant 0 : index
    %262 = vector.load %arg5[%c0_89, %c0_90] : memref<32x128xf32, #tpu.memory_space<vmem>>, vector<32x128xf32>
    %cst_91 = arith.constant dense<0.000000e+00> : vector<32x128xf32>
    %263 = tpu.matmul %261, %262, %cst_91 {dimension_numbers = #tpu.dot_dimension_numbers<[1], [0], [0], [1], [0, 0, 1, 1], [], []>} : vector<32x32xf32>, vector<32x128xf32>, vector<32x128xf32> -> vector<32x128xf32>
    %c0_92 = arith.constant 0 : index
    %c0_93 = arith.constant 0 : index
    %264 = vector.load %arg7[%c0_92, %c0_93] : memref<1x128xf32, #tpu.memory_space<vmem>>, vector<1x128xf32>
    %265 = vector.broadcast %264 : vector<1x128xf32> to vector<32x128xf32>
    %266 = arith.addf %263, %265 : vector<32x128xf32>
    %267 = vector.shape_cast %266 : vector<32x128xf32> to vector<4x8x128xf32>
    %c0_94 = arith.constant 0 : index
    %c0_95 = arith.constant 0 : index
    %c0_96 = arith.constant 0 : index
    %268 = vector.load %arg11[%c0_94, %c0_95, %c0_96] : memref<4x8x128xf32, #tpu.memory_space<vmem>>, vector<4x8x128xf32>
    tpu.vector_store %arg11[%c0_94, %c0_95, %c0_96], %267 {strides = array<i32>} : memref<4x8x128xf32, #tpu.memory_space<vmem>>, vector<4x8x128xf32>,
    %c0_97 = arith.constant 0 : index
    %c0_98 = arith.constant 0 : index
    %269 = vector.load %arg6[%c0_97, %c0_98] : memref<32x128xf32, #tpu.memory_space<vmem>>, vector<32x128xf32>
    %c0_99 = arith.constant 0 : index
    %c0_100 = arith.constant 0 : index
    %c0_101 = arith.constant 0 : index
    %270 = vector.load %arg11[%c0_99, %c0_100, %c0_101] : memref<4x8x128xf32, #tpu.memory_space<vmem>>, vector<4x1x128xf32>
    %271 = vector.shape_cast %270 : vector<4x1x128xf32> to vector<4x128xf32>
    %c0_102 = arith.constant 0 : index
    %c1_103 = arith.constant 1 : index
    %c0_104 = arith.constant 0 : index
    %272 = vector.load %arg11[%c0_102, %c1_103, %c0_104] : memref<4x8x128xf32, #tpu.memory_space<vmem>>, vector<4x1x128xf32>
    %273 = vector.shape_cast %272 : vector<4x1x128xf32> to vector<4x128xf32>
    %c0_105 = arith.constant 0 : index
    %c2_106 = arith.constant 2 : index
    %c0_107 = arith.constant 0 : index
    %274 = vector.load %arg11[%c0_105, %c2_106, %c0_107] : memref<4x8x128xf32, #tpu.memory_space<vmem>>, vector<4x1x128xf32>
    %275 = vector.shape_cast %274 : vector<4x1x128xf32> to vector<4x128xf32>
    %c0_108 = arith.constant 0 : index
    %c3_109 = arith.constant 3 : index
    %c0_110 = arith.constant 0 : index
    %276 = vector.load %arg11[%c0_108, %c3_109, %c0_110] : memref<4x8x128xf32, #tpu.memory_space<vmem>>, vector<4x1x128xf32>
    %277 = vector.shape_cast %276 : vector<4x1x128xf32> to vector<4x128xf32>
    %c0_111 = arith.constant 0 : index
    %c4_112 = arith.constant 4 : index
    %c0_113 = arith.constant 0 : index
    %278 = vector.load %arg11[%c0_111, %c4_112, %c0_113] : memref<4x8x128xf32, #tpu.memory_space<vmem>>, vector<4x1x128xf32>
    %279 = vector.shape_cast %278 : vector<4x1x128xf32> to vector<4x128xf32>
    %c0_114 = arith.constant 0 : index
    %c5_115 = arith.constant 5 : index
    %c0_116 = arith.constant 0 : index
    %280 = vector.load %arg11[%c0_114, %c5_115, %c0_116] : memref<4x8x128xf32, #tpu.memory_space<vmem>>, vector<4x1x128xf32>
    %281 = vector.shape_cast %280 : vector<4x1x128xf32> to vector<4x128xf32>
    %c0_117 = arith.constant 0 : index
    %c6_118 = arith.constant 6 : index
    %c0_119 = arith.constant 0 : index
    %282 = vector.load %arg11[%c0_117, %c6_118, %c0_119] : memref<4x8x128xf32, #tpu.memory_space<vmem>>, vector<4x1x128xf32>
    %283 = vector.shape_cast %282 : vector<4x1x128xf32> to vector<4x128xf32>
    %c0_120 = arith.constant 0 : index
    %c7_121 = arith.constant 7 : index
    %c0_122 = arith.constant 0 : index
    %284 = vector.load %arg11[%c0_120, %c7_121, %c0_122] : memref<4x8x128xf32, #tpu.memory_space<vmem>>, vector<4x1x128xf32>
    %285 = vector.shape_cast %284 : vector<4x1x128xf32> to vector<4x128xf32>
    %cst_123 = arith.constant 0.000000e+00 : f32
    %286 = vector.broadcast %cst_123 : f32 to vector<4x32xf32>
    %cst_124 = arith.constant 0.000000e+00 : f32
    %287 = vector.broadcast %cst_124 : f32 to vector<4x32xf32>
    %cst_125 = arith.constant dense<0.000000e+00> : vector<4x128xf32>
    %288 = tpu.matmul %286, %269, %cst_125 {dimension_numbers = #tpu.dot_dimension_numbers<[1], [0], [0], [1], [0, 0, 1, 1], [], []>} : vector<4x32xf32>, vector<32x128xf32>, vector<4x128xf32> -> vector<4x128xf32>
    %289 = arith.addf %271, %288 : vector<4x128xf32>
    %290 = vector.extract_strided_slice %289 {offsets = [0, 0], sizes = [4, 32], strides = [1, 1]} : vector<4x128xf32> to vector<4x32xf32>
    %291 = arith.negf %290 : vector<4x32xf32>
    %292 = math.exp %291 : vector<4x32xf32>
    %cst_126 = arith.constant 1.000000e+00 : f32
    %293 = vector.broadcast %cst_126 : f32 to vector<4x32xf32>
    %294 = arith.addf %293, %292 : vector<4x32xf32>
    %295 = arith.divf %293, %294 : vector<4x32xf32>
    %296 = vector.extract_strided_slice %289 {offsets = [0, 32], sizes = [4, 32], strides = [1, 1]} : vector<4x128xf32> to vector<4x32xf32>
    %297 = arith.negf %296 : vector<4x32xf32>
    %298 = math.exp %297 : vector<4x32xf32>
    %cst_127 = arith.constant 1.000000e+00 : f32
    %299 = vector.broadcast %cst_127 : f32 to vector<4x32xf32>
    %300 = arith.addf %299, %298 : vector<4x32xf32>
    %301 = arith.divf %299, %300 : vector<4x32xf32>
    %302 = vector.extract_strided_slice %289 {offsets = [0, 64], sizes = [4, 32], strides = [1, 1]} : vector<4x128xf32> to vector<4x32xf32>
    %303 = math.tanh %302 : vector<4x32xf32>
    %304 = vector.extract_strided_slice %289 {offsets = [0, 96], sizes = [4, 32], strides = [1, 1]} : vector<4x128xf32> to vector<4x32xf32>
    %305 = arith.negf %304 : vector<4x32xf32>
    %306 = math.exp %305 : vector<4x32xf32>
    %cst_128 = arith.constant 1.000000e+00 : f32
    %307 = vector.broadcast %cst_128 : f32 to vector<4x32xf32>
    %308 = arith.addf %307, %306 : vector<4x32xf32>
    %309 = arith.divf %307, %308 : vector<4x32xf32>
    %310 = arith.mulf %301, %287 : vector<4x32xf32>
    %311 = arith.mulf %295, %303 : vector<4x32xf32>
    %312 = arith.addf %310, %311 : vector<4x32xf32>
    %313 = math.tanh %312 : vector<4x32xf32>
    %314 = arith.mulf %309, %313 : vector<4x32xf32>
    %315 = vector.shape_cast %314 : vector<4x32xf32> to vector<4x1x32xf32>
    %c0_129 = arith.constant 0 : index
    %c0_130 = arith.constant 0 : index
    %c0_131 = arith.constant 0 : index
    %316 = vector.load %arg12[%c0_129, %c0_130, %c0_131] : memref<4x8x32xf32, #tpu.memory_space<vmem>>, vector<4x1x32xf32>
    tpu.vector_store %arg12[%c0_129, %c0_130, %c0_131], %315 {strides = array<i32>} : memref<4x8x32xf32, #tpu.memory_space<vmem>>, vector<4x1x32xf32>,
    %cst_132 = arith.constant dense<0.000000e+00> : vector<4x128xf32>
    %317 = tpu.matmul %314, %269, %cst_132 {dimension_numbers = #tpu.dot_dimension_numbers<[1], [0], [0], [1], [0, 0, 1, 1], [], []>} : vector<4x32xf32>, vector<32x128xf32>, vector<4x128xf32> -> vector<4x128xf32>
    %318 = arith.addf %273, %317 : vector<4x128xf32>
    %319 = vector.extract_strided_slice %318 {offsets = [0, 0], sizes = [4, 32], strides = [1, 1]} : vector<4x128xf32> to vector<4x32xf32>
    %320 = arith.negf %319 : vector<4x32xf32>
    %321 = math.exp %320 : vector<4x32xf32>
    %cst_133 = arith.constant 1.000000e+00 : f32
    %322 = vector.broadcast %cst_133 : f32 to vector<4x32xf32>
    %323 = arith.addf %322, %321 : vector<4x32xf32>
    %324 = arith.divf %322, %323 : vector<4x32xf32>
    %325 = vector.extract_strided_slice %318 {offsets = [0, 32], sizes = [4, 32], strides = [1, 1]} : vector<4x128xf32> to vector<4x32xf32>
    %326 = arith.negf %325 : vector<4x32xf32>
    %327 = math.exp %326 : vector<4x32xf32>
    %cst_134 = arith.constant 1.000000e+00 : f32
    %328 = vector.broadcast %cst_134 : f32 to vector<4x32xf32>
    %329 = arith.addf %328, %327 : vector<4x32xf32>
    %330 = arith.divf %328, %329 : vector<4x32xf32>
    %331 = vector.extract_strided_slice %318 {offsets = [0, 64], sizes = [4, 32], strides = [1, 1]} : vector<4x128xf32> to vector<4x32xf32>
    %332 = math.tanh %331 : vector<4x32xf32>
    %333 = vector.extract_strided_slice %318 {offsets = [0, 96], sizes = [4, 32], strides = [1, 1]} : vector<4x128xf32> to vector<4x32xf32>
    %334 = arith.negf %333 : vector<4x32xf32>
    %335 = math.exp %334 : vector<4x32xf32>
    %cst_135 = arith.constant 1.000000e+00 : f32
    %336 = vector.broadcast %cst_135 : f32 to vector<4x32xf32>
    %337 = arith.addf %336, %335 : vector<4x32xf32>
    %338 = arith.divf %336, %337 : vector<4x32xf32>
    %339 = arith.mulf %330, %312 : vector<4x32xf32>
    %340 = arith.mulf %324, %332 : vector<4x32xf32>
    %341 = arith.addf %339, %340 : vector<4x32xf32>
    %342 = math.tanh %341 : vector<4x32xf32>
    %343 = arith.mulf %338, %342 : vector<4x32xf32>
    %344 = vector.shape_cast %343 : vector<4x32xf32> to vector<4x1x32xf32>
    %c0_136 = arith.constant 0 : index
    %c1_137 = arith.constant 1 : index
    %c0_138 = arith.constant 0 : index
    %345 = vector.load %arg12[%c0_136, %c1_137, %c0_138] : memref<4x8x32xf32, #tpu.memory_space<vmem>>, vector<4x1x32xf32>
    tpu.vector_store %arg12[%c0_136, %c1_137, %c0_138], %344 {strides = array<i32>} : memref<4x8x32xf32, #tpu.memory_space<vmem>>, vector<4x1x32xf32>,
    %cst_139 = arith.constant dense<0.000000e+00> : vector<4x128xf32>
    %346 = tpu.matmul %343, %269, %cst_139 {dimension_numbers = #tpu.dot_dimension_numbers<[1], [0], [0], [1], [0, 0, 1, 1], [], []>} : vector<4x32xf32>, vector<32x128xf32>, vector<4x128xf32> -> vector<4x128xf32>
    %347 = arith.addf %275, %346 : vector<4x128xf32>
    %348 = vector.extract_strided_slice %347 {offsets = [0, 0], sizes = [4, 32], strides = [1, 1]} : vector<4x128xf32> to vector<4x32xf32>
    %349 = arith.negf %348 : vector<4x32xf32>
    %350 = math.exp %349 : vector<4x32xf32>
    %cst_140 = arith.constant 1.000000e+00 : f32
    %351 = vector.broadcast %cst_140 : f32 to vector<4x32xf32>
    %352 = arith.addf %351, %350 : vector<4x32xf32>
    %353 = arith.divf %351, %352 : vector<4x32xf32>
    %354 = vector.extract_strided_slice %347 {offsets = [0, 32], sizes = [4, 32], strides = [1, 1]} : vector<4x128xf32> to vector<4x32xf32>
    %355 = arith.negf %354 : vector<4x32xf32>
    %356 = math.exp %355 : vector<4x32xf32>
    %cst_141 = arith.constant 1.000000e+00 : f32
    %357 = vector.broadcast %cst_141 : f32 to vector<4x32xf32>
    %358 = arith.addf %357, %356 : vector<4x32xf32>
    %359 = arith.divf %357, %358 : vector<4x32xf32>
    %360 = vector.extract_strided_slice %347 {offsets = [0, 64], sizes = [4, 32], strides = [1, 1]} : vector<4x128xf32> to vector<4x32xf32>
    %361 = math.tanh %360 : vector<4x32xf32>
    %362 = vector.extract_strided_slice %347 {offsets = [0, 96], sizes = [4, 32], strides = [1, 1]} : vector<4x128xf32> to vector<4x32xf32>
    %363 = arith.negf %362 : vector<4x32xf32>
    %364 = math.exp %363 : vector<4x32xf32>
    %cst_142 = arith.constant 1.000000e+00 : f32
    %365 = vector.broadcast %cst_142 : f32 to vector<4x32xf32>
    %366 = arith.addf %365, %364 : vector<4x32xf32>
    %367 = arith.divf %365, %366 : vector<4x32xf32>
    %368 = arith.mulf %359, %341 : vector<4x32xf32>
    %369 = arith.mulf %353, %361 : vector<4x32xf32>
    %370 = arith.addf %368, %369 : vector<4x32xf32>
    %371 = math.tanh %370 : vector<4x32xf32>
    %372 = arith.mulf %367, %371 : vector<4x32xf32>
    %373 = vector.shape_cast %372 : vector<4x32xf32> to vector<4x1x32xf32>
    %c0_143 = arith.constant 0 : index
    %c2_144 = arith.constant 2 : index
    %c0_145 = arith.constant 0 : index
    %374 = vector.load %arg12[%c0_143, %c2_144, %c0_145] : memref<4x8x32xf32, #tpu.memory_space<vmem>>, vector<4x1x32xf32>
    tpu.vector_store %arg12[%c0_143, %c2_144, %c0_145], %373 {strides = array<i32>} : memref<4x8x32xf32, #tpu.memory_space<vmem>>, vector<4x1x32xf32>,
    %cst_146 = arith.constant dense<0.000000e+00> : vector<4x128xf32>
    %375 = tpu.matmul %372, %269, %cst_146 {dimension_numbers = #tpu.dot_dimension_numbers<[1], [0], [0], [1], [0, 0, 1, 1], [], []>} : vector<4x32xf32>, vector<32x128xf32>, vector<4x128xf32> -> vector<4x128xf32>
    %376 = arith.addf %277, %375 : vector<4x128xf32>
    %377 = vector.extract_strided_slice %376 {offsets = [0, 0], sizes = [4, 32], strides = [1, 1]} : vector<4x128xf32> to vector<4x32xf32>
    %378 = arith.negf %377 : vector<4x32xf32>
    %379 = math.exp %378 : vector<4x32xf32>
    %cst_147 = arith.constant 1.000000e+00 : f32
    %380 = vector.broadcast %cst_147 : f32 to vector<4x32xf32>
    %381 = arith.addf %380, %379 : vector<4x32xf32>
    %382 = arith.divf %380, %381 : vector<4x32xf32>
    %383 = vector.extract_strided_slice %376 {offsets = [0, 32], sizes = [4, 32], strides = [1, 1]} : vector<4x128xf32> to vector<4x32xf32>
    %384 = arith.negf %383 : vector<4x32xf32>
    %385 = math.exp %384 : vector<4x32xf32>
    %cst_148 = arith.constant 1.000000e+00 : f32
    %386 = vector.broadcast %cst_148 : f32 to vector<4x32xf32>
    %387 = arith.addf %386, %385 : vector<4x32xf32>
    %388 = arith.divf %386, %387 : vector<4x32xf32>
    %389 = vector.extract_strided_slice %376 {offsets = [0, 64], sizes = [4, 32], strides = [1, 1]} : vector<4x128xf32> to vector<4x32xf32>
    %390 = math.tanh %389 : vector<4x32xf32>
    %391 = vector.extract_strided_slice %376 {offsets = [0, 96], sizes = [4, 32], strides = [1, 1]} : vector<4x128xf32> to vector<4x32xf32>
    %392 = arith.negf %391 : vector<4x32xf32>
    %393 = math.exp %392 : vector<4x32xf32>
    %cst_149 = arith.constant 1.000000e+00 : f32
    %394 = vector.broadcast %cst_149 : f32 to vector<4x32xf32>
    %395 = arith.addf %394, %393 : vector<4x32xf32>
    %396 = arith.divf %394, %395 : vector<4x32xf32>
    %397 = arith.mulf %388, %370 : vector<4x32xf32>
    %398 = arith.mulf %382, %390 : vector<4x32xf32>
    %399 = arith.addf %397, %398 : vector<4x32xf32>
    %400 = math.tanh %399 : vector<4x32xf32>
    %401 = arith.mulf %396, %400 : vector<4x32xf32>
    %402 = vector.shape_cast %401 : vector<4x32xf32> to vector<4x1x32xf32>
    %c0_150 = arith.constant 0 : index
    %c3_151 = arith.constant 3 : index
    %c0_152 = arith.constant 0 : index
    %403 = vector.load %arg12[%c0_150, %c3_151, %c0_152] : memref<4x8x32xf32, #tpu.memory_space<vmem>>, vector<4x1x32xf32>
    tpu.vector_store %arg12[%c0_150, %c3_151, %c0_152], %402 {strides = array<i32>} : memref<4x8x32xf32, #tpu.memory_space<vmem>>, vector<4x1x32xf32>,
    %cst_153 = arith.constant dense<0.000000e+00> : vector<4x128xf32>
    %404 = tpu.matmul %401, %269, %cst_153 {dimension_numbers = #tpu.dot_dimension_numbers<[1], [0], [0], [1], [0, 0, 1, 1], [], []>} : vector<4x32xf32>, vector<32x128xf32>, vector<4x128xf32> -> vector<4x128xf32>
    %405 = arith.addf %279, %404 : vector<4x128xf32>
    %406 = vector.extract_strided_slice %405 {offsets = [0, 0], sizes = [4, 32], strides = [1, 1]} : vector<4x128xf32> to vector<4x32xf32>
    %407 = arith.negf %406 : vector<4x32xf32>
    %408 = math.exp %407 : vector<4x32xf32>
    %cst_154 = arith.constant 1.000000e+00 : f32
    %409 = vector.broadcast %cst_154 : f32 to vector<4x32xf32>
    %410 = arith.addf %409, %408 : vector<4x32xf32>
    %411 = arith.divf %409, %410 : vector<4x32xf32>
    %412 = vector.extract_strided_slice %405 {offsets = [0, 32], sizes = [4, 32], strides = [1, 1]} : vector<4x128xf32> to vector<4x32xf32>
    %413 = arith.negf %412 : vector<4x32xf32>
    %414 = math.exp %413 : vector<4x32xf32>
    %cst_155 = arith.constant 1.000000e+00 : f32
    %415 = vector.broadcast %cst_155 : f32 to vector<4x32xf32>
    %416 = arith.addf %415, %414 : vector<4x32xf32>
    %417 = arith.divf %415, %416 : vector<4x32xf32>
    %418 = vector.extract_strided_slice %405 {offsets = [0, 64], sizes = [4, 32], strides = [1, 1]} : vector<4x128xf32> to vector<4x32xf32>
    %419 = math.tanh %418 : vector<4x32xf32>
    %420 = vector.extract_strided_slice %405 {offsets = [0, 96], sizes = [4, 32], strides = [1, 1]} : vector<4x128xf32> to vector<4x32xf32>
    %421 = arith.negf %420 : vector<4x32xf32>
    %422 = math.exp %421 : vector<4x32xf32>
    %cst_156 = arith.constant 1.000000e+00 : f32
    %423 = vector.broadcast %cst_156 : f32 to vector<4x32xf32>
    %424 = arith.addf %423, %422 : vector<4x32xf32>
    %425 = arith.divf %423, %424 : vector<4x32xf32>
    %426 = arith.mulf %417, %399 : vector<4x32xf32>
    %427 = arith.mulf %411, %419 : vector<4x32xf32>
    %428 = arith.addf %426, %427 : vector<4x32xf32>
    %429 = math.tanh %428 : vector<4x32xf32>
    %430 = arith.mulf %425, %429 : vector<4x32xf32>
    %431 = vector.shape_cast %430 : vector<4x32xf32> to vector<4x1x32xf32>
    %c0_157 = arith.constant 0 : index
    %c4_158 = arith.constant 4 : index
    %c0_159 = arith.constant 0 : index
    %432 = vector.load %arg12[%c0_157, %c4_158, %c0_159] : memref<4x8x32xf32, #tpu.memory_space<vmem>>, vector<4x1x32xf32>
    tpu.vector_store %arg12[%c0_157, %c4_158, %c0_159], %431 {strides = array<i32>} : memref<4x8x32xf32, #tpu.memory_space<vmem>>, vector<4x1x32xf32>,
    %cst_160 = arith.constant dense<0.000000e+00> : vector<4x128xf32>
    %433 = tpu.matmul %430, %269, %cst_160 {dimension_numbers = #tpu.dot_dimension_numbers<[1], [0], [0], [1], [0, 0, 1, 1], [], []>} : vector<4x32xf32>, vector<32x128xf32>, vector<4x128xf32> -> vector<4x128xf32>
    %434 = arith.addf %281, %433 : vector<4x128xf32>
    %435 = vector.extract_strided_slice %434 {offsets = [0, 0], sizes = [4, 32], strides = [1, 1]} : vector<4x128xf32> to vector<4x32xf32>
    %436 = arith.negf %435 : vector<4x32xf32>
    %437 = math.exp %436 : vector<4x32xf32>
    %cst_161 = arith.constant 1.000000e+00 : f32
    %438 = vector.broadcast %cst_161 : f32 to vector<4x32xf32>
    %439 = arith.addf %438, %437 : vector<4x32xf32>
    %440 = arith.divf %438, %439 : vector<4x32xf32>
    %441 = vector.extract_strided_slice %434 {offsets = [0, 32], sizes = [4, 32], strides = [1, 1]} : vector<4x128xf32> to vector<4x32xf32>
    %442 = arith.negf %441 : vector<4x32xf32>
    %443 = math.exp %442 : vector<4x32xf32>
    %cst_162 = arith.constant 1.000000e+00 : f32
    %444 = vector.broadcast %cst_162 : f32 to vector<4x32xf32>
    %445 = arith.addf %444, %443 : vector<4x32xf32>
    %446 = arith.divf %444, %445 : vector<4x32xf32>
    %447 = vector.extract_strided_slice %434 {offsets = [0, 64], sizes = [4, 32], strides = [1, 1]} : vector<4x128xf32> to vector<4x32xf32>
    %448 = math.tanh %447 : vector<4x32xf32>
    %449 = vector.extract_strided_slice %434 {offsets = [0, 96], sizes = [4, 32], strides = [1, 1]} : vector<4x128xf32> to vector<4x32xf32>
    %450 = arith.negf %449 : vector<4x32xf32>
    %451 = math.exp %450 : vector<4x32xf32>
    %cst_163 = arith.constant 1.000000e+00 : f32
    %452 = vector.broadcast %cst_163 : f32 to vector<4x32xf32>
    %453 = arith.addf %452, %451 : vector<4x32xf32>
    %454 = arith.divf %452, %453 : vector<4x32xf32>
    %455 = arith.mulf %446, %428 : vector<4x32xf32>
    %456 = arith.mulf %440, %448 : vector<4x32xf32>
    %457 = arith.addf %455, %456 : vector<4x32xf32>
    %458 = math.tanh %457 : vector<4x32xf32>
    %459 = arith.mulf %454, %458 : vector<4x32xf32>
    %460 = vector.shape_cast %459 : vector<4x32xf32> to vector<4x1x32xf32>
    %c0_164 = arith.constant 0 : index
    %c5_165 = arith.constant 5 : index
    %c0_166 = arith.constant 0 : index
    %461 = vector.load %arg12[%c0_164, %c5_165, %c0_166] : memref<4x8x32xf32, #tpu.memory_space<vmem>>, vector<4x1x32xf32>
    tpu.vector_store %arg12[%c0_164, %c5_165, %c0_166], %460 {strides = array<i32>} : memref<4x8x32xf32, #tpu.memory_space<vmem>>, vector<4x1x32xf32>,
    %cst_167 = arith.constant dense<0.000000e+00> : vector<4x128xf32>
    %462 = tpu.matmul %459, %269, %cst_167 {dimension_numbers = #tpu.dot_dimension_numbers<[1], [0], [0], [1], [0, 0, 1, 1], [], []>} : vector<4x32xf32>, vector<32x128xf32>, vector<4x128xf32> -> vector<4x128xf32>
    %463 = arith.addf %283, %462 : vector<4x128xf32>
    %464 = vector.extract_strided_slice %463 {offsets = [0, 0], sizes = [4, 32], strides = [1, 1]} : vector<4x128xf32> to vector<4x32xf32>
    %465 = arith.negf %464 : vector<4x32xf32>
    %466 = math.exp %465 : vector<4x32xf32>
    %cst_168 = arith.constant 1.000000e+00 : f32
    %467 = vector.broadcast %cst_168 : f32 to vector<4x32xf32>
    %468 = arith.addf %467, %466 : vector<4x32xf32>
    %469 = arith.divf %467, %468 : vector<4x32xf32>
    %470 = vector.extract_strided_slice %463 {offsets = [0, 32], sizes = [4, 32], strides = [1, 1]} : vector<4x128xf32> to vector<4x32xf32>
    %471 = arith.negf %470 : vector<4x32xf32>
    %472 = math.exp %471 : vector<4x32xf32>
    %cst_169 = arith.constant 1.000000e+00 : f32
    %473 = vector.broadcast %cst_169 : f32 to vector<4x32xf32>
    %474 = arith.addf %473, %472 : vector<4x32xf32>
    %475 = arith.divf %473, %474 : vector<4x32xf32>
    %476 = vector.extract_strided_slice %463 {offsets = [0, 64], sizes = [4, 32], strides = [1, 1]} : vector<4x128xf32> to vector<4x32xf32>
    %477 = math.tanh %476 : vector<4x32xf32>
    %478 = vector.extract_strided_slice %463 {offsets = [0, 96], sizes = [4, 32], strides = [1, 1]} : vector<4x128xf32> to vector<4x32xf32>
    %479 = arith.negf %478 : vector<4x32xf32>
    %480 = math.exp %479 : vector<4x32xf32>
    %cst_170 = arith.constant 1.000000e+00 : f32
    %481 = vector.broadcast %cst_170 : f32 to vector<4x32xf32>
    %482 = arith.addf %481, %480 : vector<4x32xf32>
    %483 = arith.divf %481, %482 : vector<4x32xf32>
    %484 = arith.mulf %475, %457 : vector<4x32xf32>
    %485 = arith.mulf %469, %477 : vector<4x32xf32>
    %486 = arith.addf %484, %485 : vector<4x32xf32>
    %487 = math.tanh %486 : vector<4x32xf32>
    %488 = arith.mulf %483, %487 : vector<4x32xf32>
    %489 = vector.shape_cast %488 : vector<4x32xf32> to vector<4x1x32xf32>
    %c0_171 = arith.constant 0 : index
    %c6_172 = arith.constant 6 : index
    %c0_173 = arith.constant 0 : index
    %490 = vector.load %arg12[%c0_171, %c6_172, %c0_173] : memref<4x8x32xf32, #tpu.memory_space<vmem>>, vector<4x1x32xf32>
    tpu.vector_store %arg12[%c0_171, %c6_172, %c0_173], %489 {strides = array<i32>} : memref<4x8x32xf32, #tpu.memory_space<vmem>>, vector<4x1x32xf32>,
    %cst_174 = arith.constant dense<0.000000e+00> : vector<4x128xf32>
    %491 = tpu.matmul %488, %269, %cst_174 {dimension_numbers = #tpu.dot_dimension_numbers<[1], [0], [0], [1], [0, 0, 1, 1], [], []>} : vector<4x32xf32>, vector<32x128xf32>, vector<4x128xf32> -> vector<4x128xf32>
    %492 = arith.addf %285, %491 : vector<4x128xf32>
    %493 = vector.extract_strided_slice %492 {offsets = [0, 0], sizes = [4, 32], strides = [1, 1]} : vector<4x128xf32> to vector<4x32xf32>
    %494 = arith.negf %493 : vector<4x32xf32>
    %495 = math.exp %494 : vector<4x32xf32>
    %cst_175 = arith.constant 1.000000e+00 : f32
    %496 = vector.broadcast %cst_175 : f32 to vector<4x32xf32>
    %497 = arith.addf %496, %495 : vector<4x32xf32>
    %498 = arith.divf %496, %497 : vector<4x32xf32>
    %499 = vector.extract_strided_slice %492 {offsets = [0, 32], sizes = [4, 32], strides = [1, 1]} : vector<4x128xf32> to vector<4x32xf32>
    %500 = arith.negf %499 : vector<4x32xf32>
    %501 = math.exp %500 : vector<4x32xf32>
    %cst_176 = arith.constant 1.000000e+00 : f32
    %502 = vector.broadcast %cst_176 : f32 to vector<4x32xf32>
    %503 = arith.addf %502, %501 : vector<4x32xf32>
    %504 = arith.divf %502, %503 : vector<4x32xf32>
    %505 = vector.extract_strided_slice %492 {offsets = [0, 64], sizes = [4, 32], strides = [1, 1]} : vector<4x128xf32> to vector<4x32xf32>
    %506 = math.tanh %505 : vector<4x32xf32>
    %507 = vector.extract_strided_slice %492 {offsets = [0, 96], sizes = [4, 32], strides = [1, 1]} : vector<4x128xf32> to vector<4x32xf32>
    %508 = arith.negf %507 : vector<4x32xf32>
    %509 = math.exp %508 : vector<4x32xf32>
    %cst_177 = arith.constant 1.000000e+00 : f32
    %510 = vector.broadcast %cst_177 : f32 to vector<4x32xf32>
    %511 = arith.addf %510, %509 : vector<4x32xf32>
    %512 = arith.divf %510, %511 : vector<4x32xf32>
    %513 = arith.mulf %504, %486 : vector<4x32xf32>
    %514 = arith.mulf %498, %506 : vector<4x32xf32>
    %515 = arith.addf %513, %514 : vector<4x32xf32>
    %516 = math.tanh %515 : vector<4x32xf32>
    %517 = arith.mulf %512, %516 : vector<4x32xf32>
    %518 = vector.shape_cast %517 : vector<4x32xf32> to vector<4x1x32xf32>
    %c0_178 = arith.constant 0 : index
    %c7_179 = arith.constant 7 : index
    %c0_180 = arith.constant 0 : index
    %519 = vector.load %arg12[%c0_178, %c7_179, %c0_180] : memref<4x8x32xf32, #tpu.memory_space<vmem>>, vector<4x1x32xf32>
    tpu.vector_store %arg12[%c0_178, %c7_179, %c0_180], %518 {strides = array<i32>} : memref<4x8x32xf32, #tpu.memory_space<vmem>>, vector<4x1x32xf32>,
    %c0_181 = arith.constant 0 : index
    %c0_182 = arith.constant 0 : index
    %c0_183 = arith.constant 0 : index
    %520 = vector.load %arg12[%c0_181, %c0_182, %c0_183] : memref<4x8x32xf32, #tpu.memory_space<vmem>>, vector<4x8x32xf32>
    %521 = vector.shape_cast %517 : vector<4x32xf32> to vector<4x1x32xf32>
    %522 = vector.broadcast %521 : vector<4x1x32xf32> to vector<4x8x32xf32>
    %523 = arith.mulf %520, %522 : vector<4x8x32xf32>
    %cst_184 = arith.constant dense<0.000000e+00> : vector<4x8xf32>
    %524 = vector.multi_reduction <add>, %523, %cst_184 [2] : vector<4x8x32xf32> to vector<4x8xf32>
    %cst_185 = arith.constant dense<0xFF800000> : vector<4xf32>
    %525 = vector.multi_reduction <maximumf>, %524, %cst_185 [1] : vector<4x8xf32> to vector<4xf32>
    %526 = vector.shape_cast %525 : vector<4xf32> to vector<4x1xf32>
    %527 = vector.broadcast %526 : vector<4x1xf32> to vector<4x8xf32>
    %528 = arith.subf %524, %527 : vector<4x8xf32>
    %529 = math.exp %528 : vector<4x8xf32>
    %cst_186 = arith.constant dense<0.000000e+00> : vector<4xf32>
    %530 = vector.multi_reduction <add>, %529, %cst_186 [1] : vector<4x8xf32> to vector<4xf32>
    %531 = vector.shape_cast %530 : vector<4xf32> to vector<4x1xf32>
    %532 = tpu.reciprocal %531 {approx = true} : vector<4x1xf32> -> vector<4x1xf32>
    %533 = vector.broadcast %532 : vector<4x1xf32> to vector<4x8xf32>
    %534 = arith.mulf %529, %533 : vector<4x8xf32>
    %535 = vector.shape_cast %534 : vector<4x8xf32> to vector<4x8x1xf32>
    %536 = vector.broadcast %535 : vector<4x8x1xf32> to vector<4x8x32xf32>
    %537 = arith.mulf %520, %536 : vector<4x8x32xf32>
    %cst_187 = arith.constant dense<0.000000e+00> : vector<4x32xf32>
    %538 = vector.multi_reduction <add>, %537, %cst_187 [1] : vector<4x8x32xf32> to vector<4x32xf32>
    %c0_188 = arith.constant 0 : index
    %c0_189 = arith.constant 0 : index
    %539 = vector.load %arg8[%c0_188, %c0_189] : memref<32x16xf32, #tpu.memory_space<vmem>>, vector<32x16xf32>
    %cst_190 = arith.constant dense<0.000000e+00> : vector<4x16xf32>
    %540 = tpu.matmul %538, %539, %cst_190 {dimension_numbers = #tpu.dot_dimension_numbers<[1], [0], [0], [1], [0, 0, 1, 1], [], []>} : vector<4x32xf32>, vector<32x16xf32>, vector<4x16xf32> -> vector<4x16xf32>
    %c0_191 = arith.constant 0 : index
    %c0_192 = arith.constant 0 : index
    %541 = vector.load %arg9[%c0_191, %c0_192] : memref<1x16xf32, #tpu.memory_space<vmem>>, vector<1x16xf32>
    %542 = vector.broadcast %541 : vector<1x16xf32> to vector<4x16xf32>
    %543 = arith.addf %540, %542 : vector<4x16xf32>
    %544 = vector.shape_cast %543 : vector<4x16xf32> to vector<1x4x16xf32>
    %c0_193 = arith.constant 0 : index
    %c0_194 = arith.constant 0 : index
    %c0_195 = arith.constant 0 : index
    %545 = vector.load %arg10[%c0_193, %c0_194, %c0_195] : memref<1x4x16xf32, #tpu.memory_space<vmem>>, vector<1x4x16xf32>
    tpu.vector_store %arg10[%c0_193, %c0_194, %c0_195], %544 {strides = array<i32>} : memref<1x4x16xf32, #tpu.memory_space<vmem>>, vector<1x4x16xf32>,
    return
  }
  func.func @transform_0(%arg0: i32) -> (i32, i32, i32) {
    %c0_i32 = arith.constant 0 : i32
    %c0_i32_0 = arith.constant 0 : i32
    %c0_i32_1 = arith.constant 0 : i32
    return %arg0, %c0_i32, %c0_i32_0 : i32, i32, i32
  }
  func.func @transform_1(%arg0: i32) -> (i32, i32) {
    %c0_i32 = arith.constant 0 : i32
    %c0_i32_0 = arith.constant 0 : i32
    %c0_i32_1 = arith.constant 0 : i32
    return %c0_i32, %c0_i32_0 : i32, i32
  }
  func.func @transform_2(%arg0: i32) -> (i32, i32) {
    %c0_i32 = arith.constant 0 : i32
    %c0_i32_0 = arith.constant 0 : i32
    %c0_i32_1 = arith.constant 0 : i32
    return %c0_i32, %c0_i32_0 : i32, i32
  }
  func.func @transform_3(%arg0: i32) -> (i32, i32) {
    %c0_i32 = arith.constant 0 : i32
    %c0_i32_0 = arith.constant 0 : i32
    %c0_i32_1 = arith.constant 0 : i32
    return %c0_i32, %c0_i32_0 : i32, i32
  }
  func.func @transform_4(%arg0: i32) -> (i32, i32) {
    %c0_i32 = arith.constant 0 : i32
    %c0_i32_0 = arith.constant 0 : i32
    %c0_i32_1 = arith.constant 0 : i32
    return %c0_i32, %c0_i32_0 : i32, i32
  }
  func.func @transform_5(%arg0: i32) -> (i32, i32) {
    %c0_i32 = arith.constant 0 : i32
    %c0_i32_0 = arith.constant 0 : i32
    %c0_i32_1 = arith.constant 0 : i32
    return %c0_i32, %c0_i32_0 : i32, i32
  }
  func.func @transform_6(%arg0: i32) -> (i32, i32) {
    %c0_i32 = arith.constant 0 : i32
    %c0_i32_0 = arith.constant 0 : i32
    %c0_i32_1 = arith.constant 0 : i32
    return %c0_i32, %c0_i32_0 : i32, i32
  }
  func.func @transform_7(%arg0: i32) -> (i32, i32) {
    %c0_i32 = arith.constant 0 : i32
    %c0_i32_0 = arith.constant 0 : i32
    %c0_i32_1 = arith.constant 0 : i32
    return %c0_i32, %c0_i32_0 : i32, i32
  }
  func.func @transform_8(%arg0: i32) -> (i32, i32) {
    %c0_i32 = arith.constant 0 : i32
    %c0_i32_0 = arith.constant 0 : i32
    %c0_i32_1 = arith.constant 0 : i32
    return %c0_i32, %c0_i32_0 : i32, i32
  }
  func.func @transform_9(%arg0: i32) -> (i32, i32, i32) {
    %c0_i32 = arith.constant 0 : i32
    %c0_i32_0 = arith.constant 0 : i32
    %c0_i32_1 = arith.constant 0 : i32
    return %arg0, %c0_i32, %c0_i32_0 : i32, i32, i32
  }
}

</mosaic_0001>

<llo_original>
// kernel: tpu_custom_call.1
$region0: #{tpu_custom_call.1}
  #allocation0 [shape = 'u32[]', space=smem, size = 0x4, offset = 0x4, fixed_abs, tag = 'smem constant byte address 0x4 - core index']
  #allocation1 [shape = 'u32[144,128]{1,0:T(1,128)}', space=vmem, size = 0x12000, scoped, tag = 'internal scratch']
  #allocation2 [shape = 'f32[4,8,128]{2,1,0:T(8,128)}', space=vmem, size = 0x4000, scoped, tag = 'scratch operand']
  #allocation3 [shape = 'f32[4,8,32]{2,1,0:T(8,128)}', space=vmem, size = 0x4000, scoped, tag = 'scratch operand']
  %s0 = inlined_call_operand.vmem [shape: f32[4,8,4], index: 0, kind: input, shape index: {}]
  %s1 = inlined_call_operand.hbm [shape: f32[4,128], index: 1, kind: input, shape index: {}]
  %s2 = inlined_call_operand.vmem [shape: f32[32,128], index: 2, kind: input, shape index: {}]
  %s3 = inlined_call_operand.vmem [shape: f32[1,128], index: 3, kind: input, shape index: {}]
  %s4 = inlined_call_operand.vmem [shape: f32[32,128], index: 4, kind: input, shape index: {}]
  %s5 = inlined_call_operand.vmem [shape: f32[32,128], index: 5, kind: input, shape index: {}]
  %s6 = inlined_call_operand.vmem [shape: f32[1,128], index: 6, kind: input, shape index: {}]
  %s7 = inlined_call_operand.vmem [shape: f32[32,16], index: 7, kind: input, shape index: {}]
  %s8 = inlined_call_operand.vmem [shape: f32[1,16], index: 8, kind: input, shape index: {}]
  %s9 = inlined_call_operand.hbm [shape: f32[1,4,16], index: 9, kind: output, shape index: {}]
  %s10 = sld [smem:[#allocation0]]
  $region50: #{tpu_custom_call.1} parent=0
    _
  %s12 = ssub.s32 1, %s10
  %s13 = scalar_select 0, %s12, %s10
  $region1: #{tpu_custom_call.1} parent=0
    #allocation4 [shape = 'u8[2048]{0}', space=vmem, size = 0x800, scoped, tag = 'input window, operand 1, single buffered']
    #allocation5 [shape = 's32[1]{0}', space=sflag, size = 0x4, scoped, tag = 'scoped memory for tpu_custom_call.1']
    #allocation6 [shape = 's32[1]{0}', space=sflag, size = 0x4, scoped, tag = 'scoped memory for tpu_custom_call.1']
    #allocation7 [shape = 'u8[2048]{0}', space=vmem, size = 0x800, scoped, tag = 'output window, operand 0, single buffered']
    %14 = vsyncpa [#allocation5], 0
    %15 = vsyncpa [#allocation6], 0
    // Predicated region
    $region2: #{tpu_custom_call.1} parent=1 // pred_check
      _
    $region3: #{tpu_custom_call.1} parent=1 // pred_check_branch
      %17 = sbr.rel (0) target = $region5
    $region4: #{tpu_custom_call.1} parent=1 // pred_region
      _
    $region5: #{tpu_custom_call.1} parent=1 // pred_fallthru
      _
    // Predicated region
    $region6: #{tpu_custom_call.1} parent=1 // pred_check
      _
    $region7: #{tpu_custom_call.1} parent=1 // pred_check_branch
      %19 = sbr.rel (0) target = $region9
    $region8: #{tpu_custom_call.1} parent=1 // pred_region
      %s21 = ssub.s32 64, 64
      %22 = vsyncadd [#allocation5], %s21
      %s24 = sshll.u32 [#allocation4], 4
      %s25 = int_to_ptr.vmem [resolvable:$true] %s24
      %27 = dma.hbm_to_vmem [thread:$0]  %s1, 64, %s25, [#allocation5]
    $region9: #{tpu_custom_call.1} parent=1 // pred_fallthru
      _
    // Predicated region
    $region10: #{tpu_custom_call.1} parent=1 // pred_check
      _
    $region11: #{tpu_custom_call.1} parent=1 // pred_check_branch
      %29 = sbr.rel (0) target = $region13
    $region12: #{tpu_custom_call.1} parent=1 // pred_region
      _
    $region13: #{tpu_custom_call.1} parent=1 // pred_fallthru
      _
    // Predicated region
    $region14: #{tpu_custom_call.1} parent=1 // pred_check
      _
    $region15: #{tpu_custom_call.1} parent=1 // pred_check_branch
      %31 = sbr.rel (0) target = $region17
    $region16: #{tpu_custom_call.1} parent=1 // pred_region
      _
    $region17: #{tpu_custom_call.1} parent=1 // pred_fallthru
      _
    // Predicated region
    $region18: #{tpu_custom_call.1} parent=1 // pred_check
      _
    $region19: #{tpu_custom_call.1} parent=1 // pred_check_branch
      %33 = sbr.rel (0) target = $region21
    $region20: #{tpu_custom_call.1} parent=1 // pred_region
      _
    $region21: #{tpu_custom_call.1} parent=1 // pred_fallthru
      _
    // Predicated region
    $region22: #{tpu_custom_call.1} parent=1 // pred_check
      _
    $region23: #{tpu_custom_call.1} parent=1 // pred_check_branch
      %35 = sbr.rel (0) target = $region25
    $region24: #{tpu_custom_call.1} parent=1 // pred_region
      _
    $region25: #{tpu_custom_call.1} parent=1 // pred_fallthru
      _
    // Predicated region
    $region26: #{tpu_custom_call.1} parent=1 // pred_check
      _
    $region27: #{tpu_custom_call.1} parent=1 // pred_check_branch
      %37 = sbr.rel (0) target = $region29
    $region28: #{tpu_custom_call.1} parent=1 // pred_region
      _
    $region29: #{tpu_custom_call.1} parent=1 // pred_fallthru
      _
    // Predicated region
    $region30: #{tpu_custom_call.1} parent=1 // pred_check
      _
    $region31: #{tpu_custom_call.1} parent=1 // pred_check_branch
      %39 = sbr.rel (0) target = $region33
    $region32: #{tpu_custom_call.1} parent=1 // pred_region
      _
    $region33: #{tpu_custom_call.1} parent=1 // pred_fallthru
      _
    // Predicated region
    $region34: #{tpu_custom_call.1} parent=1 // pred_check
      _
    $region35: #{tpu_custom_call.1} parent=1 // pred_check_branch
      %41 = sbr.rel (0) target = $region37
    $region36: #{tpu_custom_call.1} parent=1 // pred_region
      _
    $region37: #{tpu_custom_call.1} parent=1 // pred_fallthru
      _
    // Predicated region
    $region38: #{tpu_custom_call.1} parent=1 // pred_check
      _
    $region39: #{tpu_custom_call.1} parent=1 // pred_check_branch
      %43 = sbr.rel (0) target = $region41
    $region40: #{tpu_custom_call.1} parent=1 // pred_region
      %44 = dma.done [#allocation5], 64
    $region41: #{tpu_custom_call.1} parent=1 // pred_fallthru
      _
    %v45 = vld [vmem:[%s0] sm:$0xff]
    %v46 = vld [vmem:[%s0 + $0x8] sm:$0xff]
    %v47 = vld [vmem:[%s0 + $0x10] sm:$0xff]
    %v48 = vld [vmem:[%s0 + $0x18] sm:$0xff]
    %v49 = vld [vmem:[#allocation4] sm:$0xf]
    %v50 = vld [vmem:[%s3] sm:$0x1]
    %v52 = vlaneseq
    %v53 = vshrl.u32 %v52, 7
    %v54 = vsub.s32 0, %v53
    %v55 = vrot.slane %v50, %v54
    %vm57 = vcmask 31744
    %v59 = vsel %vm57, %v45, 0
    %v62 = vsel %vm57, %v46, 0
    %v65 = vsel %vm57, %v47, 0
    %v68 = vsel %vm57, %v48, 0
    %vm70 = vcmask 1043456
    %v72 = vsel %vm70, %v49, 0
    %74 = vmatprep.subr.mxu0 0.0
    %75 = vmatpush1.msra.mxu0 0.0
    %76 = vmatprep.subr.mxu0 0.0
    %77 = vmatpush1.msra.mxu0 0.0
    %78 = vmatprep.subr.mxu0 0.0
    %79 = vmatpush1.msra.mxu0 0.0
    %80 = vmatprep.subr.mxu0 0.0
    %81 = vmatpush1.msra.mxu0 0.0
    %82 = vmatprep.subr.mxu0 0.0
    %83 = vmatpush1.msra.mxu0 0.0
    %84 = vmatprep.subr.mxu0 0.0
    %85 = vmatpush1.msra.mxu0 0.0
    %86 = vmatprep.subr.mxu0 0.0
    %87 = vmatpush1.msra.mxu0 0.0
    %88 = vmatprep.subr.mxu0 0.0
    %89 = vmatpush1.msra.mxu0 0.0
    %90 = vmatprep.subr.mxu0 0.0
    %91 = vmatpush1.msra.mxu0 0.0
    %92 = vmatprep.subr.mxu0 0.0
    %93 = vmatpush1.msra.mxu0 0.0
    %94 = vmatprep.subr.mxu0 0.0
    %95 = vmatpush1.msra.mxu0 0.0
    %96 = vmatprep.subr.mxu0 0.0
    %97 = vmatpush1.msra.mxu0 0.0
    %98 = vmatprep.subr.mxu0 0.0
    %99 = vmatpush1.msra.mxu0 0.0
    %100 = vmatprep.subr.mxu0 0.0
    %101 = vmatpush1.msra.mxu0 0.0
    %102 = vmatprep.subr.mxu0 0.0
    %103 = vmatpush1.msra.mxu0 0.0
    %104 = vmatprep.subr.mxu0 0.0
    %105 = vmatpush1.msra.mxu0 %v72
    %106 = vmatprep.subr.mxu0 0.0
    %107 = vmatpush2.msra.mxu0 0.0
    %108 = vmatprep.subr.mxu0 0.0
    %109 = vmatpush2.msra.mxu0 0.0
    %110 = vmatprep.subr.mxu0 0.0
    %111 = vmatpush2.msra.mxu0 0.0
    %112 = vmatprep.subr.mxu0 0.0
    %113 = vmatpush2.msra.mxu0 0.0
    %114 = vmatprep.subr.mxu0 0.0
    %115 = vmatpush2.msra.mxu0 0.0
    %116 = vmatprep.subr.mxu0 0.0
    %117 = vmatpush2.msra.mxu0 0.0
    %118 = vmatprep.subr.mxu0 0.0
    %119 = vmatpush2.msra.mxu0 0.0
    %120 = vmatprep.subr.mxu0 0.0
    %121 = vmatpush2.msra.mxu0 0.0
    %122 = vmatprep.subr.mxu0 0.0
    %123 = vmatpush2.msra.mxu0 0.0
    %124 = vmatprep.subr.mxu0 0.0
    %125 = vmatpush2.msra.mxu0 0.0
    %126 = vmatprep.subr.mxu0 0.0
    %127 = vmatpush2.msra.mxu0 0.0
    %128 = vmatprep.subr.mxu0 0.0
    %129 = vmatpush2.msra.mxu0 0.0
    %130 = vmatprep.subr.mxu0 0.0
    %131 = vmatpush2.msra.mxu0 0.0
    %132 = vmatprep.subr.mxu0 0.0
    %133 = vmatpush2.msra.mxu0 0.0
    %134 = vmatprep.subr.mxu0 0.0
    %135 = vmatpush2.msra.mxu0 0.0
    %136 = vmatprep.subr.mxu0 0.0
    %137 = vmatpush2.msra.mxu0 0.0
    %138 = vmatprep.mubr.f32.mxu0 0.0
    %139 = vmatmul.mubr.f32.gmra.mxu0 %v59
    %v140 = vpop.f32.mrf.mxu0
    %v141 = vadd.f32 %v55, %v140
    %v142 = vpop.f32.mrf.mxu0
    %143 = vmatprep.mubr.f32.mxu0 0.0
    %144 = vmatmul.mubr.f32.gmra.mxu0 %v62
    %v145 = vpop.f32.mrf.mxu0
    %v146 = vadd.f32 %v55, %v145
    %v147 = vpop.f32.mrf.mxu0
    %148 = vmatprep.mubr.f32.mxu0 0.0
    %149 = vmatmul.mubr.f32.gmra.mxu0 %v65
    %v150 = vpop.f32.mrf.mxu0
    %v151 = vadd.f32 %v55, %v150
    %v152 = vpop.f32.mrf.mxu0
    %153 = vmatprep.mubr.f32.mxu0 0.0
    %154 = vmatmul.mubr.f32.gmra.mxu0 %v68
    %v155 = vpop.f32.mrf.mxu0
    %v156 = vadd.f32 %v55, %v155
    %v157 = vpop.f32.mrf.mxu0
    %158 = vdwg.mxu0
    %159 = vst [vmem:[#allocation2] sm:$0xff] %v141
    %160 = vst [vmem:[#allocation2 + $0x8] sm:$0xff] %v146
    %161 = vst [vmem:[#allocation2 + $0x10] sm:$0xff] %v151
    %162 = vst [vmem:[#allocation2 + $0x18] sm:$0xff] %v156
    %v163 = vld [vmem:[%s2] sm:$0xff]
    %v164 = vld [vmem:[%s2 + $0x8] sm:$0xff]
    %v165 = vld [vmem:[%s2 + $0x10] sm:$0xff]
    %v166 = vld [vmem:[%s2 + $0x18] sm:$0xff]
    %v167 = vld [vmem:[#allocation2] sm:$0x1]
    %v168 = vld [vmem:[#allocation2 + $0x8] sm:$0x1]
    %v169 = vld [vmem:[#allocation2 + $0x10] sm:$0x1]
    %v170 = vld [vmem:[#allocation2 + $0x18] sm:$0x1]
    %v171 = vld [vmem:[#allocation2 + $0x1] sm:$0x1]
    %v172 = vld [vmem:[#allocation2 + $0x9] sm:$0x1]
    %v173 = vld [vmem:[#allocation2 + $0x11] sm:$0x1]
    %v174 = vld [vmem:[#allocation2 + $0x19] sm:$0x1]
    %v175 = vld [vmem:[#allocation2 + $0x2] sm:$0x1]
    %v176 = vld [vmem:[#allocation2 + $0xa] sm:$0x1]
    %v177 = vld [vmem:[#allocation2 + $0x12] sm:$0x1]
    %v178 = vld [vmem:[#allocation2 + $0x1a] sm:$0x1]
    %v179 = vld [vmem:[#allocation2 + $0x3] sm:$0x1]
    %v180 = vld [vmem:[#allocation2 + $0xb] sm:$0x1]
    %v181 = vld [vmem:[#allocation2 + $0x13] sm:$0x1]
    %v182 = vld [vmem:[#allocation2 + $0x1b] sm:$0x1]
    %v183 = vld [vmem:[#allocation2 + $0x4] sm:$0x1]
    %v184 = vld [vmem:[#allocation2 + $0xc] sm:$0x1]
    %v185 = vld [vmem:[#allocation2 + $0x14] sm:$0x1]
    %v186 = vld [vmem:[#allocation2 + $0x1c] sm:$0x1]
    %v187 = vld [vmem:[#allocation2 + $0x5] sm:$0x1]
    %v188 = vld [vmem:[#allocation2 + $0xd] sm:$0x1]
    %v189 = vld [vmem:[#allocation2 + $0x15] sm:$0x1]
    %v190 = vld [vmem:[#allocation2 + $0x1d] sm:$0x1]
    %v191 = vld [vmem:[#allocation2 + $0x6] sm:$0x1]
    %v192 = vld [vmem:[#allocation2 + $0xe] sm:$0x1]
    %v193 = vld [vmem:[#allocation2 + $0x16] sm:$0x1]
    %v194 = vld [vmem:[#allocation2 + $0x1e] sm:$0x1]
    %v195 = vld [vmem:[#allocation2 + $0x7] sm:$0x1]
    %v196 = vld [vmem:[#allocation2 + $0xf] sm:$0x1]
    %v197 = vld [vmem:[#allocation2 + $0x17] sm:$0x1]
    %v198 = vld [vmem:[#allocation2 + $0x1f] sm:$0x1]
    %vm199 = vcmask 261120
    %v201 = vsel %vm199, 0.0, 0
    %203 = vmatprep.subr.mxu0 0.0
    %204 = vmatpush1.msra.mxu0 0.0
    %205 = vmatprep.subr.mxu0 0.0
    %206 = vmatpush1.msra.mxu0 0.0
    %207 = vmatprep.subr.mxu0 0.0
    %208 = vmatpush1.msra.mxu0 0.0
    %209 = vmatprep.subr.mxu0 0.0
    %210 = vmatpush1.msra.mxu0 0.0
    %211 = vmatprep.subr.mxu0 0.0
    %212 = vmatpush1.msra.mxu0 0.0
    %213 = vmatprep.subr.mxu0 0.0
    %214 = vmatpush1.msra.mxu0 0.0
    %215 = vmatprep.subr.mxu0 0.0
    %216 = vmatpush1.msra.mxu0 0.0
    %217 = vmatprep.subr.mxu0 0.0
    %218 = vmatpush1.msra.mxu0 0.0
    %219 = vmatprep.subr.mxu0 0.0
    %220 = vmatpush1.msra.mxu0 0.0
    %221 = vmatprep.subr.mxu0 0.0
    %222 = vmatpush1.msra.mxu0 0.0
    %223 = vmatprep.subr.mxu0 0.0
    %224 = vmatpush1.msra.mxu0 0.0
    %225 = vmatprep.subr.mxu0 0.0
    %226 = vmatpush1.msra.mxu0 0.0
    %227 = vmatprep.subr.mxu0 0.0
    %228 = vmatpush1.msra.mxu0 %v166
    %229 = vmatprep.subr.mxu0 0.0
    %230 = vmatpush1.msra.mxu0 %v165
    %231 = vmatprep.subr.mxu0 0.0
    %232 = vmatpush1.msra.mxu0 %v164
    %233 = vmatprep.subr.mxu0 0.0
    %234 = vmatpush1.msra.mxu0 %v163
    %235 = vmatprep.subr.mxu0 0.0
    %236 = vmatpush2.msra.mxu0 0.0
    %237 = vmatprep.subr.mxu0 0.0
    %238 = vmatpush2.msra.mxu0 0.0
    %239 = vmatprep.subr.mxu0 0.0
    %240 = vmatpush2.msra.mxu0 0.0
    %241 = vmatprep.subr.mxu0 0.0
    %242 = vmatpush2.msra.mxu0 0.0
    %243 = vmatprep.subr.mxu0 0.0
    %244 = vmatpush2.msra.mxu0 0.0
    %245 = vmatprep.subr.mxu0 0.0
    %246 = vmatpush2.msra.mxu0 0.0
    %247 = vmatprep.subr.mxu0 0.0
    %248 = vmatpush2.msra.mxu0 0.0
    %249 = vmatprep.subr.mxu0 0.0
    %250 = vmatpush2.msra.mxu0 0.0
    %251 = vmatprep.subr.mxu0 0.0
    %252 = vmatpush2.msra.mxu0 0.0
    %253 = vmatprep.subr.mxu0 0.0
    %254 = vmatpush2.msra.mxu0 0.0
    %255 = vmatprep.subr.mxu0 0.0
    %256 = vmatpush2.msra.mxu0 0.0
    %257 = vmatprep.subr.mxu0 0.0
    %258 = vmatpush2.msra.mxu0 0.0
    %259 = vmatprep.subr.mxu0 0.0
    %260 = vmatpush2.msra.mxu0 0.0
    %261 = vmatprep.subr.mxu0 0.0
    %262 = vmatpush2.msra.mxu0 0.0
    %263 = vmatprep.subr.mxu0 0.0
    %264 = vmatpush2.msra.mxu0 0.0
    %265 = vmatprep.subr.mxu0 0.0
    %266 = vmatpush2.msra.mxu0 0.0
    %267 = vmatprep.mubr.f32.mxu0 0.0
    %268 = vmatmul.mubr.f32.gmra.mxu0 %v201
    %v269 = vpop.f32.mrf.mxu0
    %v270 = vadd.f32 0.0, %v269
    %v271 = vpop.f32.mrf.mxu0
    %272 = vdwg.mxu0
    %v274 = vrot.slane %v270, 1
    %v275 = vrot.slane %v270, 2
    %v276 = vrot.slane %v270, 3
    %v281 = vadd.f32 %v167, %v270
    %v282 = vadd.f32 %v168, %v274
    %v283 = vadd.f32 %v169, %v275
    %v284 = vadd.f32 %v170, %v276
    %v285 = vxor.u32 %v281, 2147483648
    %v286 = vxor.u32 %v282, 2147483648
    %v287 = vxor.u32 %v283, 2147483648
    %v288 = vxor.u32 %v284, 2147483648
    %v289 = vmul.f32 %v285, 1.442695
    %v290 = vpow.pop %v289
    %v291 = vmul.f32 %v286, 1.442695
    %v292 = vpow.pop %v291
    %v293 = vmul.f32 %v287, 1.442695
    %v294 = vpow.pop %v293
    %v295 = vmul.f32 %v288, 1.442695
    %v296 = vpow.pop %v295
    %v297 = vadd.f32 %v290, 1.0
    %v298 = vadd.f32 %v292, 1.0
    %v299 = vadd.f32 %v294, 1.0
    %v300 = vadd.f32 %v296, 1.0
    %v301 = vrcp.pop %v297
    %v302 = vmul.f32 1.0, %v301
    %v303 = vrcp.pop %v298
    %v304 = vmul.f32 1.0, %v303
    %v305 = vrcp.pop %v299
    %v306 = vmul.f32 1.0, %v305
    %v307 = vrcp.pop %v300
    %v308 = vmul.f32 1.0, %v307
    %v309 = vtanh.pop %v281
    %v310 = vtanh.pop %v282
    %v311 = vtanh.pop %v283
    %v312 = vtanh.pop %v284
    %v313 = vmul.f32 %v302, 0.0
    %v314 = vmul.f32 %v304, 0.0
    %v315 = vmul.f32 %v306, 0.0
    %v316 = vmul.f32 %v308, 0.0
    %321 = vrot.lane.b32.xlu0 %v309, 64
    %v322 = vpop.permute.xlu0 %321
    %323 = vrot.lane.b32.xlu0 %v310, 64
    %v324 = vpop.permute.xlu0 %323
    %325 = vrot.lane.b32.xlu0 %v311, 64
    %v326 = vpop.permute.xlu0 %325
    %327 = vrot.lane.b32.xlu0 %v312, 64
    %v328 = vpop.permute.xlu0 %327
    %v333 = vmul.f32 %v302, %v322
    %v334 = vmul.f32 %v304, %v324
    %v335 = vmul.f32 %v306, %v326
    %v336 = vmul.f32 %v308, %v328
    %341 = vrot.lane.b32.xlu0 %v333, 32
    %v342 = vpop.permute.xlu0 %341
    %343 = vrot.lane.b32.xlu0 %v334, 32
    %v344 = vpop.permute.xlu0 %343
    %345 = vrot.lane.b32.xlu0 %v335, 32
    %v346 = vpop.permute.xlu0 %345
    %347 = vrot.lane.b32.xlu0 %v336, 32
    %v348 = vpop.permute.xlu0 %347
    %v353 = vadd.f32 %v313, %v342
    %v354 = vadd.f32 %v314, %v344
    %v355 = vadd.f32 %v315, %v346
    %v356 = vadd.f32 %v316, %v348
    %v357 = vtanh.pop %v353
    %v358 = vtanh.pop %v354
    %v359 = vtanh.pop %v355
    %v360 = vtanh.pop %v356
    %365 = vrot.lane.b32.xlu0 %v357, 64
    %v366 = vpop.permute.xlu0 %365
    %367 = vrot.lane.b32.xlu0 %v358, 64
    %v368 = vpop.permute.xlu0 %367
    %369 = vrot.lane.b32.xlu0 %v359, 64
    %v370 = vpop.permute.xlu0 %369
    %371 = vrot.lane.b32.xlu0 %v360, 64
    %v372 = vpop.permute.xlu0 %371
    %v377 = vmul.f32 %v302, %v366
    %v378 = vmul.f32 %v304, %v368
    %v379 = vmul.f32 %v306, %v370
    %v380 = vmul.f32 %v308, %v372
    %385 = vrot.lane.b32.xlu0 %v377, 32
    %v386 = vpop.permute.xlu0 %385
    %387 = vrot.lane.b32.xlu0 %v378, 32
    %v388 = vpop.permute.xlu0 %387
    %389 = vrot.lane.b32.xlu0 %v379, 32
    %v390 = vpop.permute.xlu0 %389
    %391 = vrot.lane.b32.xlu0 %v380, 32
    %v392 = vpop.permute.xlu0 %391
    %vm397 = vcmask 253952
    %398 = vst.msk [vmem:[#allocation3] sm:$0x1] %vm397, %v386
    %399 = vst.msk [vmem:[#allocation3 + $0x8] sm:$0x1] %vm397, %v388
    %400 = vst.msk [vmem:[#allocation3 + $0x10] sm:$0x1] %vm397, %v390
    %401 = vst.msk [vmem:[#allocation3 + $0x18] sm:$0x1] %vm397, %v392
    %v402 = vrot.slane %v378, 7
    %vm403 = vcmask 1041409
    %v404 = vsel %vm403, %v402, %v377
    %v405 = vrot.slane %v379, 6
    %vm406 = vcmask 1042434
    %v407 = vsel %vm406, %v405, %v404
    %v408 = vrot.slane %v380, 5
    %vm409 = vcmask 1043459
    %v410 = vsel %vm409, %v408, %v407
    %411 = vrot.lane.b32.xlu0 %v410, 32
    %v412 = vpop.permute.xlu0 %411
    %v413 = vsel %vm199, %v412, 0
    %415 = vmatprep.subr.mxu0 0.0
    %416 = vmatpush1.msra.mxu0 0.0
    %417 = vmatprep.subr.mxu0 0.0
    %418 = vmatpush1.msra.mxu0 0.0
    %419 = vmatprep.subr.mxu0 0.0
    %420 = vmatpush1.msra.mxu0 0.0
    %421 = vmatprep.subr.mxu0 0.0
    %422 = vmatpush1.msra.mxu0 0.0
    %423 = vmatprep.subr.mxu0 0.0
    %424 = vmatpush1.msra.mxu0 0.0
    %425 = vmatprep.subr.mxu0 0.0
    %426 = vmatpush1.msra.mxu0 0.0
    %427 = vmatprep.subr.mxu0 0.0
    %428 = vmatpush1.msra.mxu0 0.0
    %429 = vmatprep.subr.mxu0 0.0
    %430 = vmatpush1.msra.mxu0 0.0
    %431 = vmatprep.subr.mxu0 0.0
    %432 = vmatpush1.msra.mxu0 0.0
    %433 = vmatprep.subr.mxu0 0.0
    %434 = vmatpush1.msra.mxu0 0.0
    %435 = vmatprep.subr.mxu0 0.0
    %436 = vmatpush1.msra.mxu0 0.0
    %437 = vmatprep.subr.mxu0 0.0
    %438 = vmatpush1.msra.mxu0 0.0
    %439 = vmatprep.subr.mxu0 0.0
    %440 = vmatpush1.msra.mxu0 %v166
    %441 = vmatprep.subr.mxu0 0.0
    %442 = vmatpush1.msra.mxu0 %v165
    %443 = vmatprep.subr.mxu0 0.0
    %444 = vmatpush1.msra.mxu0 %v164
    %445 = vmatprep.subr.mxu0 0.0
    %446 = vmatpush1.msra.mxu0 %v163
    %447 = vmatprep.subr.mxu0 0.0
    %448 = vmatpush2.msra.mxu0 0.0
    %449 = vmatprep.subr.mxu0 0.0
    %450 = vmatpush2.msra.mxu0 0.0
    %451 = vmatprep.subr.mxu0 0.0
    %452 = vmatpush2.msra.mxu0 0.0
    %453 = vmatprep.subr.mxu0 0.0
    %454 = vmatpush2.msra.mxu0 0.0
    %455 = vmatprep.subr.mxu0 0.0
    %456 = vmatpush2.msra.mxu0 0.0
    %457 = vmatprep.subr.mxu0 0.0
    %458 = vmatpush2.msra.mxu0 0.0
    %459 = vmatprep.subr.mxu0 0.0
    %460 = vmatpush2.msra.mxu0 0.0
    %461 = vmatprep.subr.mxu0 0.0
    %462 = vmatpush2.msra.mxu0 0.0
    %463 = vmatprep.subr.mxu0 0.0
    %464 = vmatpush2.msra.mxu0 0.0
    %465 = vmatprep.subr.mxu0 0.0
    %466 = vmatpush2.msra.mxu0 0.0
    %467 = vmatprep.subr.mxu0 0.0
    %468 = vmatpush2.msra.mxu0 0.0
    %469 = vmatprep.subr.mxu0 0.0
    %470 = vmatpush2.msra.mxu0 0.0
    %471 = vmatprep.subr.mxu0 0.0
    %472 = vmatpush2.msra.mxu0 0.0
    %473 = vmatprep.subr.mxu0 0.0
    %474 = vmatpush2.msra.mxu0 0.0
    %475 = vmatprep.subr.mxu0 0.0
    %476 = vmatpush2.msra.mxu0 0.0
    %477 = vmatprep.subr.mxu0 0.0
    %478 = vmatpush2.msra.mxu0 0.0
    %479 = vmatprep.mubr.f32.mxu0 0.0
    %480 = vmatmul.mubr.f32.gmra.mxu0 %v413
    %v481 = vpop.f32.mrf.mxu0
    %v482 = vadd.f32 0.0, %v481
    %v483 = vpop.f32.mrf.mxu0
    %484 = vdwg.mxu0
    %v486 = vrot.slane %v482, 1
    %v487 = vrot.slane %v482, 2
    %v488 = vrot.slane %v482, 3
    %v493 = vadd.f32 %v171, %v482
    %v494 = vadd.f32 %v172, %v486
    %v495 = vadd.f32 %v173, %v487
    %v496 = vadd.f32 %v174, %v488
    %v497 = vxor.u32 %v493, 2147483648
    %v498 = vxor.u32 %v494, 2147483648
    %v499 = vxor.u32 %v495, 2147483648
    %v500 = vxor.u32 %v496, 2147483648
    %v501 = vmul.f32 %v497, 1.442695
    %v502 = vpow.pop %v501
    %v503 = vmul.f32 %v498, 1.442695
    %v504 = vpow.pop %v503
    %v505 = vmul.f32 %v499, 1.442695
    %v506 = vpow.pop %v505
    %v507 = vmul.f32 %v500, 1.442695
    %v508 = vpow.pop %v507
    %v509 = vadd.f32 %v502, 1.0
    %v510 = vadd.f32 %v504, 1.0
    %v511 = vadd.f32 %v506, 1.0
    %v512 = vadd.f32 %v508, 1.0
    %v513 = vrcp.pop %v509
    %v514 = vmul.f32 1.0, %v513
    %v515 = vrcp.pop %v510
    %v516 = vmul.f32 1.0, %v515
    %v517 = vrcp.pop %v511
    %v518 = vmul.f32 1.0, %v517
    %v519 = vrcp.pop %v512
    %v520 = vmul.f32 1.0, %v519
    %v521 = vtanh.pop %v493
    %v522 = vtanh.pop %v494
    %v523 = vtanh.pop %v495
    %v524 = vtanh.pop %v496
    %v525 = vmul.f32 %v514, %v353
    %v526 = vmul.f32 %v516, %v354
    %v527 = vmul.f32 %v518, %v355
    %v528 = vmul.f32 %v520, %v356
    %533 = vrot.lane.b32.xlu0 %v521, 64
    %v534 = vpop.permute.xlu0 %533
    %535 = vrot.lane.b32.xlu0 %v522, 64
    %v536 = vpop.permute.xlu0 %535
    %537 = vrot.lane.b32.xlu0 %v523, 64
    %v538 = vpop.permute.xlu0 %537
    %539 = vrot.lane.b32.xlu0 %v524, 64
    %v540 = vpop.permute.xlu0 %539
    %v545 = vmul.f32 %v514, %v534
    %v546 = vmul.f32 %v516, %v536
    %v547 = vmul.f32 %v518, %v538
    %v548 = vmul.f32 %v520, %v540
    %553 = vrot.lane.b32.xlu0 %v545, 32
    %v554 = vpop.permute.xlu0 %553
    %555 = vrot.lane.b32.xlu0 %v546, 32
    %v556 = vpop.permute.xlu0 %555
    %557 = vrot.lane.b32.xlu0 %v547, 32
    %v558 = vpop.permute.xlu0 %557
    %559 = vrot.lane.b32.xlu0 %v548, 32
    %v560 = vpop.permute.xlu0 %559
    %v565 = vadd.f32 %v525, %v554
    %v566 = vadd.f32 %v526, %v556
    %v567 = vadd.f32 %v527, %v558
    %v568 = vadd.f32 %v528, %v560
    %v569 = vtanh.pop %v565
    %v570 = vtanh.pop %v566
    %v571 = vtanh.pop %v567
    %v572 = vtanh.pop %v568
    %577 = vrot.lane.b32.xlu0 %v569, 64
    %v578 = vpop.permute.xlu0 %577
    %579 = vrot.lane.b32.xlu0 %v570, 64
    %v580 = vpop.permute.xlu0 %579
    %581 = vrot.lane.b32.xlu0 %v571, 64
    %v582 = vpop.permute.xlu0 %581
    %583 = vrot.lane.b32.xlu0 %v572, 64
    %v584 = vpop.permute.xlu0 %583
    %v589 = vmul.f32 %v514, %v578
    %v590 = vmul.f32 %v516, %v580
    %v591 = vmul.f32 %v518, %v582
    %v592 = vmul.f32 %v520, %v584
    %597 = vrot.lane.b32.xlu0 %v589, 32
    %v598 = vpop.permute.xlu0 %597
    %599 = vrot.lane.b32.xlu0 %v590, 32
    %v600 = vpop.permute.xlu0 %599
    %601 = vrot.lane.b32.xlu0 %v591, 32
    %v602 = vpop.permute.xlu0 %601
    %603 = vrot.lane.b32.xlu0 %v592, 32
    %v604 = vpop.permute.xlu0 %603
    %609 = vst.msk [vmem:[#allocation3 + $0x1] sm:$0x1] %vm397, %v598
    %610 = vst.msk [vmem:[#allocation3 + $0x9] sm:$0x1] %vm397, %v600
    %611 = vst.msk [vmem:[#allocation3 + $0x11] sm:$0x1] %vm397, %v602
    %612 = vst.msk [vmem:[#allocation3 + $0x19] sm:$0x1] %vm397, %v604
    %v613 = vrot.slane %v590, 7
    %v614 = vsel %vm403, %v613, %v589
    %v615 = vrot.slane %v591, 6
    %v616 = vsel %vm406, %v615, %v614
    %v617 = vrot.slane %v592, 5
    %v618 = vsel %vm409, %v617, %v616
    %619 = vrot.lane.b32.xlu0 %v618, 32
    %v620 = vpop.permute.xlu0 %619
    %v621 = vsel %vm199, %v620, 0
    %623 = vmatprep.subr.mxu0 0.0
    %624 = vmatpush1.msra.mxu0 0.0
    %625 = vmatprep.subr.mxu0 0.0
    %626 = vmatpush1.msra.mxu0 0.0
    %627 = vmatprep.subr.mxu0 0.0
    %628 = vmatpush1.msra.mxu0 0.0
    %629 = vmatprep.subr.mxu0 0.0
    %630 = vmatpush1.msra.mxu0 0.0
    %631 = vmatprep.subr.mxu0 0.0
    %632 = vmatpush1.msra.mxu0 0.0
    %633 = vmatprep.subr.mxu0 0.0
    %634 = vmatpush1.msra.mxu0 0.0
    %635 = vmatprep.subr.mxu0 0.0
    %636 = vmatpush1.msra.mxu0 0.0
    %637 = vmatprep.subr.mxu0 0.0
    %638 = vmatpush1.msra.mxu0 0.0
    %639 = vmatprep.subr.mxu0 0.0
    %640 = vmatpush1.msra.mxu0 0.0
    %641 = vmatprep.subr.mxu0 0.0
    %642 = vmatpush1.msra.mxu0 0.0
    %643 = vmatprep.subr.mxu0 0.0
    %644 = vmatpush1.msra.mxu0 0.0
    %645 = vmatprep.subr.mxu0 0.0
    %646 = vmatpush1.msra.mxu0 0.0
    %647 = vmatprep.subr.mxu0 0.0
    %648 = vmatpush1.msra.mxu0 %v166
    %649 = vmatprep.subr.mxu0 0.0
    %650 = vmatpush1.msra.mxu0 %v165
    %651 = vmatprep.subr.mxu0 0.0
    %652 = vmatpush1.msra.mxu0 %v164
    %653 = vmatprep.subr.mxu0 0.0
    %654 = vmatpush1.msra.mxu0 %v163
    %655 = vmatprep.subr.mxu0 0.0
    %656 = vmatpush2.msra.mxu0 0.0
    %657 = vmatprep.subr.mxu0 0.0
    %658 = vmatpush2.msra.mxu0 0.0
    %659 = vmatprep.subr.mxu0 0.0
    %660 = vmatpush2.msra.mxu0 0.0
    %661 = vmatprep.subr.mxu0 0.0
    %662 = vmatpush2.msra.mxu0 0.0
    %663 = vmatprep.subr.mxu0 0.0
    %664 = vmatpush2.msra.mxu0 0.0
    %665 = vmatprep.subr.mxu0 0.0
    %666 = vmatpush2.msra.mxu0 0.0
    %667 = vmatprep.subr.mxu0 0.0
    %668 = vmatpush2.msra.mxu0 0.0
    %669 = vmatprep.subr.mxu0 0.0
    %670 = vmatpush2.msra.mxu0 0.0
    %671 = vmatprep.subr.mxu0 0.0
    %672 = vmatpush2.msra.mxu0 0.0
    %673 = vmatprep.subr.mxu0 0.0
    %674 = vmatpush2.msra.mxu0 0.0
    %675 = vmatprep.subr.mxu0 0.0
    %676 = vmatpush2.msra.mxu0 0.0
    %677 = vmatprep.subr.mxu0 0.0
    %678 = vmatpush2.msra.mxu0 0.0
    %679 = vmatprep.subr.mxu0 0.0
    %680 = vmatpush2.msra.mxu0 0.0
    %681 = vmatprep.subr.mxu0 0.0
    %682 = vmatpush2.msra.mxu0 0.0
    %683 = vmatprep.subr.mxu0 0.0
    %684 = vmatpush2.msra.mxu0 0.0
    %685 = vmatprep.subr.mxu0 0.0
    %686 = vmatpush2.msra.mxu0 0.0
    %687 = vmatprep.mubr.f32.mxu0 0.0
    %688 = vmatmul.mubr.f32.gmra.mxu0 %v621
    %v689 = vpop.f32.mrf.mxu0
    %v690 = vadd.f32 0.0, %v689
    %v691 = vpop.f32.mrf.mxu0
    %692 = vdwg.mxu0
    %v694 = vrot.slane %v690, 1
    %v695 = vrot.slane %v690, 2
    %v696 = vrot.slane %v690, 3
    %v701 = vadd.f32 %v175, %v690
    %v702 = vadd.f32 %v176, %v694
    %v703 = vadd.f32 %v177, %v695
    %v704 = vadd.f32 %v178, %v696
    %v705 = vxor.u32 %v701, 2147483648
    %v706 = vxor.u32 %v702, 2147483648
    %v707 = vxor.u32 %v703, 2147483648
    %v708 = vxor.u32 %v704, 2147483648
    %v709 = vmul.f32 %v705, 1.442695
    %v710 = vpow.pop %v709
    %v711 = vmul.f32 %v706, 1.442695
    %v712 = vpow.pop %v711
    %v713 = vmul.f32 %v707, 1.442695
    %v714 = vpow.pop %v713
    %v715 = vmul.f32 %v708, 1.442695
    %v716 = vpow.pop %v715
    %v717 = vadd.f32 %v710, 1.0
    %v718 = vadd.f32 %v712, 1.0
    %v719 = vadd.f32 %v714, 1.0
    %v720 = vadd.f32 %v716, 1.0
    %v721 = vrcp.pop %v717
    %v722 = vmul.f32 1.0, %v721
    %v723 = vrcp.pop %v718
    %v724 = vmul.f32 1.0, %v723
    %v725 = vrcp.pop %v719
    %v726 = vmul.f32 1.0, %v725
    %v727 = vrcp.pop %v720
    %v728 = vmul.f32 1.0, %v727
    %v729 = vtanh.pop %v701
    %v730 = vtanh.pop %v702
    %v731 = vtanh.pop %v703
    %v732 = vtanh.pop %v704
    %v733 = vmul.f32 %v722, %v565
    %v734 = vmul.f32 %v724, %v566
    %v735 = vmul.f32 %v726, %v567
    %v736 = vmul.f32 %v728, %v568
    %741 = vrot.lane.b32.xlu0 %v729, 64
    %v742 = vpop.permute.xlu0 %741
    %743 = vrot.lane.b32.xlu0 %v730, 64
    %v744 = vpop.permute.xlu0 %743
    %745 = vrot.lane.b32.xlu0 %v731, 64
    %v746 = vpop.permute.xlu0 %745
    %747 = vrot.lane.b32.xlu0 %v732, 64
    %v748 = vpop.permute.xlu0 %747
    %v753 = vmul.f32 %v722, %v742
    %v754 = vmul.f32 %v724, %v744
    %v755 = vmul.f32 %v726, %v746
    %v756 = vmul.f32 %v728, %v748
    %761 = vrot.lane.b32.xlu0 %v753, 32
    %v762 = vpop.permute.xlu0 %761
    %763 = vrot.lane.b32.xlu0 %v754, 32
    %v764 = vpop.permute.xlu0 %763
    %765 = vrot.lane.b32.xlu0 %v755, 32
    %v766 = vpop.permute.xlu0 %765
    %767 = vrot.lane.b32.xlu0 %v756, 32
    %v768 = vpop.permute.xlu0 %767
    %v773 = vadd.f32 %v733, %v762
    %v774 = vadd.f32 %v734, %v764
    %v775 = vadd.f32 %v735, %v766
    %v776 = vadd.f32 %v736, %v768
    %v777 = vtanh.pop %v773
    %v778 = vtanh.pop %v774
    %v779 = vtanh.pop %v775
    %v780 = vtanh.pop %v776
    %785 = vrot.lane.b32.xlu0 %v777, 64
    %v786 = vpop.permute.xlu0 %785
    %787 = vrot.lane.b32.xlu0 %v778, 64
    %v788 = vpop.permute.xlu0 %787
    %789 = vrot.lane.b32.xlu0 %v779, 64
    %v790 = vpop.permute.xlu0 %789
    %791 = vrot.lane.b32.xlu0 %v780, 64
    %v792 = vpop.permute.xlu0 %791
    %v797 = vmul.f32 %v722, %v786
    %v798 = vmul.f32 %v724, %v788
    %v799 = vmul.f32 %v726, %v790
    %v800 = vmul.f32 %v728, %v792
    %805 = vrot.lane.b32.xlu0 %v797, 32
    %v806 = vpop.permute.xlu0 %805
    %807 = vrot.lane.b32.xlu0 %v798, 32
    %v808 = vpop.permute.xlu0 %807
    %809 = vrot.lane.b32.xlu0 %v799, 32
    %v810 = vpop.permute.xlu0 %809
    %811 = vrot.lane.b32.xlu0 %v800, 32
    %v812 = vpop.permute.xlu0 %811
    %817 = vst.msk [vmem:[#allocation3 + $0x2] sm:$0x1] %vm397, %v806
    %818 = vst.msk [vmem:[#allocation3 + $0xa] sm:$0x1] %vm397, %v808
    %819 = vst.msk [vmem:[#allocation3 + $0x12] sm:$0x1] %vm397, %v810
    %820 = vst.msk [vmem:[#allocation3 + $0x1a] sm:$0x1] %vm397, %v812
    %v821 = vrot.slane %v798, 7
    %v822 = vsel %vm403, %v821, %v797
    %v823 = vrot.slane %v799, 6
    %v824 = vsel %vm406, %v823, %v822
    %v825 = vrot.slane %v800, 5
    %v826 = vsel %vm409, %v825, %v824
    %827 = vrot.lane.b32.xlu0 %v826, 32
    %v828 = vpop.permute.xlu0 %827
    %v829 = vsel %vm199, %v828, 0
    %831 = vmatprep.subr.mxu0 0.0
    %832 = vmatpush1.msra.mxu0 0.0
    %833 = vmatprep.subr.mxu0 0.0
    %834 = vmatpush1.msra.mxu0 0.0
    %835 = vmatprep.subr.mxu0 0.0
    %836 = vmatpush1.msra.mxu0 0.0
    %837 = vmatprep.subr.mxu0 0.0
    %838 = vmatpush1.msra.mxu0 0.0
    %839 = vmatprep.subr.mxu0 0.0
    %840 = vmatpush1.msra.mxu0 0.0
    %841 = vmatprep.subr.mxu0 0.0
    %842 = vmatpush1.msra.mxu0 0.0
    %843 = vmatprep.subr.mxu0 0.0
    %844 = vmatpush1.msra.mxu0 0.0
    %845 = vmatprep.subr.mxu0 0.0
    %846 = vmatpush1.msra.mxu0 0.0
    %847 = vmatprep.subr.mxu0 0.0
    %848 = vmatpush1.msra.mxu0 0.0
    %849 = vmatprep.subr.mxu0 0.0
    %850 = vmatpush1.msra.mxu0 0.0
    %851 = vmatprep.subr.mxu0 0.0
    %852 = vmatpush1.msra.mxu0 0.0
    %853 = vmatprep.subr.mxu0 0.0
    %854 = vmatpush1.msra.mxu0 0.0
    %855 = vmatprep.subr.mxu0 0.0
    %856 = vmatpush1.msra.mxu0 %v166
    %857 = vmatprep.subr.mxu0 0.0
    %858 = vmatpush1.msra.mxu0 %v165
    %859 = vmatprep.subr.mxu0 0.0
    %860 = vmatpush1.msra.mxu0 %v164
    %861 = vmatprep.subr.mxu0 0.0
    %862 = vmatpush1.msra.mxu0 %v163
    %863 = vmatprep.subr.mxu0 0.0
    %864 = vmatpush2.msra.mxu0 0.0
    %865 = vmatprep.subr.mxu0 0.0
    %866 = vmatpush2.msra.mxu0 0.0
    %867 = vmatprep.subr.mxu0 0.0
    %868 = vmatpush2.msra.mxu0 0.0
    %869 = vmatprep.subr.mxu0 0.0
    %870 = vmatpush2.msra.mxu0 0.0
    %871 = vmatprep.subr.mxu0 0.0
    %872 = vmatpush2.msra.mxu0 0.0
    %873 = vmatprep.subr.mxu0 0.0
    %874 = vmatpush2.msra.mxu0 0.0
    %875 = vmatprep.subr.mxu0 0.0
    %876 = vmatpush2.msra.mxu0 0.0
    %877 = vmatprep.subr.mxu0 0.0
    %878 = vmatpush2.msra.mxu0 0.0
    %879 = vmatprep.subr.mxu0 0.0
    %880 = vmatpush2.msra.mxu0 0.0
    %881 = vmatprep.subr.mxu0 0.0
    %882 = vmatpush2.msra.mxu0 0.0
    %883 = vmatprep.subr.mxu0 0.0
    %884 = vmatpush2.msra.mxu0 0.0
    %885 = vmatprep.subr.mxu0 0.0
    %886 = vmatpush2.msra.mxu0 0.0
    %887 = vmatprep.subr.mxu0 0.0
    %888 = vmatpush2.msra.mxu0 0.0
    %889 = vmatprep.subr.mxu0 0.0
    %890 = vmatpush2.msra.mxu0 0.0
    %891 = vmatprep.subr.mxu0 0.0
    %892 = vmatpush2.msra.mxu0 0.0
    %893 = vmatprep.subr.mxu0 0.0
    %894 = vmatpush2.msra.mxu0 0.0
    %895 = vmatprep.mubr.f32.mxu0 0.0
    %896 = vmatmul.mubr.f32.gmra.mxu0 %v829
    %v897 = vpop.f32.mrf.mxu0
    %v898 = vadd.f32 0.0, %v897
    %v899 = vpop.f32.mrf.mxu0
    %900 = vdwg.mxu0
    %v902 = vrot.slane %v898, 1
    %v903 = vrot.slane %v898, 2
    %v904 = vrot.slane %v898, 3
    %v909 = vadd.f32 %v179, %v898
    %v910 = vadd.f32 %v180, %v902
    %v911 = vadd.f32 %v181, %v903
    %v912 = vadd.f32 %v182, %v904
    %v913 = vxor.u32 %v909, 2147483648
    %v914 = vxor.u32 %v910, 2147483648
    %v915 = vxor.u32 %v911, 2147483648
    %v916 = vxor.u32 %v912, 2147483648
    %v917 = vmul.f32 %v913, 1.442695
    %v918 = vpow.pop %v917
    %v919 = vmul.f32 %v914, 1.442695
    %v920 = vpow.pop %v919
    %v921 = vmul.f32 %v915, 1.442695
    %v922 = vpow.pop %v921
    %v923 = vmul.f32 %v916, 1.442695
    %v924 = vpow.pop %v923
    %v925 = vadd.f32 %v918, 1.0
    %v926 = vadd.f32 %v920, 1.0
    %v927 = vadd.f32 %v922, 1.0
    %v928 = vadd.f32 %v924, 1.0
    %v929 = vrcp.pop %v925
    %v930 = vmul.f32 1.0, %v929
    %v931 = vrcp.pop %v926
    %v932 = vmul.f32 1.0, %v931
    %v933 = vrcp.pop %v927
    %v934 = vmul.f32 1.0, %v933
    %v935 = vrcp.pop %v928
    %v936 = vmul.f32 1.0, %v935
    %v937 = vtanh.pop %v909
    %v938 = vtanh.pop %v910
    %v939 = vtanh.pop %v911
    %v940 = vtanh.pop %v912
    %v941 = vmul.f32 %v930, %v773
    %v942 = vmul.f32 %v932, %v774
    %v943 = vmul.f32 %v934, %v775
    %v944 = vmul.f32 %v936, %v776
    %949 = vrot.lane.b32.xlu0 %v937, 64
    %v950 = vpop.permute.xlu0 %949
    %951 = vrot.lane.b32.xlu0 %v938, 64
    %v952 = vpop.permute.xlu0 %951
    %953 = vrot.lane.b32.xlu0 %v939, 64
    %v954 = vpop.permute.xlu0 %953
    %955 = vrot.lane.b32.xlu0 %v940, 64
    %v956 = vpop.permute.xlu0 %955
    %v961 = vmul.f32 %v930, %v950
    %v962 = vmul.f32 %v932, %v952
    %v963 = vmul.f32 %v934, %v954
    %v964 = vmul.f32 %v936, %v956
    %969 = vrot.lane.b32.xlu0 %v961, 32
    %v970 = vpop.permute.xlu0 %969
    %971 = vrot.lane.b32.xlu0 %v962, 32
    %v972 = vpop.permute.xlu0 %971
    %973 = vrot.lane.b32.xlu0 %v963, 32
    %v974 = vpop.permute.xlu0 %973
    %975 = vrot.lane.b32.xlu0 %v964, 32
    %v976 = vpop.permute.xlu0 %975
    %v981 = vadd.f32 %v941, %v970
    %v982 = vadd.f32 %v942, %v972
    %v983 = vadd.f32 %v943, %v974
    %v984 = vadd.f32 %v944, %v976
    %v985 = vtanh.pop %v981
    %v986 = vtanh.pop %v982
    %v987 = vtanh.pop %v983
    %v988 = vtanh.pop %v984
    %993 = vrot.lane.b32.xlu0 %v985, 64
    %v994 = vpop.permute.xlu0 %993
    %995 = vrot.lane.b32.xlu0 %v986, 64
    %v996 = vpop.permute.xlu0 %995
    %997 = vrot.lane.b32.xlu0 %v987, 64
    %v998 = vpop.permute.xlu0 %997
    %999 = vrot.lane.b32.xlu0 %v988, 64
    %v1000 = vpop.permute.xlu0 %999
    %v1005 = vmul.f32 %v930, %v994
    %v1006 = vmul.f32 %v932, %v996
    %v1007 = vmul.f32 %v934, %v998
    %v1008 = vmul.f32 %v936, %v1000
    %1013 = vrot.lane.b32.xlu0 %v1005, 32
    %v1014 = vpop.permute.xlu0 %1013
    %1015 = vrot.lane.b32.xlu0 %v1006, 32
    %v1016 = vpop.permute.xlu0 %1015
    %1017 = vrot.lane.b32.xlu0 %v1007, 32
    %v1018 = vpop.permute.xlu0 %1017
    %1019 = vrot.lane.b32.xlu0 %v1008, 32
    %v1020 = vpop.permute.xlu0 %1019
    %1025 = vst.msk [vmem:[#allocation3 + $0x3] sm:$0x1] %vm397, %v1014
    %1026 = vst.msk [vmem:[#allocation3 + $0xb] sm:$0x1] %vm397, %v1016
    %1027 = vst.msk [vmem:[#allocation3 + $0x13] sm:$0x1] %vm397, %v1018
    %1028 = vst.msk [vmem:[#allocation3 + $0x1b] sm:$0x1] %vm397, %v1020
    %v1029 = vrot.slane %v1006, 7
    %v1030 = vsel %vm403, %v1029, %v1005
    %v1031 = vrot.slane %v1007, 6
    %v1032 = vsel %vm406, %v1031, %v1030
    %v1033 = vrot.slane %v1008, 5
    %v1034 = vsel %vm409, %v1033, %v1032
    %1035 = vrot.lane.b32.xlu0 %v1034, 32
    %v1036 = vpop.permute.xlu0 %1035
    %v1037 = vsel %vm199, %v1036, 0
    %1039 = vmatprep.subr.mxu0 0.0
    %1040 = vmatpush1.msra.mxu0 0.0
    %1041 = vmatprep.subr.mxu0 0.0
    %1042 = vmatpush1.msra.mxu0 0.0
    %1043 = vmatprep.subr.mxu0 0.0
    %1044 = vmatpush1.msra.mxu0 0.0
    %1045 = vmatprep.subr.mxu0 0.0
    %1046 = vmatpush1.msra.mxu0 0.0
    %1047 = vmatprep.subr.mxu0 0.0
    %1048 = vmatpush1.msra.mxu0 0.0
    %1049 = vmatprep.subr.mxu0 0.0
    %1050 = vmatpush1.msra.mxu0 0.0
    %1051 = vmatprep.subr.mxu0 0.0
    %1052 = vmatpush1.msra.mxu0 0.0
    %1053 = vmatprep.subr.mxu0 0.0
    %1054 = vmatpush1.msra.mxu0 0.0
    %1055 = vmatprep.subr.mxu0 0.0
    %1056 = vmatpush1.msra.mxu0 0.0
    %1057 = vmatprep.subr.mxu0 0.0
    %1058 = vmatpush1.msra.mxu0 0.0
    %1059 = vmatprep.subr.mxu0 0.0
    %1060 = vmatpush1.msra.mxu0 0.0
    %1061 = vmatprep.subr.mxu0 0.0
    %1062 = vmatpush1.msra.mxu0 0.0
    %1063 = vmatprep.subr.mxu0 0.0
    %1064 = vmatpush1.msra.mxu0 %v166
    %1065 = vmatprep.subr.mxu0 0.0
    %1066 = vmatpush1.msra.mxu0 %v165
    %1067 = vmatprep.subr.mxu0 0.0
    %1068 = vmatpush1.msra.mxu0 %v164
    %1069 = vmatprep.subr.mxu0 0.0
    %1070 = vmatpush1.msra.mxu0 %v163
    %1071 = vmatprep.subr.mxu0 0.0
    %1072 = vmatpush2.msra.mxu0 0.0
    %1073 = vmatprep.subr.mxu0 0.0
    %1074 = vmatpush2.msra.mxu0 0.0
    %1075 = vmatprep.subr.mxu0 0.0
    %1076 = vmatpush2.msra.mxu0 0.0
    %1077 = vmatprep.subr.mxu0 0.0
    %1078 = vmatpush2.msra.mxu0 0.0
    %1079 = vmatprep.subr.mxu0 0.0
    %1080 = vmatpush2.msra.mxu0 0.0
    %1081 = vmatprep.subr.mxu0 0.0
    %1082 = vmatpush2.msra.mxu0 0.0
    %1083 = vmatprep.subr.mxu0 0.0
    %1084 = vmatpush2.msra.mxu0 0.0
    %1085 = vmatprep.subr.mxu0 0.0
    %1086 = vmatpush2.msra.mxu0 0.0
    %1087 = vmatprep.subr.mxu0 0.0
    %1088 = vmatpush2.msra.mxu0 0.0
    %1089 = vmatprep.subr.mxu0 0.0
    %1090 = vmatpush2.msra.mxu0 0.0
    %1091 = vmatprep.subr.mxu0 0.0
    %1092 = vmatpush2.msra.mxu0 0.0
    %1093 = vmatprep.subr.mxu0 0.0
    %1094 = vmatpush2.msra.mxu0 0.0
    %1095 = vmatprep.subr.mxu0 0.0
    %1096 = vmatpush2.msra.mxu0 0.0
    %1097 = vmatprep.subr.mxu0 0.0
    %1098 = vmatpush2.msra.mxu0 0.0
    %1099 = vmatprep.subr.mxu0 0.0
    %1100 = vmatpush2.msra.mxu0 0.0
    %1101 = vmatprep.subr.mxu0 0.0
    %1102 = vmatpush2.msra.mxu0 0.0
    %1103 = vmatprep.mubr.f32.mxu0 0.0
    %1104 = vmatmul.mubr.f32.gmra.mxu0 %v1037
    %v1105 = vpop.f32.mrf.mxu0
    %v1106 = vadd.f32 0.0, %v1105
    %v1107 = vpop.f32.mrf.mxu0
    %1108 = vdwg.mxu0
    %v1110 = vrot.slane %v1106, 1
    %v1111 = vrot.slane %v1106, 2
    %v1112 = vrot.slane %v1106, 3
    %v1117 = vadd.f32 %v183, %v1106
    %v1118 = vadd.f32 %v184, %v1110
    %v1119 = vadd.f32 %v185, %v1111
    %v1120 = vadd.f32 %v186, %v1112
    %v1121 = vxor.u32 %v1117, 2147483648
    %v1122 = vxor.u32 %v1118, 2147483648
    %v1123 = vxor.u32 %v1119, 2147483648
    %v1124 = vxor.u32 %v1120, 2147483648
    %v1125 = vmul.f32 %v1121, 1.442695
    %v1126 = vpow.pop %v1125
    %v1127 = vmul.f32 %v1122, 1.442695
    %v1128 = vpow.pop %v1127
    %v1129 = vmul.f32 %v1123, 1.442695
    %v1130 = vpow.pop %v1129
    %v1131 = vmul.f32 %v1124, 1.442695
    %v1132 = vpow.pop %v1131
    %v1133 = vadd.f32 %v1126, 1.0
    %v1134 = vadd.f32 %v1128, 1.0
    %v1135 = vadd.f32 %v1130, 1.0
    %v1136 = vadd.f32 %v1132, 1.0
    %v1137 = vrcp.pop %v1133
    %v1138 = vmul.f32 1.0, %v1137
    %v1139 = vrcp.pop %v1134
    %v1140 = vmul.f32 1.0, %v1139
    %v1141 = vrcp.pop %v1135
    %v1142 = vmul.f32 1.0, %v1141
    %v1143 = vrcp.pop %v1136
    %v1144 = vmul.f32 1.0, %v1143
    %v1145 = vtanh.pop %v1117
    %v1146 = vtanh.pop %v1118
    %v1147 = vtanh.pop %v1119
    %v1148 = vtanh.pop %v1120
    %v1149 = vmul.f32 %v1138, %v981
    %v1150 = vmul.f32 %v1140, %v982
    %v1151 = vmul.f32 %v1142, %v983
    %v1152 = vmul.f32 %v1144, %v984
    %1157 = vrot.lane.b32.xlu0 %v1145, 64
    %v1158 = vpop.permute.xlu0 %1157
    %1159 = vrot.lane.b32.xlu0 %v1146, 64
    %v1160 = vpop.permute.xlu0 %1159
    %1161 = vrot.lane.b32.xlu0 %v1147, 64
    %v1162 = vpop.permute.xlu0 %1161
    %1163 = vrot.lane.b32.xlu0 %v1148, 64
    %v1164 = vpop.permute.xlu0 %1163
    %v1169 = vmul.f32 %v1138, %v1158
    %v1170 = vmul.f32 %v1140, %v1160
    %v1171 = vmul.f32 %v1142, %v1162
    %v1172 = vmul.f32 %v1144, %v1164
    %1177 = vrot.lane.b32.xlu0 %v1169, 32
    %v1178 = vpop.permute.xlu0 %1177
    %1179 = vrot.lane.b32.xlu0 %v1170, 32
    %v1180 = vpop.permute.xlu0 %1179
    %1181 = vrot.lane.b32.xlu0 %v1171, 32
    %v1182 = vpop.permute.xlu0 %1181
    %1183 = vrot.lane.b32.xlu0 %v1172, 32
    %v1184 = vpop.permute.xlu0 %1183
    %v1189 = vadd.f32 %v1149, %v1178
    %v1190 = vadd.f32 %v1150, %v1180
    %v1191 = vadd.f32 %v1151, %v1182
    %v1192 = vadd.f32 %v1152, %v1184
    %v1193 = vtanh.pop %v1189
    %v1194 = vtanh.pop %v1190
    %v1195 = vtanh.pop %v1191
    %v1196 = vtanh.pop %v1192
    %1201 = vrot.lane.b32.xlu0 %v1193, 64
    %v1202 = vpop.permute.xlu0 %1201
    %1203 = vrot.lane.b32.xlu0 %v1194, 64
    %v1204 = vpop.permute.xlu0 %1203
    %1205 = vrot.lane.b32.xlu0 %v1195, 64
    %v1206 = vpop.permute.xlu0 %1205
    %1207 = vrot.lane.b32.xlu0 %v1196, 64
    %v1208 = vpop.permute.xlu0 %1207
    %v1213 = vmul.f32 %v1138, %v1202
    %v1214 = vmul.f32 %v1140, %v1204
    %v1215 = vmul.f32 %v1142, %v1206
    %v1216 = vmul.f32 %v1144, %v1208
    %1221 = vrot.lane.b32.xlu0 %v1213, 32
    %v1222 = vpop.permute.xlu0 %1221
    %1223 = vrot.lane.b32.xlu0 %v1214, 32
    %v1224 = vpop.permute.xlu0 %1223
    %1225 = vrot.lane.b32.xlu0 %v1215, 32
    %v1226 = vpop.permute.xlu0 %1225
    %1227 = vrot.lane.b32.xlu0 %v1216, 32
    %v1228 = vpop.permute.xlu0 %1227
    %1233 = vst.msk [vmem:[#allocation3 + $0x4] sm:$0x1] %vm397, %v1222
    %1234 = vst.msk [vmem:[#allocation3 + $0xc] sm:$0x1] %vm397, %v1224
    %1235 = vst.msk [vmem:[#allocation3 + $0x14] sm:$0x1] %vm397, %v1226
    %1236 = vst.msk [vmem:[#allocation3 + $0x1c] sm:$0x1] %vm397, %v1228
    %v1237 = vrot.slane %v1214, 7
    %v1238 = vsel %vm403, %v1237, %v1213
    %v1239 = vrot.slane %v1215, 6
    %v1240 = vsel %vm406, %v1239, %v1238
    %v1241 = vrot.slane %v1216, 5
    %v1242 = vsel %vm409, %v1241, %v1240
    %1243 = vrot.lane.b32.xlu0 %v1242, 32
    %v1244 = vpop.permute.xlu0 %1243
    %v1245 = vsel %vm199, %v1244, 0
    %1247 = vmatprep.subr.mxu0 0.0
    %1248 = vmatpush1.msra.mxu0 0.0
    %1249 = vmatprep.subr.mxu0 0.0
    %1250 = vmatpush1.msra.mxu0 0.0
    %1251 = vmatprep.subr.mxu0 0.0
    %1252 = vmatpush1.msra.mxu0 0.0
    %1253 = vmatprep.subr.mxu0 0.0
    %1254 = vmatpush1.msra.mxu0 0.0
    %1255 = vmatprep.subr.mxu0 0.0
    %1256 = vmatpush1.msra.mxu0 0.0
    %1257 = vmatprep.subr.mxu0 0.0
    %1258 = vmatpush1.msra.mxu0 0.0
    %1259 = vmatprep.subr.mxu0 0.0
    %1260 = vmatpush1.msra.mxu0 0.0
    %1261 = vmatprep.subr.mxu0 0.0
    %1262 = vmatpush1.msra.mxu0 0.0
    %1263 = vmatprep.subr.mxu0 0.0
    %1264 = vmatpush1.msra.mxu0 0.0
    %1265 = vmatprep.subr.mxu0 0.0
    %1266 = vmatpush1.msra.mxu0 0.0
    %1267 = vmatprep.subr.mxu0 0.0
    %1268 = vmatpush1.msra.mxu0 0.0
    %1269 = vmatprep.subr.mxu0 0.0
    %1270 = vmatpush1.msra.mxu0 0.0
    %1271 = vmatprep.subr.mxu0 0.0
    %1272 = vmatpush1.msra.mxu0 %v166
    %1273 = vmatprep.subr.mxu0 0.0
    %1274 = vmatpush1.msra.mxu0 %v165
    %1275 = vmatprep.subr.mxu0 0.0
    %1276 = vmatpush1.msra.mxu0 %v164
    %1277 = vmatprep.subr.mxu0 0.0
    %1278 = vmatpush1.msra.mxu0 %v163
    %1279 = vmatprep.subr.mxu0 0.0
    %1280 = vmatpush2.msra.mxu0 0.0
    %1281 = vmatprep.subr.mxu0 0.0
    %1282 = vmatpush2.msra.mxu0 0.0
    %1283 = vmatprep.subr.mxu0 0.0
    %1284 = vmatpush2.msra.mxu0 0.0
    %1285 = vmatprep.subr.mxu0 0.0
    %1286 = vmatpush2.msra.mxu0 0.0
    %1287 = vmatprep.subr.mxu0 0.0
    %1288 = vmatpush2.msra.mxu0 0.0
    %1289 = vmatprep.subr.mxu0 0.0
    %1290 = vmatpush2.msra.mxu0 0.0
    %1291 = vmatprep.subr.mxu0 0.0
    %1292 = vmatpush2.msra.mxu0 0.0
    %1293 = vmatprep.subr.mxu0 0.0
    %1294 = vmatpush2.msra.mxu0 0.0
    %1295 = vmatprep.subr.mxu0 0.0
    %1296 = vmatpush2.msra.mxu0 0.0
    %1297 = vmatprep.subr.mxu0 0.0
    %1298 = vmatpush2.msra.mxu0 0.0
    %1299 = vmatprep.subr.mxu0 0.0
    %1300 = vmatpush2.msra.mxu0 0.0
    %1301 = vmatprep.subr.mxu0 0.0
    %1302 = vmatpush2.msra.mxu0 0.0
    %1303 = vmatprep.subr.mxu0 0.0
    %1304 = vmatpush2.msra.mxu0 0.0
    %1305 = vmatprep.subr.mxu0 0.0
    %1306 = vmatpush2.msra.mxu0 0.0
    %1307 = vmatprep.subr.mxu0 0.0
    %1308 = vmatpush2.msra.mxu0 0.0
    %1309 = vmatprep.subr.mxu0 0.0
    %1310 = vmatpush2.msra.mxu0 0.0
    %1311 = vmatprep.mubr.f32.mxu0 0.0
    %1312 = vmatmul.mubr.f32.gmra.mxu0 %v1245
    %v1313 = vpop.f32.mrf.mxu0
    %v1314 = vadd.f32 0.0, %v1313
    %v1315 = vpop.f32.mrf.mxu0
    %1316 = vdwg.mxu0
    %v1318 = vrot.slane %v1314, 1
    %v1319 = vrot.slane %v1314, 2
    %v1320 = vrot.slane %v1314, 3
    %v1325 = vadd.f32 %v187, %v1314
    %v1326 = vadd.f32 %v188, %v1318
    %v1327 = vadd.f32 %v189, %v1319
    %v1328 = vadd.f32 %v190, %v1320
    %v1329 = vxor.u32 %v1325, 2147483648
    %v1330 = vxor.u32 %v1326, 2147483648
    %v1331 = vxor.u32 %v1327, 2147483648
    %v1332 = vxor.u32 %v1328, 2147483648
    %v1333 = vmul.f32 %v1329, 1.442695
    %v1334 = vpow.pop %v1333
    %v1335 = vmul.f32 %v1330, 1.442695
    %v1336 = vpow.pop %v1335
    %v1337 = vmul.f32 %v1331, 1.442695
    %v1338 = vpow.pop %v1337
    %v1339 = vmul.f32 %v1332, 1.442695
    %v1340 = vpow.pop %v1339
    %v1341 = vadd.f32 %v1334, 1.0
    %v1342 = vadd.f32 %v1336, 1.0
    %v1343 = vadd.f32 %v1338, 1.0
    %v1344 = vadd.f32 %v1340, 1.0
    %v1345 = vrcp.pop %v1341
    %v1346 = vmul.f32 1.0, %v1345
    %v1347 = vrcp.pop %v1342
    %v1348 = vmul.f32 1.0, %v1347
    %v1349 = vrcp.pop %v1343
    %v1350 = vmul.f32 1.0, %v1349
    %v1351 = vrcp.pop %v1344
    %v1352 = vmul.f32 1.0, %v1351
    %v1353 = vtanh.pop %v1325
    %v1354 = vtanh.pop %v1326
    %v1355 = vtanh.pop %v1327
    %v1356 = vtanh.pop %v1328
    %v1357 = vmul.f32 %v1346, %v1189
    %v1358 = vmul.f32 %v1348, %v1190
    %v1359 = vmul.f32 %v1350, %v1191
    %v1360 = vmul.f32 %v1352, %v1192
    %1365 = vrot.lane.b32.xlu0 %v1353, 64
    %v1366 = vpop.permute.xlu0 %1365
    %1367 = vrot.lane.b32.xlu0 %v1354, 64
    %v1368 = vpop.permute.xlu0 %1367
    %1369 = vrot.lane.b32.xlu0 %v1355, 64
    %v1370 = vpop.permute.xlu0 %1369
    %1371 = vrot.lane.b32.xlu0 %v1356, 64
    %v1372 = vpop.permute.xlu0 %1371
    %v1377 = vmul.f32 %v1346, %v1366
    %v1378 = vmul.f32 %v1348, %v1368
    %v1379 = vmul.f32 %v1350, %v1370
    %v1380 = vmul.f32 %v1352, %v1372
    %1385 = vrot.lane.b32.xlu0 %v1377, 32
    %v1386 = vpop.permute.xlu0 %1385
    %1387 = vrot.lane.b32.xlu0 %v1378, 32
    %v1388 = vpop.permute.xlu0 %1387
    %1389 = vrot.lane.b32.xlu0 %v1379, 32
    %v1390 = vpop.permute.xlu0 %1389
    %1391 = vrot.lane.b32.xlu0 %v1380, 32
    %v1392 = vpop.permute.xlu0 %1391
    %v1397 = vadd.f32 %v1357, %v1386
    %v1398 = vadd.f32 %v1358, %v1388
    %v1399 = vadd.f32 %v1359, %v1390
    %v1400 = vadd.f32 %v1360, %v1392
    %v1401 = vtanh.pop %v1397
    %v1402 = vtanh.pop %v1398
    %v1403 = vtanh.pop %v1399
    %v1404 = vtanh.pop %v1400
    %1409 = vrot.lane.b32.xlu0 %v1401, 64
    %v1410 = vpop.permute.xlu0 %1409
    %1411 = vrot.lane.b32.xlu0 %v1402, 64
    %v1412 = vpop.permute.xlu0 %1411
    %1413 = vrot.lane.b32.xlu0 %v1403, 64
    %v1414 = vpop.permute.xlu0 %1413
    %1415 = vrot.lane.b32.xlu0 %v1404, 64
    %v1416 = vpop.permute.xlu0 %1415
    %v1421 = vmul.f32 %v1346, %v1410
    %v1422 = vmul.f32 %v1348, %v1412
    %v1423 = vmul.f32 %v1350, %v1414
    %v1424 = vmul.f32 %v1352, %v1416
    %1429 = vrot.lane.b32.xlu0 %v1421, 32
    %v1430 = vpop.permute.xlu0 %1429
    %1431 = vrot.lane.b32.xlu0 %v1422, 32
    %v1432 = vpop.permute.xlu0 %1431
    %1433 = vrot.lane.b32.xlu0 %v1423, 32
    %v1434 = vpop.permute.xlu0 %1433
    %1435 = vrot.lane.b32.xlu0 %v1424, 32
    %v1436 = vpop.permute.xlu0 %1435
    %1441 = vst.msk [vmem:[#allocation3 + $0x5] sm:$0x1] %vm397, %v1430
    %1442 = vst.msk [vmem:[#allocation3 + $0xd] sm:$0x1] %vm397, %v1432
    %1443 = vst.msk [vmem:[#allocation3 + $0x15] sm:$0x1] %vm397, %v1434
    %1444 = vst.msk [vmem:[#allocation3 + $0x1d] sm:$0x1] %vm397, %v1436
    %v1445 = vrot.slane %v1422, 7
    %v1446 = vsel %vm403, %v1445, %v1421
    %v1447 = vrot.slane %v1423, 6
    %v1448 = vsel %vm406, %v1447, %v1446
    %v1449 = vrot.slane %v1424, 5
    %v1450 = vsel %vm409, %v1449, %v1448
    %1451 = vrot.lane.b32.xlu0 %v1450, 32
    %v1452 = vpop.permute.xlu0 %1451
    %v1453 = vsel %vm199, %v1452, 0
    %1455 = vmatprep.subr.mxu0 0.0
    %1456 = vmatpush1.msra.mxu0 0.0
    %1457 = vmatprep.subr.mxu0 0.0
    %1458 = vmatpush1.msra.mxu0 0.0
    %1459 = vmatprep.subr.mxu0 0.0
    %1460 = vmatpush1.msra.mxu0 0.0
    %1461 = vmatprep.subr.mxu0 0.0
    %1462 = vmatpush1.msra.mxu0 0.0
    %1463 = vmatprep.subr.mxu0 0.0
    %1464 = vmatpush1.msra.mxu0 0.0
    %1465 = vmatprep.subr.mxu0 0.0
    %1466 = vmatpush1.msra.mxu0 0.0
    %1467 = vmatprep.subr.mxu0 0.0
    %1468 = vmatpush1.msra.mxu0 0.0
    %1469 = vmatprep.subr.mxu0 0.0
    %1470 = vmatpush1.msra.mxu0 0.0
    %1471 = vmatprep.subr.mxu0 0.0
    %1472 = vmatpush1.msra.mxu0 0.0
    %1473 = vmatprep.subr.mxu0 0.0
    %1474 = vmatpush1.msra.mxu0 0.0
    %1475 = vmatprep.subr.mxu0 0.0
    %1476 = vmatpush1.msra.mxu0 0.0
    %1477 = vmatprep.subr.mxu0 0.0
    %1478 = vmatpush1.msra.mxu0 0.0
    %1479 = vmatprep.subr.mxu0 0.0
    %1480 = vmatpush1.msra.mxu0 %v166
    %1481 = vmatprep.subr.mxu0 0.0
    %1482 = vmatpush1.msra.mxu0 %v165
    %1483 = vmatprep.subr.mxu0 0.0
    %1484 = vmatpush1.msra.mxu0 %v164
    %1485 = vmatprep.subr.mxu0 0.0
    %1486 = vmatpush1.msra.mxu0 %v163
    %1487 = vmatprep.subr.mxu0 0.0
    %1488 = vmatpush2.msra.mxu0 0.0
    %1489 = vmatprep.subr.mxu0 0.0
    %1490 = vmatpush2.msra.mxu0 0.0
    %1491 = vmatprep.subr.mxu0 0.0
    %1492 = vmatpush2.msra.mxu0 0.0
    %1493 = vmatprep.subr.mxu0 0.0
    %1494 = vmatpush2.msra.mxu0 0.0
    %1495 = vmatprep.subr.mxu0 0.0
    %1496 = vmatpush2.msra.mxu0 0.0
    %1497 = vmatprep.subr.mxu0 0.0
    %1498 = vmatpush2.msra.mxu0 0.0
    %1499 = vmatprep.subr.mxu0 0.0
    %1500 = vmatpush2.msra.mxu0 0.0
    %1501 = vmatprep.subr.mxu0 0.0
    %1502 = vmatpush2.msra.mxu0 0.0
    %1503 = vmatprep.subr.mxu0 0.0
    %1504 = vmatpush2.msra.mxu0 0.0
    %1505 = vmatprep.subr.mxu0 0.0
    %1506 = vmatpush2.msra.mxu0 0.0
    %1507 = vmatprep.subr.mxu0 0.0
    %1508 = vmatpush2.msra.mxu0 0.0
    %1509 = vmatprep.subr.mxu0 0.0
    %1510 = vmatpush2.msra.mxu0 0.0
    %1511 = vmatprep.subr.mxu0 0.0
    %1512 = vmatpush2.msra.mxu0 0.0
    %1513 = vmatprep.subr.mxu0 0.0
    %1514 = vmatpush2.msra.mxu0 0.0
    %1515 = vmatprep.subr.mxu0 0.0
    %1516 = vmatpush2.msra.mxu0 0.0
    %1517 = vmatprep.subr.mxu0 0.0
    %1518 = vmatpush2.msra.mxu0 0.0
    %1519 = vmatprep.mubr.f32.mxu0 0.0
    %1520 = vmatmul.mubr.f32.gmra.mxu0 %v1453
    %v1521 = vpop.f32.mrf.mxu0
    %v1522 = vadd.f32 0.0, %v1521
    %v1523 = vpop.f32.mrf.mxu0
    %1524 = vdwg.mxu0
    %v1526 = vrot.slane %v1522, 1
    %v1527 = vrot.slane %v1522, 2
    %v1528 = vrot.slane %v1522, 3
    %v1533 = vadd.f32 %v191, %v1522
    %v1534 = vadd.f32 %v192, %v1526
    %v1535 = vadd.f32 %v193, %v1527
    %v1536 = vadd.f32 %v194, %v1528
    %v1537 = vxor.u32 %v1533, 2147483648
    %v1538 = vxor.u32 %v1534, 2147483648
    %v1539 = vxor.u32 %v1535, 2147483648
    %v1540 = vxor.u32 %v1536, 2147483648
    %v1541 = vmul.f32 %v1537, 1.442695
    %v1542 = vpow.pop %v1541
    %v1543 = vmul.f32 %v1538, 1.442695
    %v1544 = vpow.pop %v1543
    %v1545 = vmul.f32 %v1539, 1.442695
    %v1546 = vpow.pop %v1545
    %v1547 = vmul.f32 %v1540, 1.442695
    %v1548 = vpow.pop %v1547
    %v1549 = vadd.f32 %v1542, 1.0
    %v1550 = vadd.f32 %v1544, 1.0
    %v1551 = vadd.f32 %v1546, 1.0
    %v1552 = vadd.f32 %v1548, 1.0
    %v1553 = vrcp.pop %v1549
    %v1554 = vmul.f32 1.0, %v1553
    %v1555 = vrcp.pop %v1550
    %v1556 = vmul.f32 1.0, %v1555
    %v1557 = vrcp.pop %v1551
    %v1558 = vmul.f32 1.0, %v1557
    %v1559 = vrcp.pop %v1552
    %v1560 = vmul.f32 1.0, %v1559
    %v1561 = vtanh.pop %v1533
    %v1562 = vtanh.pop %v1534
    %v1563 = vtanh.pop %v1535
    %v1564 = vtanh.pop %v1536
    %v1565 = vmul.f32 %v1554, %v1397
    %v1566 = vmul.f32 %v1556, %v1398
    %v1567 = vmul.f32 %v1558, %v1399
    %v1568 = vmul.f32 %v1560, %v1400
    %1573 = vrot.lane.b32.xlu0 %v1561, 64
    %v1574 = vpop.permute.xlu0 %1573
    %1575 = vrot.lane.b32.xlu0 %v1562, 64
    %v1576 = vpop.permute.xlu0 %1575
    %1577 = vrot.lane.b32.xlu0 %v1563, 64
    %v1578 = vpop.permute.xlu0 %1577
    %1579 = vrot.lane.b32.xlu0 %v1564, 64
    %v1580 = vpop.permute.xlu0 %1579
    %v1585 = vmul.f32 %v1554, %v1574
    %v1586 = vmul.f32 %v1556, %v1576
    %v1587 = vmul.f32 %v1558, %v1578
    %v1588 = vmul.f32 %v1560, %v1580
    %1593 = vrot.lane.b32.xlu0 %v1585, 32
    %v1594 = vpop.permute.xlu0 %1593
    %1595 = vrot.lane.b32.xlu0 %v1586, 32
    %v1596 = vpop.permute.xlu0 %1595
    %1597 = vrot.lane.b32.xlu0 %v1587, 32
    %v1598 = vpop.permute.xlu0 %1597
    %1599 = vrot.lane.b32.xlu0 %v1588, 32
    %v1600 = vpop.permute.xlu0 %1599
    %v1605 = vadd.f32 %v1565, %v1594
    %v1606 = vadd.f32 %v1566, %v1596
    %v1607 = vadd.f32 %v1567, %v1598
    %v1608 = vadd.f32 %v1568, %v1600
    %v1609 = vtanh.pop %v1605
    %v1610 = vtanh.pop %v1606
    %v1611 = vtanh.pop %v1607
    %v1612 = vtanh.pop %v1608
    %1617 = vrot.lane.b32.xlu0 %v1609, 64
    %v1618 = vpop.permute.xlu0 %1617
    %1619 = vrot.lane.b32.xlu0 %v1610, 64
    %v1620 = vpop.permute.xlu0 %1619
    %1621 = vrot.lane.b32.xlu0 %v1611, 64
    %v1622 = vpop.permute.xlu0 %1621
    %1623 = vrot.lane.b32.xlu0 %v1612, 64
    %v1624 = vpop.permute.xlu0 %1623
    %v1629 = vmul.f32 %v1554, %v1618
    %v1630 = vmul.f32 %v1556, %v1620
    %v1631 = vmul.f32 %v1558, %v1622
    %v1632 = vmul.f32 %v1560, %v1624
    %1637 = vrot.lane.b32.xlu0 %v1629, 32
    %v1638 = vpop.permute.xlu0 %1637
    %1639 = vrot.lane.b32.xlu0 %v1630, 32
    %v1640 = vpop.permute.xlu0 %1639
    %1641 = vrot.lane.b32.xlu0 %v1631, 32
    %v1642 = vpop.permute.xlu0 %1641
    %1643 = vrot.lane.b32.xlu0 %v1632, 32
    %v1644 = vpop.permute.xlu0 %1643
    %1649 = vst.msk [vmem:[#allocation3 + $0x6] sm:$0x1] %vm397, %v1638
    %1650 = vst.msk [vmem:[#allocation3 + $0xe] sm:$0x1] %vm397, %v1640
    %1651 = vst.msk [vmem:[#allocation3 + $0x16] sm:$0x1] %vm397, %v1642
    %1652 = vst.msk [vmem:[#allocation3 + $0x1e] sm:$0x1] %vm397, %v1644
    %v1653 = vrot.slane %v1630, 7
    %v1654 = vsel %vm403, %v1653, %v1629
    %v1655 = vrot.slane %v1631, 6
    %v1656 = vsel %vm406, %v1655, %v1654
    %v1657 = vrot.slane %v1632, 5
    %v1658 = vsel %vm409, %v1657, %v1656
    %1659 = vrot.lane.b32.xlu0 %v1658, 32
    %v1660 = vpop.permute.xlu0 %1659
    %v1661 = vsel %vm199, %v1660, 0
    %1663 = vmatprep.subr.mxu0 0.0
    %1664 = vmatpush1.msra.mxu0 0.0
    %1665 = vmatprep.subr.mxu0 0.0
    %1666 = vmatpush1.msra.mxu0 0.0
    %1667 = vmatprep.subr.mxu0 0.0
    %1668 = vmatpush1.msra.mxu0 0.0
    %1669 = vmatprep.subr.mxu0 0.0
    %1670 = vmatpush1.msra.mxu0 0.0
    %1671 = vmatprep.subr.mxu0 0.0
    %1672 = vmatpush1.msra.mxu0 0.0
    %1673 = vmatprep.subr.mxu0 0.0
    %1674 = vmatpush1.msra.mxu0 0.0
    %1675 = vmatprep.subr.mxu0 0.0
    %1676 = vmatpush1.msra.mxu0 0.0
    %1677 = vmatprep.subr.mxu0 0.0
    %1678 = vmatpush1.msra.mxu0 0.0
    %1679 = vmatprep.subr.mxu0 0.0
    %1680 = vmatpush1.msra.mxu0 0.0
    %1681 = vmatprep.subr.mxu0 0.0
    %1682 = vmatpush1.msra.mxu0 0.0
    %1683 = vmatprep.subr.mxu0 0.0
    %1684 = vmatpush1.msra.mxu0 0.0
    %1685 = vmatprep.subr.mxu0 0.0
    %1686 = vmatpush1.msra.mxu0 0.0
    %1687 = vmatprep.subr.mxu0 0.0
    %1688 = vmatpush1.msra.mxu0 %v166
    %1689 = vmatprep.subr.mxu0 0.0
    %1690 = vmatpush1.msra.mxu0 %v165
    %1691 = vmatprep.subr.mxu0 0.0
    %1692 = vmatpush1.msra.mxu0 %v164
    %1693 = vmatprep.subr.mxu0 0.0
    %1694 = vmatpush1.msra.mxu0 %v163
    %1695 = vmatprep.subr.mxu0 0.0
    %1696 = vmatpush2.msra.mxu0 0.0
    %1697 = vmatprep.subr.mxu0 0.0
    %1698 = vmatpush2.msra.mxu0 0.0
    %1699 = vmatprep.subr.mxu0 0.0
    %1700 = vmatpush2.msra.mxu0 0.0
    %1701 = vmatprep.subr.mxu0 0.0
    %1702 = vmatpush2.msra.mxu0 0.0
    %1703 = vmatprep.subr.mxu0 0.0
    %1704 = vmatpush2.msra.mxu0 0.0
    %1705 = vmatprep.subr.mxu0 0.0
    %1706 = vmatpush2.msra.mxu0 0.0
    %1707 = vmatprep.subr.mxu0 0.0
    %1708 = vmatpush2.msra.mxu0 0.0
    %1709 = vmatprep.subr.mxu0 0.0
    %1710 = vmatpush2.msra.mxu0 0.0
    %1711 = vmatprep.subr.mxu0 0.0
    %1712 = vmatpush2.msra.mxu0 0.0
    %1713 = vmatprep.subr.mxu0 0.0
    %1714 = vmatpush2.msra.mxu0 0.0
    %1715 = vmatprep.subr.mxu0 0.0
    %1716 = vmatpush2.msra.mxu0 0.0
    %1717 = vmatprep.subr.mxu0 0.0
    %1718 = vmatpush2.msra.mxu0 0.0
    %1719 = vmatprep.subr.mxu0 0.0
    %1720 = vmatpush2.msra.mxu0 0.0
    %1721 = vmatprep.subr.mxu0 0.0
    %1722 = vmatpush2.msra.mxu0 0.0
    %1723 = vmatprep.subr.mxu0 0.0
    %1724 = vmatpush2.msra.mxu0 0.0
    %1725 = vmatprep.subr.mxu0 0.0
    %1726 = vmatpush2.msra.mxu0 0.0
    %1727 = vmatprep.mubr.f32.mxu0 0.0
    %1728 = vmatmul.mubr.f32.gmra.mxu0 %v1661
    %v1729 = vpop.f32.mrf.mxu0
    %v1730 = vadd.f32 0.0, %v1729
    %v1731 = vpop.f32.mrf.mxu0
    %1732 = vdwg.mxu0
    %v1734 = vrot.slane %v1730, 1
    %v1735 = vrot.slane %v1730, 2
    %v1736 = vrot.slane %v1730, 3
    %v1741 = vadd.f32 %v195, %v1730
    %v1742 = vadd.f32 %v196, %v1734
    %v1743 = vadd.f32 %v197, %v1735
    %v1744 = vadd.f32 %v198, %v1736
    %v1745 = vxor.u32 %v1741, 2147483648
    %v1746 = vxor.u32 %v1742, 2147483648
    %v1747 = vxor.u32 %v1743, 2147483648
    %v1748 = vxor.u32 %v1744, 2147483648
    %v1749 = vmul.f32 %v1745, 1.442695
    %v1750 = vpow.pop %v1749
    %v1751 = vmul.f32 %v1746, 1.442695
    %v1752 = vpow.pop %v1751
    %v1753 = vmul.f32 %v1747, 1.442695
    %v1754 = vpow.pop %v1753
    %v1755 = vmul.f32 %v1748, 1.442695
    %v1756 = vpow.pop %v1755
    %v1757 = vadd.f32 %v1750, 1.0
    %v1758 = vadd.f32 %v1752, 1.0
    %v1759 = vadd.f32 %v1754, 1.0
    %v1760 = vadd.f32 %v1756, 1.0
    %v1761 = vrcp.pop %v1757
    %v1762 = vmul.f32 1.0, %v1761
    %v1763 = vrcp.pop %v1758
    %v1764 = vmul.f32 1.0, %v1763
    %v1765 = vrcp.pop %v1759
    %v1766 = vmul.f32 1.0, %v1765
    %v1767 = vrcp.pop %v1760
    %v1768 = vmul.f32 1.0, %v1767
    %v1769 = vtanh.pop %v1741
    %v1770 = vtanh.pop %v1742
    %v1771 = vtanh.pop %v1743
    %v1772 = vtanh.pop %v1744
    %v1773 = vmul.f32 %v1762, %v1605
    %v1774 = vmul.f32 %v1764, %v1606
    %v1775 = vmul.f32 %v1766, %v1607
    %v1776 = vmul.f32 %v1768, %v1608
    %1781 = vrot.lane.b32.xlu0 %v1769, 64
    %v1782 = vpop.permute.xlu0 %1781
    %1783 = vrot.lane.b32.xlu0 %v1770, 64
    %v1784 = vpop.permute.xlu0 %1783
    %1785 = vrot.lane.b32.xlu0 %v1771, 64
    %v1786 = vpop.permute.xlu0 %1785
    %1787 = vrot.lane.b32.xlu0 %v1772, 64
    %v1788 = vpop.permute.xlu0 %1787
    %v1793 = vmul.f32 %v1762, %v1782
    %v1794 = vmul.f32 %v1764, %v1784
    %v1795 = vmul.f32 %v1766, %v1786
    %v1796 = vmul.f32 %v1768, %v1788
    %1801 = vrot.lane.b32.xlu0 %v1793, 32
    %v1802 = vpop.permute.xlu0 %1801
    %1803 = vrot.lane.b32.xlu0 %v1794, 32
    %v1804 = vpop.permute.xlu0 %1803
    %1805 = vrot.lane.b32.xlu0 %v1795, 32
    %v1806 = vpop.permute.xlu0 %1805
    %1807 = vrot.lane.b32.xlu0 %v1796, 32
    %v1808 = vpop.permute.xlu0 %1807
    %v1813 = vadd.f32 %v1773, %v1802
    %v1814 = vadd.f32 %v1774, %v1804
    %v1815 = vadd.f32 %v1775, %v1806
    %v1816 = vadd.f32 %v1776, %v1808
    %v1817 = vtanh.pop %v1813
    %v1818 = vtanh.pop %v1814
    %v1819 = vtanh.pop %v1815
    %v1820 = vtanh.pop %v1816
    %1825 = vrot.lane.b32.xlu0 %v1817, 64
    %v1826 = vpop.permute.xlu0 %1825
    %1827 = vrot.lane.b32.xlu0 %v1818, 64
    %v1828 = vpop.permute.xlu0 %1827
    %1829 = vrot.lane.b32.xlu0 %v1819, 64
    %v1830 = vpop.permute.xlu0 %1829
    %1831 = vrot.lane.b32.xlu0 %v1820, 64
    %v1832 = vpop.permute.xlu0 %1831
    %v1837 = vmul.f32 %v1762, %v1826
    %v1838 = vmul.f32 %v1764, %v1828
    %v1839 = vmul.f32 %v1766, %v1830
    %v1840 = vmul.f32 %v1768, %v1832
    %1845 = vrot.lane.b32.xlu0 %v1837, 32
    %v1846 = vpop.permute.xlu0 %1845
    %1847 = vrot.lane.b32.xlu0 %v1838, 32
    %v1848 = vpop.permute.xlu0 %1847
    %1849 = vrot.lane.b32.xlu0 %v1839, 32
    %v1850 = vpop.permute.xlu0 %1849
    %1851 = vrot.lane.b32.xlu0 %v1840, 32
    %v1852 = vpop.permute.xlu0 %1851
    %1857 = vst.msk [vmem:[#allocation3 + $0x7] sm:$0x1] %vm397, %v1846
    %1858 = vst.msk [vmem:[#allocation3 + $0xf] sm:$0x1] %vm397, %v1848
    %1859 = vst.msk [vmem:[#allocation3 + $0x17] sm:$0x1] %vm397, %v1850
    %1860 = vst.msk [vmem:[#allocation3 + $0x1f] sm:$0x1] %vm397, %v1852
    %v1861 = vld [vmem:[#allocation3] sm:$0xff]
    %v1862 = vld [vmem:[#allocation3 + $0x8] sm:$0xff]
    %v1863 = vld [vmem:[#allocation3 + $0x10] sm:$0xff]
    %v1864 = vld [vmem:[#allocation3 + $0x18] sm:$0xff]
    %v1865 = vld [vmem:[%s4] sm:$0xff]
    %v1866 = vld [vmem:[%s4 + $0x8] sm:$0xff]
    %v1867 = vld [vmem:[%s4 + $0x10] sm:$0xff]
    %v1868 = vld [vmem:[%s4 + $0x18] sm:$0xff]
    %v1869 = vld [vmem:[%s6] sm:$0x1]
    %v1871 = vlaneseq
    %v1872 = vshrl.u32 %v1871, 7
    %v1873 = vsub.s32 0, %v1872
    %v1874 = vrot.slane %v1869, %v1873
    %v1877 = vsel %vm199, %v1861, 0
    %v1880 = vsel %vm199, %v1862, 0
    %v1883 = vsel %vm199, %v1863, 0
    %v1886 = vsel %vm199, %v1864, 0
    %1888 = vmatprep.subr.mxu0 0.0
    %1889 = vmatpush1.msra.mxu0 0.0
    %1890 = vmatprep.subr.mxu0 0.0
    %1891 = vmatpush1.msra.mxu0 0.0
    %1892 = vmatprep.subr.mxu0 0.0
    %1893 = vmatpush1.msra.mxu0 0.0
    %1894 = vmatprep.subr.mxu0 0.0
    %1895 = vmatpush1.msra.mxu0 0.0
    %1896 = vmatprep.subr.mxu0 0.0
    %1897 = vmatpush1.msra.mxu0 0.0
    %1898 = vmatprep.subr.mxu0 0.0
    %1899 = vmatpush1.msra.mxu0 0.0
    %1900 = vmatprep.subr.mxu0 0.0
    %1901 = vmatpush1.msra.mxu0 0.0
    %1902 = vmatprep.subr.mxu0 0.0
    %1903 = vmatpush1.msra.mxu0 0.0
    %1904 = vmatprep.subr.mxu0 0.0
    %1905 = vmatpush1.msra.mxu0 0.0
    %1906 = vmatprep.subr.mxu0 0.0
    %1907 = vmatpush1.msra.mxu0 0.0
    %1908 = vmatprep.subr.mxu0 0.0
    %1909 = vmatpush1.msra.mxu0 0.0
    %1910 = vmatprep.subr.mxu0 0.0
    %1911 = vmatpush1.msra.mxu0 0.0
    %1912 = vmatprep.subr.mxu0 0.0
    %1913 = vmatpush1.msra.mxu0 %v1868
    %1914 = vmatprep.subr.mxu0 0.0
    %1915 = vmatpush1.msra.mxu0 %v1867
    %1916 = vmatprep.subr.mxu0 0.0
    %1917 = vmatpush1.msra.mxu0 %v1866
    %1918 = vmatprep.subr.mxu0 0.0
    %1919 = vmatpush1.msra.mxu0 %v1865
    %1920 = vmatprep.subr.mxu0 0.0
    %1921 = vmatpush2.msra.mxu0 0.0
    %1922 = vmatprep.subr.mxu0 0.0
    %1923 = vmatpush2.msra.mxu0 0.0
    %1924 = vmatprep.subr.mxu0 0.0
    %1925 = vmatpush2.msra.mxu0 0.0
    %1926 = vmatprep.subr.mxu0 0.0
    %1927 = vmatpush2.msra.mxu0 0.0
    %1928 = vmatprep.subr.mxu0 0.0
    %1929 = vmatpush2.msra.mxu0 0.0
    %1930 = vmatprep.subr.mxu0 0.0
    %1931 = vmatpush2.msra.mxu0 0.0
    %1932 = vmatprep.subr.mxu0 0.0
    %1933 = vmatpush2.msra.mxu0 0.0
    %1934 = vmatprep.subr.mxu0 0.0
    %1935 = vmatpush2.msra.mxu0 0.0
    %1936 = vmatprep.subr.mxu0 0.0
    %1937 = vmatpush2.msra.mxu0 0.0
    %1938 = vmatprep.subr.mxu0 0.0
    %1939 = vmatpush2.msra.mxu0 0.0
    %1940 = vmatprep.subr.mxu0 0.0
    %1941 = vmatpush2.msra.mxu0 0.0
    %1942 = vmatprep.subr.mxu0 0.0
    %1943 = vmatpush2.msra.mxu0 0.0
    %1944 = vmatprep.subr.mxu0 0.0
    %1945 = vmatpush2.msra.mxu0 0.0
    %1946 = vmatprep.subr.mxu0 0.0
    %1947 = vmatpush2.msra.mxu0 0.0
    %1948 = vmatprep.subr.mxu0 0.0
    %1949 = vmatpush2.msra.mxu0 0.0
    %1950 = vmatprep.subr.mxu0 0.0
    %1951 = vmatpush2.msra.mxu0 0.0
    %1952 = vmatprep.mubr.f32.mxu0 0.0
    %1953 = vmatmul.mubr.f32.gmra.mxu0 %v1877
    %v1954 = vpop.f32.mrf.mxu0
    %v1955 = vadd.f32 %v1874, %v1954
    %v1956 = vpop.f32.mrf.mxu0
    %1957 = vmatprep.mubr.f32.mxu0 0.0
    %1958 = vmatmul.mubr.f32.gmra.mxu0 %v1880
    %v1959 = vpop.f32.mrf.mxu0
    %v1960 = vadd.f32 %v1874, %v1959
    %v1961 = vpop.f32.mrf.mxu0
    %1962 = vmatprep.mubr.f32.mxu0 0.0
    %1963 = vmatmul.mubr.f32.gmra.mxu0 %v1883
    %v1964 = vpop.f32.mrf.mxu0
    %v1965 = vadd.f32 %v1874, %v1964
    %v1966 = vpop.f32.mrf.mxu0
    %1967 = vmatprep.mubr.f32.mxu0 0.0
    %1968 = vmatmul.mubr.f32.gmra.mxu0 %v1886
    %v1969 = vpop.f32.mrf.mxu0
    %v1970 = vadd.f32 %v1874, %v1969
    %v1971 = vpop.f32.mrf.mxu0
    %1972 = vdwg.mxu0
    %1973 = vst [vmem:[#allocation2] sm:$0xff] %v1955
    %1974 = vst [vmem:[#allocation2 + $0x8] sm:$0xff] %v1960
    %1975 = vst [vmem:[#allocation2 + $0x10] sm:$0xff] %v1965
    %1976 = vst [vmem:[#allocation2 + $0x18] sm:$0xff] %v1970
    %v1977 = vld [vmem:[%s5] sm:$0xff]
    %v1978 = vld [vmem:[%s5 + $0x8] sm:$0xff]
    %v1979 = vld [vmem:[%s5 + $0x10] sm:$0xff]
    %v1980 = vld [vmem:[%s5 + $0x18] sm:$0xff]
    %v1981 = vld [vmem:[#allocation2] sm:$0x1]
    %v1982 = vld [vmem:[#allocation2 + $0x8] sm:$0x1]
    %v1983 = vld [vmem:[#allocation2 + $0x10] sm:$0x1]
    %v1984 = vld [vmem:[#allocation2 + $0x18] sm:$0x1]
    %v1985 = vld [vmem:[#allocation2 + $0x1] sm:$0x1]
    %v1986 = vld [vmem:[#allocation2 + $0x9] sm:$0x1]
    %v1987 = vld [vmem:[#allocation2 + $0x11] sm:$0x1]
    %v1988 = vld [vmem:[#allocation2 + $0x19] sm:$0x1]
    %v1989 = vld [vmem:[#allocation2 + $0x2] sm:$0x1]
    %v1990 = vld [vmem:[#allocation2 + $0xa] sm:$0x1]
    %v1991 = vld [vmem:[#allocation2 + $0x12] sm:$0x1]
    %v1992 = vld [vmem:[#allocation2 + $0x1a] sm:$0x1]
    %v1993 = vld [vmem:[#allocation2 + $0x3] sm:$0x1]
    %v1994 = vld [vmem:[#allocation2 + $0xb] sm:$0x1]
    %v1995 = vld [vmem:[#allocation2 + $0x13] sm:$0x1]
    %v1996 = vld [vmem:[#allocation2 + $0x1b] sm:$0x1]
    %v1997 = vld [vmem:[#allocation2 + $0x4] sm:$0x1]
    %v1998 = vld [vmem:[#allocation2 + $0xc] sm:$0x1]
    %v1999 = vld [vmem:[#allocation2 + $0x14] sm:$0x1]
    %v2000 = vld [vmem:[#allocation2 + $0x1c] sm:$0x1]
    %v2001 = vld [vmem:[#allocation2 + $0x5] sm:$0x1]
    %v2002 = vld [vmem:[#allocation2 + $0xd] sm:$0x1]
    %v2003 = vld [vmem:[#allocation2 + $0x15] sm:$0x1]
    %v2004 = vld [vmem:[#allocation2 + $0x1d] sm:$0x1]
    %v2005 = vld [vmem:[#allocation2 + $0x6] sm:$0x1]
    %v2006 = vld [vmem:[#allocation2 + $0xe] sm:$0x1]
    %v2007 = vld [vmem:[#allocation2 + $0x16] sm:$0x1]
    %v2008 = vld [vmem:[#allocation2 + $0x1e] sm:$0x1]
    %v2009 = vld [vmem:[#allocation2 + $0x7] sm:$0x1]
    %v2010 = vld [vmem:[#allocation2 + $0xf] sm:$0x1]
    %v2011 = vld [vmem:[#allocation2 + $0x17] sm:$0x1]
    %v2012 = vld [vmem:[#allocation2 + $0x1f] sm:$0x1]
    %2013 = vmatprep.subr.mxu0 0.0
    %2014 = vmatpush1.msra.mxu0 0.0
    %2015 = vmatprep.subr.mxu0 0.0
    %2016 = vmatpush1.msra.mxu0 0.0
    %2017 = vmatprep.subr.mxu0 0.0
    %2018 = vmatpush1.msra.mxu0 0.0
    %2019 = vmatprep.subr.mxu0 0.0
    %2020 = vmatpush1.msra.mxu0 0.0
    %2021 = vmatprep.subr.mxu0 0.0
    %2022 = vmatpush1.msra.mxu0 0.0
    %2023 = vmatprep.subr.mxu0 0.0
    %2024 = vmatpush1.msra.mxu0 0.0
    %2025 = vmatprep.subr.mxu0 0.0
    %2026 = vmatpush1.msra.mxu0 0.0
    %2027 = vmatprep.subr.mxu0 0.0
    %2028 = vmatpush1.msra.mxu0 0.0
    %2029 = vmatprep.subr.mxu0 0.0
    %2030 = vmatpush1.msra.mxu0 0.0
    %2031 = vmatprep.subr.mxu0 0.0
    %2032 = vmatpush1.msra.mxu0 0.0
    %2033 = vmatprep.subr.mxu0 0.0
    %2034 = vmatpush1.msra.mxu0 0.0
    %2035 = vmatprep.subr.mxu0 0.0
    %2036 = vmatpush1.msra.mxu0 0.0
    %2037 = vmatprep.subr.mxu0 0.0
    %2038 = vmatpush1.msra.mxu0 %v1980
    %2039 = vmatprep.subr.mxu0 0.0
    %2040 = vmatpush1.msra.mxu0 %v1979
    %2041 = vmatprep.subr.mxu0 0.0
    %2042 = vmatpush1.msra.mxu0 %v1978
    %2043 = vmatprep.subr.mxu0 0.0
    %2044 = vmatpush1.msra.mxu0 %v1977
    %2045 = vmatprep.subr.mxu0 0.0
    %2046 = vmatpush2.msra.mxu0 0.0
    %2047 = vmatprep.subr.mxu0 0.0
    %2048 = vmatpush2.msra.mxu0 0.0
    %2049 = vmatprep.subr.mxu0 0.0
    %2050 = vmatpush2.msra.mxu0 0.0
    %2051 = vmatprep.subr.mxu0 0.0
    %2052 = vmatpush2.msra.mxu0 0.0
    %2053 = vmatprep.subr.mxu0 0.0
    %2054 = vmatpush2.msra.mxu0 0.0
    %2055 = vmatprep.subr.mxu0 0.0
    %2056 = vmatpush2.msra.mxu0 0.0
    %2057 = vmatprep.subr.mxu0 0.0
    %2058 = vmatpush2.msra.mxu0 0.0
    %2059 = vmatprep.subr.mxu0 0.0
    %2060 = vmatpush2.msra.mxu0 0.0
    %2061 = vmatprep.subr.mxu0 0.0
    %2062 = vmatpush2.msra.mxu0 0.0
    %2063 = vmatprep.subr.mxu0 0.0
    %2064 = vmatpush2.msra.mxu0 0.0
    %2065 = vmatprep.subr.mxu0 0.0
    %2066 = vmatpush2.msra.mxu0 0.0
    %2067 = vmatprep.subr.mxu0 0.0
    %2068 = vmatpush2.msra.mxu0 0.0
    %2069 = vmatprep.subr.mxu0 0.0
    %2070 = vmatpush2.msra.mxu0 0.0
    %2071 = vmatprep.subr.mxu0 0.0
    %2072 = vmatpush2.msra.mxu0 0.0
    %2073 = vmatprep.subr.mxu0 0.0
    %2074 = vmatpush2.msra.mxu0 0.0
    %2075 = vmatprep.subr.mxu0 0.0
    %2076 = vmatpush2.msra.mxu0 0.0
    %2077 = vmatprep.mubr.f32.mxu0 0.0
    %2078 = vmatmul.mubr.f32.gmra.mxu0 %v201
    %v2079 = vpop.f32.mrf.mxu0
    %v2080 = vadd.f32 0.0, %v2079
    %v2081 = vpop.f32.mrf.mxu0
    %2082 = vdwg.mxu0
    %v2084 = vrot.slane %v2080, 1
    %v2085 = vrot.slane %v2080, 2
    %v2086 = vrot.slane %v2080, 3
    %v2091 = vadd.f32 %v1981, %v2080
    %v2092 = vadd.f32 %v1982, %v2084
    %v2093 = vadd.f32 %v1983, %v2085
    %v2094 = vadd.f32 %v1984, %v2086
    %v2095 = vxor.u32 %v2091, 2147483648
    %v2096 = vxor.u32 %v2092, 2147483648
    %v2097 = vxor.u32 %v2093, 2147483648
    %v2098 = vxor.u32 %v2094, 2147483648
    %v2099 = vmul.f32 %v2095, 1.442695
    %v2100 = vpow.pop %v2099
    %v2101 = vmul.f32 %v2096, 1.442695
    %v2102 = vpow.pop %v2101
    %v2103 = vmul.f32 %v2097, 1.442695
    %v2104 = vpow.pop %v2103
    %v2105 = vmul.f32 %v2098, 1.442695
    %v2106 = vpow.pop %v2105
    %v2107 = vadd.f32 %v2100, 1.0
    %v2108 = vadd.f32 %v2102, 1.0
    %v2109 = vadd.f32 %v2104, 1.0
    %v2110 = vadd.f32 %v2106, 1.0
    %v2111 = vrcp.pop %v2107
    %v2112 = vmul.f32 1.0, %v2111
    %v2113 = vrcp.pop %v2108
    %v2114 = vmul.f32 1.0, %v2113
    %v2115 = vrcp.pop %v2109
    %v2116 = vmul.f32 1.0, %v2115
    %v2117 = vrcp.pop %v2110
    %v2118 = vmul.f32 1.0, %v2117
    %v2119 = vtanh.pop %v2091
    %v2120 = vtanh.pop %v2092
    %v2121 = vtanh.pop %v2093
    %v2122 = vtanh.pop %v2094
    %v2123 = vmul.f32 %v2112, 0.0
    %v2124 = vmul.f32 %v2114, 0.0
    %v2125 = vmul.f32 %v2116, 0.0
    %v2126 = vmul.f32 %v2118, 0.0
    %2131 = vrot.lane.b32.xlu0 %v2119, 64
    %v2132 = vpop.permute.xlu0 %2131
    %2133 = vrot.lane.b32.xlu0 %v2120, 64
    %v2134 = vpop.permute.xlu0 %2133
    %2135 = vrot.lane.b32.xlu0 %v2121, 64
    %v2136 = vpop.permute.xlu0 %2135
    %2137 = vrot.lane.b32.xlu0 %v2122, 64
    %v2138 = vpop.permute.xlu0 %2137
    %v2143 = vmul.f32 %v2112, %v2132
    %v2144 = vmul.f32 %v2114, %v2134
    %v2145 = vmul.f32 %v2116, %v2136
    %v2146 = vmul.f32 %v2118, %v2138
    %2151 = vrot.lane.b32.xlu0 %v2143, 32
    %v2152 = vpop.permute.xlu0 %2151
    %2153 = vrot.lane.b32.xlu0 %v2144, 32
    %v2154 = vpop.permute.xlu0 %2153
    %2155 = vrot.lane.b32.xlu0 %v2145, 32
    %v2156 = vpop.permute.xlu0 %2155
    %2157 = vrot.lane.b32.xlu0 %v2146, 32
    %v2158 = vpop.permute.xlu0 %2157
    %v2163 = vadd.f32 %v2123, %v2152
    %v2164 = vadd.f32 %v2124, %v2154
    %v2165 = vadd.f32 %v2125, %v2156
    %v2166 = vadd.f32 %v2126, %v2158
    %v2167 = vtanh.pop %v2163
    %v2168 = vtanh.pop %v2164
    %v2169 = vtanh.pop %v2165
    %v2170 = vtanh.pop %v2166
    %2175 = vrot.lane.b32.xlu0 %v2167, 64
    %v2176 = vpop.permute.xlu0 %2175
    %2177 = vrot.lane.b32.xlu0 %v2168, 64
    %v2178 = vpop.permute.xlu0 %2177
    %2179 = vrot.lane.b32.xlu0 %v2169, 64
    %v2180 = vpop.permute.xlu0 %2179
    %2181 = vrot.lane.b32.xlu0 %v2170, 64
    %v2182 = vpop.permute.xlu0 %2181
    %v2187 = vmul.f32 %v2112, %v2176
    %v2188 = vmul.f32 %v2114, %v2178
    %v2189 = vmul.f32 %v2116, %v2180
    %v2190 = vmul.f32 %v2118, %v2182
    %2195 = vrot.lane.b32.xlu0 %v2187, 32
    %v2196 = vpop.permute.xlu0 %2195
    %2197 = vrot.lane.b32.xlu0 %v2188, 32
    %v2198 = vpop.permute.xlu0 %2197
    %2199 = vrot.lane.b32.xlu0 %v2189, 32
    %v2200 = vpop.permute.xlu0 %2199
    %2201 = vrot.lane.b32.xlu0 %v2190, 32
    %v2202 = vpop.permute.xlu0 %2201
    %2207 = vst.msk [vmem:[#allocation3] sm:$0x1] %vm397, %v2196
    %2208 = vst.msk [vmem:[#allocation3 + $0x8] sm:$0x1] %vm397, %v2198
    %2209 = vst.msk [vmem:[#allocation3 + $0x10] sm:$0x1] %vm397, %v2200
    %2210 = vst.msk [vmem:[#allocation3 + $0x18] sm:$0x1] %vm397, %v2202
    %v2211 = vrot.slane %v2188, 7
    %v2212 = vsel %vm403, %v2211, %v2187
    %v2213 = vrot.slane %v2189, 6
    %v2214 = vsel %vm406, %v2213, %v2212
    %v2215 = vrot.slane %v2190, 5
    %v2216 = vsel %vm409, %v2215, %v2214
    %2217 = vrot.lane.b32.xlu0 %v2216, 32
    %v2218 = vpop.permute.xlu0 %2217
    %v2219 = vsel %vm199, %v2218, 0
    %2221 = vmatprep.subr.mxu0 0.0
    %2222 = vmatpush1.msra.mxu0 0.0
    %2223 = vmatprep.subr.mxu0 0.0
    %2224 = vmatpush1.msra.mxu0 0.0
    %2225 = vmatprep.subr.mxu0 0.0
    %2226 = vmatpush1.msra.mxu0 0.0
    %2227 = vmatprep.subr.mxu0 0.0
    %2228 = vmatpush1.msra.mxu0 0.0
    %2229 = vmatprep.subr.mxu0 0.0
    %2230 = vmatpush1.msra.mxu0 0.0
    %2231 = vmatprep.subr.mxu0 0.0
    %2232 = vmatpush1.msra.mxu0 0.0
    %2233 = vmatprep.subr.mxu0 0.0
    %2234 = vmatpush1.msra.mxu0 0.0
    %2235 = vmatprep.subr.mxu0 0.0
    %2236 = vmatpush1.msra.mxu0 0.0
    %2237 = vmatprep.subr.mxu0 0.0
    %2238 = vmatpush1.msra.mxu0 0.0
    %2239 = vmatprep.subr.mxu0 0.0
    %2240 = vmatpush1.msra.mxu0 0.0
    %2241 = vmatprep.subr.mxu0 0.0
    %2242 = vmatpush1.msra.mxu0 0.0
    %2243 = vmatprep.subr.mxu0 0.0
    %2244 = vmatpush1.msra.mxu0 0.0
    %2245 = vmatprep.subr.mxu0 0.0
    %2246 = vmatpush1.msra.mxu0 %v1980
    %2247 = vmatprep.subr.mxu0 0.0
    %2248 = vmatpush1.msra.mxu0 %v1979
    %2249 = vmatprep.subr.mxu0 0.0
    %2250 = vmatpush1.msra.mxu0 %v1978
    %2251 = vmatprep.subr.mxu0 0.0
    %2252 = vmatpush1.msra.mxu0 %v1977
    %2253 = vmatprep.subr.mxu0 0.0
    %2254 = vmatpush2.msra.mxu0 0.0
    %2255 = vmatprep.subr.mxu0 0.0
    %2256 = vmatpush2.msra.mxu0 0.0
    %2257 = vmatprep.subr.mxu0 0.0
    %2258 = vmatpush2.msra.mxu0 0.0
    %2259 = vmatprep.subr.mxu0 0.0
    %2260 = vmatpush2.msra.mxu0 0.0
    %2261 = vmatprep.subr.mxu0 0.0
    %2262 = vmatpush2.msra.mxu0 0.0
    %2263 = vmatprep.subr.mxu0 0.0
    %2264 = vmatpush2.msra.mxu0 0.0
    %2265 = vmatprep.subr.mxu0 0.0
    %2266 = vmatpush2.msra.mxu0 0.0
    %2267 = vmatprep.subr.mxu0 0.0
    %2268 = vmatpush2.msra.mxu0 0.0
    %2269 = vmatprep.subr.mxu0 0.0
    %2270 = vmatpush2.msra.mxu0 0.0
    %2271 = vmatprep.subr.mxu0 0.0
    %2272 = vmatpush2.msra.mxu0 0.0
    %2273 = vmatprep.subr.mxu0 0.0
    %2274 = vmatpush2.msra.mxu0 0.0
    %2275 = vmatprep.subr.mxu0 0.0
    %2276 = vmatpush2.msra.mxu0 0.0
    %2277 = vmatprep.subr.mxu0 0.0
    %2278 = vmatpush2.msra.mxu0 0.0
    %2279 = vmatprep.subr.mxu0 0.0
    %2280 = vmatpush2.msra.mxu0 0.0
    %2281 = vmatprep.subr.mxu0 0.0
    %2282 = vmatpush2.msra.mxu0 0.0
    %2283 = vmatprep.subr.mxu0 0.0
    %2284 = vmatpush2.msra.mxu0 0.0
    %2285 = vmatprep.mubr.f32.mxu0 0.0
    %2286 = vmatmul.mubr.f32.gmra.mxu0 %v2219
    %v2287 = vpop.f32.mrf.mxu0
    %v2288 = vadd.f32 0.0, %v2287
    %v2289 = vpop.f32.mrf.mxu0
    %2290 = vdwg.mxu0
    %v2292 = vrot.slane %v2288, 1
    %v2293 = vrot.slane %v2288, 2
    %v2294 = vrot.slane %v2288, 3
    %v2299 = vadd.f32 %v1985, %v2288
    %v2300 = vadd.f32 %v1986, %v2292
    %v2301 = vadd.f32 %v1987, %v2293
    %v2302 = vadd.f32 %v1988, %v2294
    %v2303 = vxor.u32 %v2299, 2147483648
    %v2304 = vxor.u32 %v2300, 2147483648
    %v2305 = vxor.u32 %v2301, 2147483648
    %v2306 = vxor.u32 %v2302, 2147483648
    %v2307 = vmul.f32 %v2303, 1.442695
    %v2308 = vpow.pop %v2307
    %v2309 = vmul.f32 %v2304, 1.442695
    %v2310 = vpow.pop %v2309
    %v2311 = vmul.f32 %v2305, 1.442695
    %v2312 = vpow.pop %v2311
    %v2313 = vmul.f32 %v2306, 1.442695
    %v2314 = vpow.pop %v2313
    %v2315 = vadd.f32 %v2308, 1.0
    %v2316 = vadd.f32 %v2310, 1.0
    %v2317 = vadd.f32 %v2312, 1.0
    %v2318 = vadd.f32 %v2314, 1.0
    %v2319 = vrcp.pop %v2315
    %v2320 = vmul.f32 1.0, %v2319
    %v2321 = vrcp.pop %v2316
    %v2322 = vmul.f32 1.0, %v2321
    %v2323 = vrcp.pop %v2317
    %v2324 = vmul.f32 1.0, %v2323
    %v2325 = vrcp.pop %v2318
    %v2326 = vmul.f32 1.0, %v2325
    %v2327 = vtanh.pop %v2299
    %v2328 = vtanh.pop %v2300
    %v2329 = vtanh.pop %v2301
    %v2330 = vtanh.pop %v2302
    %v2331 = vmul.f32 %v2320, %v2163
    %v2332 = vmul.f32 %v2322, %v2164
    %v2333 = vmul.f32 %v2324, %v2165
    %v2334 = vmul.f32 %v2326, %v2166
    %2339 = vrot.lane.b32.xlu0 %v2327, 64
    %v2340 = vpop.permute.xlu0 %2339
    %2341 = vrot.lane.b32.xlu0 %v2328, 64
    %v2342 = vpop.permute.xlu0 %2341
    %2343 = vrot.lane.b32.xlu0 %v2329, 64
    %v2344 = vpop.permute.xlu0 %2343
    %2345 = vrot.lane.b32.xlu0 %v2330, 64
    %v2346 = vpop.permute.xlu0 %2345
    %v2351 = vmul.f32 %v2320, %v2340
    %v2352 = vmul.f32 %v2322, %v2342
    %v2353 = vmul.f32 %v2324, %v2344
    %v2354 = vmul.f32 %v2326, %v2346
    %2359 = vrot.lane.b32.xlu0 %v2351, 32
    %v2360 = vpop.permute.xlu0 %2359
    %2361 = vrot.lane.b32.xlu0 %v2352, 32
    %v2362 = vpop.permute.xlu0 %2361
    %2363 = vrot.lane.b32.xlu0 %v2353, 32
    %v2364 = vpop.permute.xlu0 %2363
    %2365 = vrot.lane.b32.xlu0 %v2354, 32
    %v2366 = vpop.permute.xlu0 %2365
    %v2371 = vadd.f32 %v2331, %v2360
    %v2372 = vadd.f32 %v2332, %v2362
    %v2373 = vadd.f32 %v2333, %v2364
    %v2374 = vadd.f32 %v2334, %v2366
    %v2375 = vtanh.pop %v2371
    %v2376 = vtanh.pop %v2372
    %v2377 = vtanh.pop %v2373
    %v2378 = vtanh.pop %v2374
    %2383 = vrot.lane.b32.xlu0 %v2375, 64
    %v2384 = vpop.permute.xlu0 %2383
    %2385 = vrot.lane.b32.xlu0 %v2376, 64
    %v2386 = vpop.permute.xlu0 %2385
    %2387 = vrot.lane.b32.xlu0 %v2377, 64
    %v2388 = vpop.permute.xlu0 %2387
    %2389 = vrot.lane.b32.xlu0 %v2378, 64
    %v2390 = vpop.permute.xlu0 %2389
    %v2395 = vmul.f32 %v2320, %v2384
    %v2396 = vmul.f32 %v2322, %v2386
    %v2397 = vmul.f32 %v2324, %v2388
    %v2398 = vmul.f32 %v2326, %v2390
    %2403 = vrot.lane.b32.xlu0 %v2395, 32
    %v2404 = vpop.permute.xlu0 %2403
    %2405 = vrot.lane.b32.xlu0 %v2396, 32
    %v2406 = vpop.permute.xlu0 %2405
    %2407 = vrot.lane.b32.xlu0 %v2397, 32
    %v2408 = vpop.permute.xlu0 %2407
    %2409 = vrot.lane.b32.xlu0 %v2398, 32
    %v2410 = vpop.permute.xlu0 %2409
    %2415 = vst.msk [vmem:[#allocation3 + $0x1] sm:$0x1] %vm397, %v2404
    %2416 = vst.msk [vmem:[#allocation3 + $0x9] sm:$0x1] %vm397, %v2406
    %2417 = vst.msk [vmem:[#allocation3 + $0x11] sm:$0x1] %vm397, %v2408
    %2418 = vst.msk [vmem:[#allocation3 + $0x19] sm:$0x1] %vm397, %v2410
    %v2419 = vrot.slane %v2396, 7
    %v2420 = vsel %vm403, %v2419, %v2395
    %v2421 = vrot.slane %v2397, 6
    %v2422 = vsel %vm406, %v2421, %v2420
    %v2423 = vrot.slane %v2398, 5
    %v2424 = vsel %vm409, %v2423, %v2422
    %2425 = vrot.lane.b32.xlu0 %v2424, 32
    %v2426 = vpop.permute.xlu0 %2425
    %v2427 = vsel %vm199, %v2426, 0
    %2429 = vmatprep.subr.mxu0 0.0
    %2430 = vmatpush1.msra.mxu0 0.0
    %2431 = vmatprep.subr.mxu0 0.0
    %2432 = vmatpush1.msra.mxu0 0.0
    %2433 = vmatprep.subr.mxu0 0.0
    %2434 = vmatpush1.msra.mxu0 0.0
    %2435 = vmatprep.subr.mxu0 0.0
    %2436 = vmatpush1.msra.mxu0 0.0
    %2437 = vmatprep.subr.mxu0 0.0
    %2438 = vmatpush1.msra.mxu0 0.0
    %2439 = vmatprep.subr.mxu0 0.0
    %2440 = vmatpush1.msra.mxu0 0.0
    %2441 = vmatprep.subr.mxu0 0.0
    %2442 = vmatpush1.msra.mxu0 0.0
    %2443 = vmatprep.subr.mxu0 0.0
    %2444 = vmatpush1.msra.mxu0 0.0
    %2445 = vmatprep.subr.mxu0 0.0
    %2446 = vmatpush1.msra.mxu0 0.0
    %2447 = vmatprep.subr.mxu0 0.0
    %2448 = vmatpush1.msra.mxu0 0.0
    %2449 = vmatprep.subr.mxu0 0.0
    %2450 = vmatpush1.msra.mxu0 0.0
    %2451 = vmatprep.subr.mxu0 0.0
    %2452 = vmatpush1.msra.mxu0 0.0
    %2453 = vmatprep.subr.mxu0 0.0
    %2454 = vmatpush1.msra.mxu0 %v1980
    %2455 = vmatprep.subr.mxu0 0.0
    %2456 = vmatpush1.msra.mxu0 %v1979
    %2457 = vmatprep.subr.mxu0 0.0
    %2458 = vmatpush1.msra.mxu0 %v1978
    %2459 = vmatprep.subr.mxu0 0.0
    %2460 = vmatpush1.msra.mxu0 %v1977
    %2461 = vmatprep.subr.mxu0 0.0
    %2462 = vmatpush2.msra.mxu0 0.0
    %2463 = vmatprep.subr.mxu0 0.0
    %2464 = vmatpush2.msra.mxu0 0.0
    %2465 = vmatprep.subr.mxu0 0.0
    %2466 = vmatpush2.msra.mxu0 0.0
    %2467 = vmatprep.subr.mxu0 0.0
    %2468 = vmatpush2.msra.mxu0 0.0
    %2469 = vmatprep.subr.mxu0 0.0
    %2470 = vmatpush2.msra.mxu0 0.0
    %2471 = vmatprep.subr.mxu0 0.0
    %2472 = vmatpush2.msra.mxu0 0.0
    %2473 = vmatprep.subr.mxu0 0.0
    %2474 = vmatpush2.msra.mxu0 0.0
    %2475 = vmatprep.subr.mxu0 0.0
    %2476 = vmatpush2.msra.mxu0 0.0
    %2477 = vmatprep.subr.mxu0 0.0
    %2478 = vmatpush2.msra.mxu0 0.0
    %2479 = vmatprep.subr.mxu0 0.0
    %2480 = vmatpush2.msra.mxu0 0.0
    %2481 = vmatprep.subr.mxu0 0.0
    %2482 = vmatpush2.msra.mxu0 0.0
    %2483 = vmatprep.subr.mxu0 0.0
    %2484 = vmatpush2.msra.mxu0 0.0
    %2485 = vmatprep.subr.mxu0 0.0
    %2486 = vmatpush2.msra.mxu0 0.0
    %2487 = vmatprep.subr.mxu0 0.0
    %2488 = vmatpush2.msra.mxu0 0.0
    %2489 = vmatprep.subr.mxu0 0.0
    %2490 = vmatpush2.msra.mxu0 0.0
    %2491 = vmatprep.subr.mxu0 0.0
    %2492 = vmatpush2.msra.mxu0 0.0
    %2493 = vmatprep.mubr.f32.mxu0 0.0
    %2494 = vmatmul.mubr.f32.gmra.mxu0 %v2427
    %v2495 = vpop.f32.mrf.mxu0
    %v2496 = vadd.f32 0.0, %v2495
    %v2497 = vpop.f32.mrf.mxu0
    %2498 = vdwg.mxu0
    %v2500 = vrot.slane %v2496, 1
    %v2501 = vrot.slane %v2496, 2
    %v2502 = vrot.slane %v2496, 3
    %v2507 = vadd.f32 %v1989, %v2496
    %v2508 = vadd.f32 %v1990, %v2500
    %v2509 = vadd.f32 %v1991, %v2501
    %v2510 = vadd.f32 %v1992, %v2502
    %v2511 = vxor.u32 %v2507, 2147483648
    %v2512 = vxor.u32 %v2508, 2147483648
    %v2513 = vxor.u32 %v2509, 2147483648
    %v2514 = vxor.u32 %v2510, 2147483648
    %v2515 = vmul.f32 %v2511, 1.442695
    %v2516 = vpow.pop %v2515
    %v2517 = vmul.f32 %v2512, 1.442695
    %v2518 = vpow.pop %v2517
    %v2519 = vmul.f32 %v2513, 1.442695
    %v2520 = vpow.pop %v2519
    %v2521 = vmul.f32 %v2514, 1.442695
    %v2522 = vpow.pop %v2521
    %v2523 = vadd.f32 %v2516, 1.0
    %v2524 = vadd.f32 %v2518, 1.0
    %v2525 = vadd.f32 %v2520, 1.0
    %v2526 = vadd.f32 %v2522, 1.0
    %v2527 = vrcp.pop %v2523
    %v2528 = vmul.f32 1.0, %v2527
    %v2529 = vrcp.pop %v2524
    %v2530 = vmul.f32 1.0, %v2529
    %v2531 = vrcp.pop %v2525
    %v2532 = vmul.f32 1.0, %v2531
    %v2533 = vrcp.pop %v2526
    %v2534 = vmul.f32 1.0, %v2533
    %v2535 = vtanh.pop %v2507
    %v2536 = vtanh.pop %v2508
    %v2537 = vtanh.pop %v2509
    %v2538 = vtanh.pop %v2510
    %v2539 = vmul.f32 %v2528, %v2371
    %v2540 = vmul.f32 %v2530, %v2372
    %v2541 = vmul.f32 %v2532, %v2373
    %v2542 = vmul.f32 %v2534, %v2374
    %2547 = vrot.lane.b32.xlu0 %v2535, 64
    %v2548 = vpop.permute.xlu0 %2547
    %2549 = vrot.lane.b32.xlu0 %v2536, 64
    %v2550 = vpop.permute.xlu0 %2549
    %2551 = vrot.lane.b32.xlu0 %v2537, 64
    %v2552 = vpop.permute.xlu0 %2551
    %2553 = vrot.lane.b32.xlu0 %v2538, 64
    %v2554 = vpop.permute.xlu0 %2553
    %v2559 = vmul.f32 %v2528, %v2548
    %v2560 = vmul.f32 %v2530, %v2550
    %v2561 = vmul.f32 %v2532, %v2552
    %v2562 = vmul.f32 %v2534, %v2554
    %2567 = vrot.lane.b32.xlu0 %v2559, 32
    %v2568 = vpop.permute.xlu0 %2567
    %2569 = vrot.lane.b32.xlu0 %v2560, 32
    %v2570 = vpop.permute.xlu0 %2569
    %2571 = vrot.lane.b32.xlu0 %v2561, 32
    %v2572 = vpop.permute.xlu0 %2571
    %2573 = vrot.lane.b32.xlu0 %v2562, 32
    %v2574 = vpop.permute.xlu0 %2573
    %v2579 = vadd.f32 %v2539, %v2568
    %v2580 = vadd.f32 %v2540, %v2570
    %v2581 = vadd.f32 %v2541, %v2572
    %v2582 = vadd.f32 %v2542, %v2574
    %v2583 = vtanh.pop %v2579
    %v2584 = vtanh.pop %v2580
    %v2585 = vtanh.pop %v2581
    %v2586 = vtanh.pop %v2582
    %2591 = vrot.lane.b32.xlu0 %v2583, 64
    %v2592 = vpop.permute.xlu0 %2591
    %2593 = vrot.lane.b32.xlu0 %v2584, 64
    %v2594 = vpop.permute.xlu0 %2593
    %2595 = vrot.lane.b32.xlu0 %v2585, 64
    %v2596 = vpop.permute.xlu0 %2595
    %2597 = vrot.lane.b32.xlu0 %v2586, 64
    %v2598 = vpop.permute.xlu0 %2597
    %v2603 = vmul.f32 %v2528, %v2592
    %v2604 = vmul.f32 %v2530, %v2594
    %v2605 = vmul.f32 %v2532, %v2596
    %v2606 = vmul.f32 %v2534, %v2598
    %2611 = vrot.lane.b32.xlu0 %v2603, 32
    %v2612 = vpop.permute.xlu0 %2611
    %2613 = vrot.lane.b32.xlu0 %v2604, 32
    %v2614 = vpop.permute.xlu0 %2613
    %2615 = vrot.lane.b32.xlu0 %v2605, 32
    %v2616 = vpop.permute.xlu0 %2615
    %2617 = vrot.lane.b32.xlu0 %v2606, 32
    %v2618 = vpop.permute.xlu0 %2617
    %2623 = vst.msk [vmem:[#allocation3 + $0x2] sm:$0x1] %vm397, %v2612
    %2624 = vst.msk [vmem:[#allocation3 + $0xa] sm:$0x1] %vm397, %v2614
    %2625 = vst.msk [vmem:[#allocation3 + $0x12] sm:$0x1] %vm397, %v2616
    %2626 = vst.msk [vmem:[#allocation3 + $0x1a] sm:$0x1] %vm397, %v2618
    %v2627 = vrot.slane %v2604, 7
    %v2628 = vsel %vm403, %v2627, %v2603
    %v2629 = vrot.slane %v2605, 6
    %v2630 = vsel %vm406, %v2629, %v2628
    %v2631 = vrot.slane %v2606, 5
    %v2632 = vsel %vm409, %v2631, %v2630
    %2633 = vrot.lane.b32.xlu0 %v2632, 32
    %v2634 = vpop.permute.xlu0 %2633
    %v2635 = vsel %vm199, %v2634, 0
    %2637 = vmatprep.subr.mxu0 0.0
    %2638 = vmatpush1.msra.mxu0 0.0
    %2639 = vmatprep.subr.mxu0 0.0
    %2640 = vmatpush1.msra.mxu0 0.0
    %2641 = vmatprep.subr.mxu0 0.0
    %2642 = vmatpush1.msra.mxu0 0.0
    %2643 = vmatprep.subr.mxu0 0.0
    %2644 = vmatpush1.msra.mxu0 0.0
    %2645 = vmatprep.subr.mxu0 0.0
    %2646 = vmatpush1.msra.mxu0 0.0
    %2647 = vmatprep.subr.mxu0 0.0
    %2648 = vmatpush1.msra.mxu0 0.0
    %2649 = vmatprep.subr.mxu0 0.0
    %2650 = vmatpush1.msra.mxu0 0.0
    %2651 = vmatprep.subr.mxu0 0.0
    %2652 = vmatpush1.msra.mxu0 0.0
    %2653 = vmatprep.subr.mxu0 0.0
    %2654 = vmatpush1.msra.mxu0 0.0
    %2655 = vmatprep.subr.mxu0 0.0
    %2656 = vmatpush1.msra.mxu0 0.0
    %2657 = vmatprep.subr.mxu0 0.0
    %2658 = vmatpush1.msra.mxu0 0.0
    %2659 = vmatprep.subr.mxu0 0.0
    %2660 = vmatpush1.msra.mxu0 0.0
    %2661 = vmatprep.subr.mxu0 0.0
    %2662 = vmatpush1.msra.mxu0 %v1980
    %2663 = vmatprep.subr.mxu0 0.0
    %2664 = vmatpush1.msra.mxu0 %v1979
    %2665 = vmatprep.subr.mxu0 0.0
    %2666 = vmatpush1.msra.mxu0 %v1978
    %2667 = vmatprep.subr.mxu0 0.0
    %2668 = vmatpush1.msra.mxu0 %v1977
    %2669 = vmatprep.subr.mxu0 0.0
    %2670 = vmatpush2.msra.mxu0 0.0
    %2671 = vmatprep.subr.mxu0 0.0
    %2672 = vmatpush2.msra.mxu0 0.0
    %2673 = vmatprep.subr.mxu0 0.0
    %2674 = vmatpush2.msra.mxu0 0.0
    %2675 = vmatprep.subr.mxu0 0.0
    %2676 = vmatpush2.msra.mxu0 0.0
    %2677 = vmatprep.subr.mxu0 0.0
    %2678 = vmatpush2.msra.mxu0 0.0
    %2679 = vmatprep.subr.mxu0 0.0
    %2680 = vmatpush2.msra.mxu0 0.0
    %2681 = vmatprep.subr.mxu0 0.0
    %2682 = vmatpush2.msra.mxu0 0.0
    %2683 = vmatprep.subr.mxu0 0.0
    %2684 = vmatpush2.msra.mxu0 0.0
    %2685 = vmatprep.subr.mxu0 0.0
    %2686 = vmatpush2.msra.mxu0 0.0
    %2687 = vmatprep.subr.mxu0 0.0
    %2688 = vmatpush2.msra.mxu0 0.0
    %2689 = vmatprep.subr.mxu0 0.0
    %2690 = vmatpush2.msra.mxu0 0.0
    %2691 = vmatprep.subr.mxu0 0.0
    %2692 = vmatpush2.msra.mxu0 0.0
    %2693 = vmatprep.subr.mxu0 0.0
    %2694 = vmatpush2.msra.mxu0 0.0
    %2695 = vmatprep.subr.mxu0 0.0
    %2696 = vmatpush2.msra.mxu0 0.0
    %2697 = vmatprep.subr.mxu0 0.0
    %2698 = vmatpush2.msra.mxu0 0.0
    %2699 = vmatprep.subr.mxu0 0.0
    %2700 = vmatpush2.msra.mxu0 0.0
    %2701 = vmatprep.mubr.f32.mxu0 0.0
    %2702 = vmatmul.mubr.f32.gmra.mxu0 %v2635
    %v2703 = vpop.f32.mrf.mxu0
    %v2704 = vadd.f32 0.0, %v2703
    %v2705 = vpop.f32.mrf.mxu0
    %2706 = vdwg.mxu0
    %v2708 = vrot.slane %v2704, 1
    %v2709 = vrot.slane %v2704, 2
    %v2710 = vrot.slane %v2704, 3
    %v2715 = vadd.f32 %v1993, %v2704
    %v2716 = vadd.f32 %v1994, %v2708
    %v2717 = vadd.f32 %v1995, %v2709
    %v2718 = vadd.f32 %v1996, %v2710
    %v2719 = vxor.u32 %v2715, 2147483648
    %v2720 = vxor.u32 %v2716, 2147483648
    %v2721 = vxor.u32 %v2717, 2147483648
    %v2722 = vxor.u32 %v2718, 2147483648
    %v2723 = vmul.f32 %v2719, 1.442695
    %v2724 = vpow.pop %v2723
    %v2725 = vmul.f32 %v2720, 1.442695
    %v2726 = vpow.pop %v2725
    %v2727 = vmul.f32 %v2721, 1.442695
    %v2728 = vpow.pop %v2727
    %v2729 = vmul.f32 %v2722, 1.442695
    %v2730 = vpow.pop %v2729
    %v2731 = vadd.f32 %v2724, 1.0
    %v2732 = vadd.f32 %v2726, 1.0
    %v2733 = vadd.f32 %v2728, 1.0
    %v2734 = vadd.f32 %v2730, 1.0
    %v2735 = vrcp.pop %v2731
    %v2736 = vmul.f32 1.0, %v2735
    %v2737 = vrcp.pop %v2732
    %v2738 = vmul.f32 1.0, %v2737
    %v2739 = vrcp.pop %v2733
    %v2740 = vmul.f32 1.0, %v2739
    %v2741 = vrcp.pop %v2734
    %v2742 = vmul.f32 1.0, %v2741
    %v2743 = vtanh.pop %v2715
    %v2744 = vtanh.pop %v2716
    %v2745 = vtanh.pop %v2717
    %v2746 = vtanh.pop %v2718
    %v2747 = vmul.f32 %v2736, %v2579
    %v2748 = vmul.f32 %v2738, %v2580
    %v2749 = vmul.f32 %v2740, %v2581
    %v2750 = vmul.f32 %v2742, %v2582
    %2755 = vrot.lane.b32.xlu0 %v2743, 64
    %v2756 = vpop.permute.xlu0 %2755
    %2757 = vrot.lane.b32.xlu0 %v2744, 64
    %v2758 = vpop.permute.xlu0 %2757
    %2759 = vrot.lane.b32.xlu0 %v2745, 64
    %v2760 = vpop.permute.xlu0 %2759
    %2761 = vrot.lane.b32.xlu0 %v2746, 64
    %v2762 = vpop.permute.xlu0 %2761
    %v2767 = vmul.f32 %v2736, %v2756
    %v2768 = vmul.f32 %v2738, %v2758
    %v2769 = vmul.f32 %v2740, %v2760
    %v2770 = vmul.f32 %v2742, %v2762
    %2775 = vrot.lane.b32.xlu0 %v2767, 32
    %v2776 = vpop.permute.xlu0 %2775
    %2777 = vrot.lane.b32.xlu0 %v2768, 32
    %v2778 = vpop.permute.xlu0 %2777
    %2779 = vrot.lane.b32.xlu0 %v2769, 32
    %v2780 = vpop.permute.xlu0 %2779
    %2781 = vrot.lane.b32.xlu0 %v2770, 32
    %v2782 = vpop.permute.xlu0 %2781
    %v2787 = vadd.f32 %v2747, %v2776
    %v2788 = vadd.f32 %v2748, %v2778
    %v2789 = vadd.f32 %v2749, %v2780
    %v2790 = vadd.f32 %v2750, %v2782
    %v2791 = vtanh.pop %v2787
    %v2792 = vtanh.pop %v2788
    %v2793 = vtanh.pop %v2789
    %v2794 = vtanh.pop %v2790
    %2799 = vrot.lane.b32.xlu0 %v2791, 64
    %v2800 = vpop.permute.xlu0 %2799
    %2801 = vrot.lane.b32.xlu0 %v2792, 64
    %v2802 = vpop.permute.xlu0 %2801
    %2803 = vrot.lane.b32.xlu0 %v2793, 64
    %v2804 = vpop.permute.xlu0 %2803
    %2805 = vrot.lane.b32.xlu0 %v2794, 64
    %v2806 = vpop.permute.xlu0 %2805
    %v2811 = vmul.f32 %v2736, %v2800
    %v2812 = vmul.f32 %v2738, %v2802
    %v2813 = vmul.f32 %v2740, %v2804
    %v2814 = vmul.f32 %v2742, %v2806
    %2819 = vrot.lane.b32.xlu0 %v2811, 32
    %v2820 = vpop.permute.xlu0 %2819
    %2821 = vrot.lane.b32.xlu0 %v2812, 32
    %v2822 = vpop.permute.xlu0 %2821
    %2823 = vrot.lane.b32.xlu0 %v2813, 32
    %v2824 = vpop.permute.xlu0 %2823
    %2825 = vrot.lane.b32.xlu0 %v2814, 32
    %v2826 = vpop.permute.xlu0 %2825
    %2831 = vst.msk [vmem:[#allocation3 + $0x3] sm:$0x1] %vm397, %v2820
    %2832 = vst.msk [vmem:[#allocation3 + $0xb] sm:$0x1] %vm397, %v2822
    %2833 = vst.msk [vmem:[#allocation3 + $0x13] sm:$0x1] %vm397, %v2824
    %2834 = vst.msk [vmem:[#allocation3 + $0x1b] sm:$0x1] %vm397, %v2826
    %v2835 = vrot.slane %v2812, 7
    %v2836 = vsel %vm403, %v2835, %v2811
    %v2837 = vrot.slane %v2813, 6
    %v2838 = vsel %vm406, %v2837, %v2836
    %v2839 = vrot.slane %v2814, 5
    %v2840 = vsel %vm409, %v2839, %v2838
    %2841 = vrot.lane.b32.xlu0 %v2840, 32
    %v2842 = vpop.permute.xlu0 %2841
    %v2843 = vsel %vm199, %v2842, 0
    %2845 = vmatprep.subr.mxu0 0.0
    %2846 = vmatpush1.msra.mxu0 0.0
    %2847 = vmatprep.subr.mxu0 0.0
    %2848 = vmatpush1.msra.mxu0 0.0
    %2849 = vmatprep.subr.mxu0 0.0
    %2850 = vmatpush1.msra.mxu0 0.0
    %2851 = vmatprep.subr.mxu0 0.0
    %2852 = vmatpush1.msra.mxu0 0.0
    %2853 = vmatprep.subr.mxu0 0.0
    %2854 = vmatpush1.msra.mxu0 0.0
    %2855 = vmatprep.subr.mxu0 0.0
    %2856 = vmatpush1.msra.mxu0 0.0
    %2857 = vmatprep.subr.mxu0 0.0
    %2858 = vmatpush1.msra.mxu0 0.0
    %2859 = vmatprep.subr.mxu0 0.0
    %2860 = vmatpush1.msra.mxu0 0.0
    %2861 = vmatprep.subr.mxu0 0.0
    %2862 = vmatpush1.msra.mxu0 0.0
    %2863 = vmatprep.subr.mxu0 0.0
    %2864 = vmatpush1.msra.mxu0 0.0
    %2865 = vmatprep.subr.mxu0 0.0
    %2866 = vmatpush1.msra.mxu0 0.0
    %2867 = vmatprep.subr.mxu0 0.0
    %2868 = vmatpush1.msra.mxu0 0.0
    %2869 = vmatprep.subr.mxu0 0.0
    %2870 = vmatpush1.msra.mxu0 %v1980
    %2871 = vmatprep.subr.mxu0 0.0
    %2872 = vmatpush1.msra.mxu0 %v1979
    %2873 = vmatprep.subr.mxu0 0.0
    %2874 = vmatpush1.msra.mxu0 %v1978
    %2875 = vmatprep.subr.mxu0 0.0
    %2876 = vmatpush1.msra.mxu0 %v1977
    %2877 = vmatprep.subr.mxu0 0.0
    %2878 = vmatpush2.msra.mxu0 0.0
    %2879 = vmatprep.subr.mxu0 0.0
    %2880 = vmatpush2.msra.mxu0 0.0
    %2881 = vmatprep.subr.mxu0 0.0
    %2882 = vmatpush2.msra.mxu0 0.0
    %2883 = vmatprep.subr.mxu0 0.0
    %2884 = vmatpush2.msra.mxu0 0.0
    %2885 = vmatprep.subr.mxu0 0.0
    %2886 = vmatpush2.msra.mxu0 0.0
    %2887 = vmatprep.subr.mxu0 0.0
    %2888 = vmatpush2.msra.mxu0 0.0
    %2889 = vmatprep.subr.mxu0 0.0
    %2890 = vmatpush2.msra.mxu0 0.0
    %2891 = vmatprep.subr.mxu0 0.0
    %2892 = vmatpush2.msra.mxu0 0.0
    %2893 = vmatprep.subr.mxu0 0.0
    %2894 = vmatpush2.msra.mxu0 0.0
    %2895 = vmatprep.subr.mxu0 0.0
    %2896 = vmatpush2.msra.mxu0 0.0
    %2897 = vmatprep.subr.mxu0 0.0
    %2898 = vmatpush2.msra.mxu0 0.0
    %2899 = vmatprep.subr.mxu0 0.0
    %2900 = vmatpush2.msra.mxu0 0.0
    %2901 = vmatprep.subr.mxu0 0.0
    %2902 = vmatpush2.msra.mxu0 0.0
    %2903 = vmatprep.subr.mxu0 0.0
    %2904 = vmatpush2.msra.mxu0 0.0
    %2905 = vmatprep.subr.mxu0 0.0
    %2906 = vmatpush2.msra.mxu0 0.0
    %2907 = vmatprep.subr.mxu0 0.0
    %2908 = vmatpush2.msra.mxu0 0.0
    %2909 = vmatprep.mubr.f32.mxu0 0.0
    %2910 = vmatmul.mubr.f32.gmra.mxu0 %v2843
    %v2911 = vpop.f32.mrf.mxu0
    %v2912 = vadd.f32 0.0, %v2911
    %v2913 = vpop.f32.mrf.mxu0
    %2914 = vdwg.mxu0
    %v2916 = vrot.slane %v2912, 1
    %v2917 = vrot.slane %v2912, 2
    %v2918 = vrot.slane %v2912, 3
    %v2923 = vadd.f32 %v1997, %v2912
    %v2924 = vadd.f32 %v1998, %v2916
    %v2925 = vadd.f32 %v1999, %v2917
    %v2926 = vadd.f32 %v2000, %v2918
    %v2927 = vxor.u32 %v2923, 2147483648
    %v2928 = vxor.u32 %v2924, 2147483648
    %v2929 = vxor.u32 %v2925, 2147483648
    %v2930 = vxor.u32 %v2926, 2147483648
    %v2931 = vmul.f32 %v2927, 1.442695
    %v2932 = vpow.pop %v2931
    %v2933 = vmul.f32 %v2928, 1.442695
    %v2934 = vpow.pop %v2933
    %v2935 = vmul.f32 %v2929, 1.442695
    %v2936 = vpow.pop %v2935
    %v2937 = vmul.f32 %v2930, 1.442695
    %v2938 = vpow.pop %v2937
    %v2939 = vadd.f32 %v2932, 1.0
    %v2940 = vadd.f32 %v2934, 1.0
    %v2941 = vadd.f32 %v2936, 1.0
    %v2942 = vadd.f32 %v2938, 1.0
    %v2943 = vrcp.pop %v2939
    %v2944 = vmul.f32 1.0, %v2943
    %v2945 = vrcp.pop %v2940
    %v2946 = vmul.f32 1.0, %v2945
    %v2947 = vrcp.pop %v2941
    %v2948 = vmul.f32 1.0, %v2947
    %v2949 = vrcp.pop %v2942
    %v2950 = vmul.f32 1.0, %v2949
    %v2951 = vtanh.pop %v2923
    %v2952 = vtanh.pop %v2924
    %v2953 = vtanh.pop %v2925
    %v2954 = vtanh.pop %v2926
    %v2955 = vmul.f32 %v2944, %v2787
    %v2956 = vmul.f32 %v2946, %v2788
    %v2957 = vmul.f32 %v2948, %v2789
    %v2958 = vmul.f32 %v2950, %v2790
    %2963 = vrot.lane.b32.xlu0 %v2951, 64
    %v2964 = vpop.permute.xlu0 %2963
    %2965 = vrot.lane.b32.xlu0 %v2952, 64
    %v2966 = vpop.permute.xlu0 %2965
    %2967 = vrot.lane.b32.xlu0 %v2953, 64
    %v2968 = vpop.permute.xlu0 %2967
    %2969 = vrot.lane.b32.xlu0 %v2954, 64
    %v2970 = vpop.permute.xlu0 %2969
    %v2975 = vmul.f32 %v2944, %v2964
    %v2976 = vmul.f32 %v2946, %v2966
    %v2977 = vmul.f32 %v2948, %v2968
    %v2978 = vmul.f32 %v2950, %v2970
    %2983 = vrot.lane.b32.xlu0 %v2975, 32
    %v2984 = vpop.permute.xlu0 %2983
    %2985 = vrot.lane.b32.xlu0 %v2976, 32
    %v2986 = vpop.permute.xlu0 %2985
    %2987 = vrot.lane.b32.xlu0 %v2977, 32
    %v2988 = vpop.permute.xlu0 %2987
    %2989 = vrot.lane.b32.xlu0 %v2978, 32
    %v2990 = vpop.permute.xlu0 %2989
    %v2995 = vadd.f32 %v2955, %v2984
    %v2996 = vadd.f32 %v2956, %v2986
    %v2997 = vadd.f32 %v2957, %v2988
    %v2998 = vadd.f32 %v2958, %v2990
    %v2999 = vtanh.pop %v2995
    %v3000 = vtanh.pop %v2996
    %v3001 = vtanh.pop %v2997
    %v3002 = vtanh.pop %v2998
    %3007 = vrot.lane.b32.xlu0 %v2999, 64
    %v3008 = vpop.permute.xlu0 %3007
    %3009 = vrot.lane.b32.xlu0 %v3000, 64
    %v3010 = vpop.permute.xlu0 %3009
    %3011 = vrot.lane.b32.xlu0 %v3001, 64
    %v3012 = vpop.permute.xlu0 %3011
    %3013 = vrot.lane.b32.xlu0 %v3002, 64
    %v3014 = vpop.permute.xlu0 %3013
    %v3019 = vmul.f32 %v2944, %v3008
    %v3020 = vmul.f32 %v2946, %v3010
    %v3021 = vmul.f32 %v2948, %v3012
    %v3022 = vmul.f32 %v2950, %v3014
    %3027 = vrot.lane.b32.xlu0 %v3019, 32
    %v3028 = vpop.permute.xlu0 %3027
    %3029 = vrot.lane.b32.xlu0 %v3020, 32
    %v3030 = vpop.permute.xlu0 %3029
    %3031 = vrot.lane.b32.xlu0 %v3021, 32
    %v3032 = vpop.permute.xlu0 %3031
    %3033 = vrot.lane.b32.xlu0 %v3022, 32
    %v3034 = vpop.permute.xlu0 %3033
    %3039 = vst.msk [vmem:[#allocation3 + $0x4] sm:$0x1] %vm397, %v3028
    %3040 = vst.msk [vmem:[#allocation3 + $0xc] sm:$0x1] %vm397, %v3030
    %3041 = vst.msk [vmem:[#allocation3 + $0x14] sm:$0x1] %vm397, %v3032
    %3042 = vst.msk [vmem:[#allocation3 + $0x1c] sm:$0x1] %vm397, %v3034
    %v3043 = vrot.slane %v3020, 7
    %v3044 = vsel %vm403, %v3043, %v3019
    %v3045 = vrot.slane %v3021, 6
    %v3046 = vsel %vm406, %v3045, %v3044
    %v3047 = vrot.slane %v3022, 5
    %v3048 = vsel %vm409, %v3047, %v3046
    %3049 = vrot.lane.b32.xlu0 %v3048, 32
    %v3050 = vpop.permute.xlu0 %3049
    %v3051 = vsel %vm199, %v3050, 0
    %3053 = vmatprep.subr.mxu0 0.0
    %3054 = vmatpush1.msra.mxu0 0.0
    %3055 = vmatprep.subr.mxu0 0.0
    %3056 = vmatpush1.msra.mxu0 0.0
    %3057 = vmatprep.subr.mxu0 0.0
    %3058 = vmatpush1.msra.mxu0 0.0
    %3059 = vmatprep.subr.mxu0 0.0
    %3060 = vmatpush1.msra.mxu0 0.0
    %3061 = vmatprep.subr.mxu0 0.0
    %3062 = vmatpush1.msra.mxu0 0.0
    %3063 = vmatprep.subr.mxu0 0.0
    %3064 = vmatpush1.msra.mxu0 0.0
    %3065 = vmatprep.subr.mxu0 0.0
    %3066 = vmatpush1.msra.mxu0 0.0
    %3067 = vmatprep.subr.mxu0 0.0
    %3068 = vmatpush1.msra.mxu0 0.0
    %3069 = vmatprep.subr.mxu0 0.0
    %3070 = vmatpush1.msra.mxu0 0.0
    %3071 = vmatprep.subr.mxu0 0.0
    %3072 = vmatpush1.msra.mxu0 0.0
    %3073 = vmatprep.subr.mxu0 0.0
    %3074 = vmatpush1.msra.mxu0 0.0
    %3075 = vmatprep.subr.mxu0 0.0
    %3076 = vmatpush1.msra.mxu0 0.0
    %3077 = vmatprep.subr.mxu0 0.0
    %3078 = vmatpush1.msra.mxu0 %v1980
    %3079 = vmatprep.subr.mxu0 0.0
    %3080 = vmatpush1.msra.mxu0 %v1979
    %3081 = vmatprep.subr.mxu0 0.0
    %3082 = vmatpush1.msra.mxu0 %v1978
    %3083 = vmatprep.subr.mxu0 0.0
    %3084 = vmatpush1.msra.mxu0 %v1977
    %3085 = vmatprep.subr.mxu0 0.0
    %3086 = vmatpush2.msra.mxu0 0.0
    %3087 = vmatprep.subr.mxu0 0.0
    %3088 = vmatpush2.msra.mxu0 0.0
    %3089 = vmatprep.subr.mxu0 0.0
    %3090 = vmatpush2.msra.mxu0 0.0
    %3091 = vmatprep.subr.mxu0 0.0
    %3092 = vmatpush2.msra.mxu0 0.0
    %3093 = vmatprep.subr.mxu0 0.0
    %3094 = vmatpush2.msra.mxu0 0.0
    %3095 = vmatprep.subr.mxu0 0.0
    %3096 = vmatpush2.msra.mxu0 0.0
    %3097 = vmatprep.subr.mxu0 0.0
    %3098 = vmatpush2.msra.mxu0 0.0
    %3099 = vmatprep.subr.mxu0 0.0
    %3100 = vmatpush2.msra.mxu0 0.0
    %3101 = vmatprep.subr.mxu0 0.0
    %3102 = vmatpush2.msra.mxu0 0.0
    %3103 = vmatprep.subr.mxu0 0.0
    %3104 = vmatpush2.msra.mxu0 0.0
    %3105 = vmatprep.subr.mxu0 0.0
    %3106 = vmatpush2.msra.mxu0 0.0
    %3107 = vmatprep.subr.mxu0 0.0
    %3108 = vmatpush2.msra.mxu0 0.0
    %3109 = vmatprep.subr.mxu0 0.0
    %3110 = vmatpush2.msra.mxu0 0.0
    %3111 = vmatprep.subr.mxu0 0.0
    %3112 = vmatpush2.msra.mxu0 0.0
    %3113 = vmatprep.subr.mxu0 0.0
    %3114 = vmatpush2.msra.mxu0 0.0
    %3115 = vmatprep.subr.mxu0 0.0
    %3116 = vmatpush2.msra.mxu0 0.0
    %3117 = vmatprep.mubr.f32.mxu0 0.0
    %3118 = vmatmul.mubr.f32.gmra.mxu0 %v3051
    %v3119 = vpop.f32.mrf.mxu0
    %v3120 = vadd.f32 0.0, %v3119
    %v3121 = vpop.f32.mrf.mxu0
    %3122 = vdwg.mxu0
    %v3124 = vrot.slane %v3120, 1
    %v3125 = vrot.slane %v3120, 2
    %v3126 = vrot.slane %v3120, 3
    %v3131 = vadd.f32 %v2001, %v3120
    %v3132 = vadd.f32 %v2002, %v3124
    %v3133 = vadd.f32 %v2003, %v3125
    %v3134 = vadd.f32 %v2004, %v3126
    %v3135 = vxor.u32 %v3131, 2147483648
    %v3136 = vxor.u32 %v3132, 2147483648
    %v3137 = vxor.u32 %v3133, 2147483648
    %v3138 = vxor.u32 %v3134, 2147483648
    %v3139 = vmul.f32 %v3135, 1.442695
    %v3140 = vpow.pop %v3139
    %v3141 = vmul.f32 %v3136, 1.442695
    %v3142 = vpow.pop %v3141
    %v3143 = vmul.f32 %v3137, 1.442695
    %v3144 = vpow.pop %v3143
    %v3145 = vmul.f32 %v3138, 1.442695
    %v3146 = vpow.pop %v3145
    %v3147 = vadd.f32 %v3140, 1.0
    %v3148 = vadd.f32 %v3142, 1.0
    %v3149 = vadd.f32 %v3144, 1.0
    %v3150 = vadd.f32 %v3146, 1.0
    %v3151 = vrcp.pop %v3147
    %v3152 = vmul.f32 1.0, %v3151
    %v3153 = vrcp.pop %v3148
    %v3154 = vmul.f32 1.0, %v3153
    %v3155 = vrcp.pop %v3149
    %v3156 = vmul.f32 1.0, %v3155
    %v3157 = vrcp.pop %v3150
    %v3158 = vmul.f32 1.0, %v3157
    %v3159 = vtanh.pop %v3131
    %v3160 = vtanh.pop %v3132
    %v3161 = vtanh.pop %v3133
    %v3162 = vtanh.pop %v3134
    %v3163 = vmul.f32 %v3152, %v2995
    %v3164 = vmul.f32 %v3154, %v2996
    %v3165 = vmul.f32 %v3156, %v2997
    %v3166 = vmul.f32 %v3158, %v2998
    %3171 = vrot.lane.b32.xlu0 %v3159, 64
    %v3172 = vpop.permute.xlu0 %3171
    %3173 = vrot.lane.b32.xlu0 %v3160, 64
    %v3174 = vpop.permute.xlu0 %3173
    %3175 = vrot.lane.b32.xlu0 %v3161, 64
    %v3176 = vpop.permute.xlu0 %3175
    %3177 = vrot.lane.b32.xlu0 %v3162, 64
    %v3178 = vpop.permute.xlu0 %3177
    %v3183 = vmul.f32 %v3152, %v3172
    %v3184 = vmul.f32 %v3154, %v3174
    %v3185 = vmul.f32 %v3156, %v3176
    %v3186 = vmul.f32 %v3158, %v3178
    %3191 = vrot.lane.b32.xlu0 %v3183, 32
    %v3192 = vpop.permute.xlu0 %3191
    %3193 = vrot.lane.b32.xlu0 %v3184, 32
    %v3194 = vpop.permute.xlu0 %3193
    %3195 = vrot.lane.b32.xlu0 %v3185, 32
    %v3196 = vpop.permute.xlu0 %3195
    %3197 = vrot.lane.b32.xlu0 %v3186, 32
    %v3198 = vpop.permute.xlu0 %3197
    %v3203 = vadd.f32 %v3163, %v3192
    %v3204 = vadd.f32 %v3164, %v3194
    %v3205 = vadd.f32 %v3165, %v3196
    %v3206 = vadd.f32 %v3166, %v3198
    %v3207 = vtanh.pop %v3203
    %v3208 = vtanh.pop %v3204
    %v3209 = vtanh.pop %v3205
    %v3210 = vtanh.pop %v3206
    %3215 = vrot.lane.b32.xlu0 %v3207, 64
    %v3216 = vpop.permute.xlu0 %3215
    %3217 = vrot.lane.b32.xlu0 %v3208, 64
    %v3218 = vpop.permute.xlu0 %3217
    %3219 = vrot.lane.b32.xlu0 %v3209, 64
    %v3220 = vpop.permute.xlu0 %3219
    %3221 = vrot.lane.b32.xlu0 %v3210, 64
    %v3222 = vpop.permute.xlu0 %3221
    %v3227 = vmul.f32 %v3152, %v3216
    %v3228 = vmul.f32 %v3154, %v3218
    %v3229 = vmul.f32 %v3156, %v3220
    %v3230 = vmul.f32 %v3158, %v3222
    %3235 = vrot.lane.b32.xlu0 %v3227, 32
    %v3236 = vpop.permute.xlu0 %3235
    %3237 = vrot.lane.b32.xlu0 %v3228, 32
    %v3238 = vpop.permute.xlu0 %3237
    %3239 = vrot.lane.b32.xlu0 %v3229, 32
    %v3240 = vpop.permute.xlu0 %3239
    %3241 = vrot.lane.b32.xlu0 %v3230, 32
    %v3242 = vpop.permute.xlu0 %3241
    %3247 = vst.msk [vmem:[#allocation3 + $0x5] sm:$0x1] %vm397, %v3236
    %3248 = vst.msk [vmem:[#allocation3 + $0xd] sm:$0x1] %vm397, %v3238
    %3249 = vst.msk [vmem:[#allocation3 + $0x15] sm:$0x1] %vm397, %v3240
    %3250 = vst.msk [vmem:[#allocation3 + $0x1d] sm:$0x1] %vm397, %v3242
    %v3251 = vrot.slane %v3228, 7
    %v3252 = vsel %vm403, %v3251, %v3227
    %v3253 = vrot.slane %v3229, 6
    %v3254 = vsel %vm406, %v3253, %v3252
    %v3255 = vrot.slane %v3230, 5
    %v3256 = vsel %vm409, %v3255, %v3254
    %3257 = vrot.lane.b32.xlu0 %v3256, 32
    %v3258 = vpop.permute.xlu0 %3257
    %v3259 = vsel %vm199, %v3258, 0
    %3261 = vmatprep.subr.mxu0 0.0
    %3262 = vmatpush1.msra.mxu0 0.0
    %3263 = vmatprep.subr.mxu0 0.0
    %3264 = vmatpush1.msra.mxu0 0.0
    %3265 = vmatprep.subr.mxu0 0.0
    %3266 = vmatpush1.msra.mxu0 0.0
    %3267 = vmatprep.subr.mxu0 0.0
    %3268 = vmatpush1.msra.mxu0 0.0
    %3269 = vmatprep.subr.mxu0 0.0
    %3270 = vmatpush1.msra.mxu0 0.0
    %3271 = vmatprep.subr.mxu0 0.0
    %3272 = vmatpush1.msra.mxu0 0.0
    %3273 = vmatprep.subr.mxu0 0.0
    %3274 = vmatpush1.msra.mxu0 0.0
    %3275 = vmatprep.subr.mxu0 0.0
    %3276 = vmatpush1.msra.mxu0 0.0
    %3277 = vmatprep.subr.mxu0 0.0
    %3278 = vmatpush1.msra.mxu0 0.0
    %3279 = vmatprep.subr.mxu0 0.0
    %3280 = vmatpush1.msra.mxu0 0.0
    %3281 = vmatprep.subr.mxu0 0.0
    %3282 = vmatpush1.msra.mxu0 0.0
    %3283 = vmatprep.subr.mxu0 0.0
    %3284 = vmatpush1.msra.mxu0 0.0
    %3285 = vmatprep.subr.mxu0 0.0
    %3286 = vmatpush1.msra.mxu0 %v1980
    %3287 = vmatprep.subr.mxu0 0.0
    %3288 = vmatpush1.msra.mxu0 %v1979
    %3289 = vmatprep.subr.mxu0 0.0
    %3290 = vmatpush1.msra.mxu0 %v1978
    %3291 = vmatprep.subr.mxu0 0.0
    %3292 = vmatpush1.msra.mxu0 %v1977
    %3293 = vmatprep.subr.mxu0 0.0
    %3294 = vmatpush2.msra.mxu0 0.0
    %3295 = vmatprep.subr.mxu0 0.0
    %3296 = vmatpush2.msra.mxu0 0.0
    %3297 = vmatprep.subr.mxu0 0.0
    %3298 = vmatpush2.msra.mxu0 0.0
    %3299 = vmatprep.subr.mxu0 0.0
    %3300 = vmatpush2.msra.mxu0 0.0
    %3301 = vmatprep.subr.mxu0 0.0
    %3302 = vmatpush2.msra.mxu0 0.0
    %3303 = vmatprep.subr.mxu0 0.0
    %3304 = vmatpush2.msra.mxu0 0.0
    %3305 = vmatprep.subr.mxu0 0.0
    %3306 = vmatpush2.msra.mxu0 0.0
    %3307 = vmatprep.subr.mxu0 0.0
    %3308 = vmatpush2.msra.mxu0 0.0
    %3309 = vmatprep.subr.mxu0 0.0
    %3310 = vmatpush2.msra.mxu0 0.0
    %3311 = vmatprep.subr.mxu0 0.0
    %3312 = vmatpush2.msra.mxu0 0.0
    %3313 = vmatprep.subr.mxu0 0.0
    %3314 = vmatpush2.msra.mxu0 0.0
    %3315 = vmatprep.subr.mxu0 0.0
    %3316 = vmatpush2.msra.mxu0 0.0
    %3317 = vmatprep.subr.mxu0 0.0
    %3318 = vmatpush2.msra.mxu0 0.0
    %3319 = vmatprep.subr.mxu0 0.0
    %3320 = vmatpush2.msra.mxu0 0.0
    %3321 = vmatprep.subr.mxu0 0.0
    %3322 = vmatpush2.msra.mxu0 0.0
    %3323 = vmatprep.subr.mxu0 0.0
    %3324 = vmatpush2.msra.mxu0 0.0
    %3325 = vmatprep.mubr.f32.mxu0 0.0
    %3326 = vmatmul.mubr.f32.gmra.mxu0 %v3259
    %v3327 = vpop.f32.mrf.mxu0
    %v3328 = vadd.f32 0.0, %v3327
    %v3329 = vpop.f32.mrf.mxu0
    %3330 = vdwg.mxu0
    %v3332 = vrot.slane %v3328, 1
    %v3333 = vrot.slane %v3328, 2
    %v3334 = vrot.slane %v3328, 3
    %v3339 = vadd.f32 %v2005, %v3328
    %v3340 = vadd.f32 %v2006, %v3332
    %v3341 = vadd.f32 %v2007, %v3333
    %v3342 = vadd.f32 %v2008, %v3334
    %v3343 = vxor.u32 %v3339, 2147483648
    %v3344 = vxor.u32 %v3340, 2147483648
    %v3345 = vxor.u32 %v3341, 2147483648
    %v3346 = vxor.u32 %v3342, 2147483648
    %v3347 = vmul.f32 %v3343, 1.442695
    %v3348 = vpow.pop %v3347
    %v3349 = vmul.f32 %v3344, 1.442695
    %v3350 = vpow.pop %v3349
    %v3351 = vmul.f32 %v3345, 1.442695
    %v3352 = vpow.pop %v3351
    %v3353 = vmul.f32 %v3346, 1.442695
    %v3354 = vpow.pop %v3353
    %v3355 = vadd.f32 %v3348, 1.0
    %v3356 = vadd.f32 %v3350, 1.0
    %v3357 = vadd.f32 %v3352, 1.0
    %v3358 = vadd.f32 %v3354, 1.0
    %v3359 = vrcp.pop %v3355
    %v3360 = vmul.f32 1.0, %v3359
    %v3361 = vrcp.pop %v3356
    %v3362 = vmul.f32 1.0, %v3361
    %v3363 = vrcp.pop %v3357
    %v3364 = vmul.f32 1.0, %v3363
    %v3365 = vrcp.pop %v3358
    %v3366 = vmul.f32 1.0, %v3365
    %v3367 = vtanh.pop %v3339
    %v3368 = vtanh.pop %v3340
    %v3369 = vtanh.pop %v3341
    %v3370 = vtanh.pop %v3342
    %v3371 = vmul.f32 %v3360, %v3203
    %v3372 = vmul.f32 %v3362, %v3204
    %v3373 = vmul.f32 %v3364, %v3205
    %v3374 = vmul.f32 %v3366, %v3206
    %3379 = vrot.lane.b32.xlu0 %v3367, 64
    %v3380 = vpop.permute.xlu0 %3379
    %3381 = vrot.lane.b32.xlu0 %v3368, 64
    %v3382 = vpop.permute.xlu0 %3381
    %3383 = vrot.lane.b32.xlu0 %v3369, 64
    %v3384 = vpop.permute.xlu0 %3383
    %3385 = vrot.lane.b32.xlu0 %v3370, 64
    %v3386 = vpop.permute.xlu0 %3385
    %v3391 = vmul.f32 %v3360, %v3380
    %v3392 = vmul.f32 %v3362, %v3382
    %v3393 = vmul.f32 %v3364, %v3384
    %v3394 = vmul.f32 %v3366, %v3386
    %3399 = vrot.lane.b32.xlu0 %v3391, 32
    %v3400 = vpop.permute.xlu0 %3399
    %3401 = vrot.lane.b32.xlu0 %v3392, 32
    %v3402 = vpop.permute.xlu0 %3401
    %3403 = vrot.lane.b32.xlu0 %v3393, 32
    %v3404 = vpop.permute.xlu0 %3403
    %3405 = vrot.lane.b32.xlu0 %v3394, 32
    %v3406 = vpop.permute.xlu0 %3405
    %v3411 = vadd.f32 %v3371, %v3400
    %v3412 = vadd.f32 %v3372, %v3402
    %v3413 = vadd.f32 %v3373, %v3404
    %v3414 = vadd.f32 %v3374, %v3406
    %v3415 = vtanh.pop %v3411
    %v3416 = vtanh.pop %v3412
    %v3417 = vtanh.pop %v3413
    %v3418 = vtanh.pop %v3414
    %3423 = vrot.lane.b32.xlu0 %v3415, 64
    %v3424 = vpop.permute.xlu0 %3423
    %3425 = vrot.lane.b32.xlu0 %v3416, 64
    %v3426 = vpop.permute.xlu0 %3425
    %3427 = vrot.lane.b32.xlu0 %v3417, 64
    %v3428 = vpop.permute.xlu0 %3427
    %3429 = vrot.lane.b32.xlu0 %v3418, 64
    %v3430 = vpop.permute.xlu0 %3429
    %v3435 = vmul.f32 %v3360, %v3424
    %v3436 = vmul.f32 %v3362, %v3426
    %v3437 = vmul.f32 %v3364, %v3428
    %v3438 = vmul.f32 %v3366, %v3430
    %3443 = vrot.lane.b32.xlu0 %v3435, 32
    %v3444 = vpop.permute.xlu0 %3443
    %3445 = vrot.lane.b32.xlu0 %v3436, 32
    %v3446 = vpop.permute.xlu0 %3445
    %3447 = vrot.lane.b32.xlu0 %v3437, 32
    %v3448 = vpop.permute.xlu0 %3447
    %3449 = vrot.lane.b32.xlu0 %v3438, 32
    %v3450 = vpop.permute.xlu0 %3449
    %3455 = vst.msk [vmem:[#allocation3 + $0x6] sm:$0x1] %vm397, %v3444
    %3456 = vst.msk [vmem:[#allocation3 + $0xe] sm:$0x1] %vm397, %v3446
    %3457 = vst.msk [vmem:[#allocation3 + $0x16] sm:$0x1] %vm397, %v3448
    %3458 = vst.msk [vmem:[#allocation3 + $0x1e] sm:$0x1] %vm397, %v3450
    %v3459 = vrot.slane %v3436, 7
    %v3460 = vsel %vm403, %v3459, %v3435
    %v3461 = vrot.slane %v3437, 6
    %v3462 = vsel %vm406, %v3461, %v3460
    %v3463 = vrot.slane %v3438, 5
    %v3464 = vsel %vm409, %v3463, %v3462
    %3465 = vrot.lane.b32.xlu0 %v3464, 32
    %v3466 = vpop.permute.xlu0 %3465
    %v3467 = vsel %vm199, %v3466, 0
    %3469 = vmatprep.subr.mxu0 0.0
    %3470 = vmatpush1.msra.mxu0 0.0
    %3471 = vmatprep.subr.mxu0 0.0
    %3472 = vmatpush1.msra.mxu0 0.0
    %3473 = vmatprep.subr.mxu0 0.0
    %3474 = vmatpush1.msra.mxu0 0.0
    %3475 = vmatprep.subr.mxu0 0.0
    %3476 = vmatpush1.msra.mxu0 0.0
    %3477 = vmatprep.subr.mxu0 0.0
    %3478 = vmatpush1.msra.mxu0 0.0
    %3479 = vmatprep.subr.mxu0 0.0
    %3480 = vmatpush1.msra.mxu0 0.0
    %3481 = vmatprep.subr.mxu0 0.0
    %3482 = vmatpush1.msra.mxu0 0.0
    %3483 = vmatprep.subr.mxu0 0.0
    %3484 = vmatpush1.msra.mxu0 0.0
    %3485 = vmatprep.subr.mxu0 0.0
    %3486 = vmatpush1.msra.mxu0 0.0
    %3487 = vmatprep.subr.mxu0 0.0
    %3488 = vmatpush1.msra.mxu0 0.0
    %3489 = vmatprep.subr.mxu0 0.0
    %3490 = vmatpush1.msra.mxu0 0.0
    %3491 = vmatprep.subr.mxu0 0.0
    %3492 = vmatpush1.msra.mxu0 0.0
    %3493 = vmatprep.subr.mxu0 0.0
    %3494 = vmatpush1.msra.mxu0 %v1980
    %3495 = vmatprep.subr.mxu0 0.0
    %3496 = vmatpush1.msra.mxu0 %v1979
    %3497 = vmatprep.subr.mxu0 0.0
    %3498 = vmatpush1.msra.mxu0 %v1978
    %3499 = vmatprep.subr.mxu0 0.0
    %3500 = vmatpush1.msra.mxu0 %v1977
    %3501 = vmatprep.subr.mxu0 0.0
    %3502 = vmatpush2.msra.mxu0 0.0
    %3503 = vmatprep.subr.mxu0 0.0
    %3504 = vmatpush2.msra.mxu0 0.0
    %3505 = vmatprep.subr.mxu0 0.0
    %3506 = vmatpush2.msra.mxu0 0.0
    %3507 = vmatprep.subr.mxu0 0.0
    %3508 = vmatpush2.msra.mxu0 0.0
    %3509 = vmatprep.subr.mxu0 0.0
    %3510 = vmatpush2.msra.mxu0 0.0
    %3511 = vmatprep.subr.mxu0 0.0
    %3512 = vmatpush2.msra.mxu0 0.0
    %3513 = vmatprep.subr.mxu0 0.0
    %3514 = vmatpush2.msra.mxu0 0.0
    %3515 = vmatprep.subr.mxu0 0.0
    %3516 = vmatpush2.msra.mxu0 0.0
    %3517 = vmatprep.subr.mxu0 0.0
    %3518 = vmatpush2.msra.mxu0 0.0
    %3519 = vmatprep.subr.mxu0 0.0
    %3520 = vmatpush2.msra.mxu0 0.0
    %3521 = vmatprep.subr.mxu0 0.0
    %3522 = vmatpush2.msra.mxu0 0.0
    %3523 = vmatprep.subr.mxu0 0.0
    %3524 = vmatpush2.msra.mxu0 0.0
    %3525 = vmatprep.subr.mxu0 0.0
    %3526 = vmatpush2.msra.mxu0 0.0
    %3527 = vmatprep.subr.mxu0 0.0
    %3528 = vmatpush2.msra.mxu0 0.0
    %3529 = vmatprep.subr.mxu0 0.0
    %3530 = vmatpush2.msra.mxu0 0.0
    %3531 = vmatprep.subr.mxu0 0.0
    %3532 = vmatpush2.msra.mxu0 0.0
    %3533 = vmatprep.mubr.f32.mxu0 0.0
    %3534 = vmatmul.mubr.f32.gmra.mxu0 %v3467
    %v3535 = vpop.f32.mrf.mxu0
    %v3536 = vadd.f32 0.0, %v3535
    %v3537 = vpop.f32.mrf.mxu0
    %3538 = vdwg.mxu0
    %v3540 = vrot.slane %v3536, 1
    %v3541 = vrot.slane %v3536, 2
    %v3542 = vrot.slane %v3536, 3
    %v3547 = vadd.f32 %v2009, %v3536
    %v3548 = vadd.f32 %v2010, %v3540
    %v3549 = vadd.f32 %v2011, %v3541
    %v3550 = vadd.f32 %v2012, %v3542
    %v3551 = vxor.u32 %v3547, 2147483648
    %v3552 = vxor.u32 %v3548, 2147483648
    %v3553 = vxor.u32 %v3549, 2147483648
    %v3554 = vxor.u32 %v3550, 2147483648
    %v3555 = vmul.f32 %v3551, 1.442695
    %v3556 = vpow.pop %v3555
    %v3557 = vmul.f32 %v3552, 1.442695
    %v3558 = vpow.pop %v3557
    %v3559 = vmul.f32 %v3553, 1.442695
    %v3560 = vpow.pop %v3559
    %v3561 = vmul.f32 %v3554, 1.442695
    %v3562 = vpow.pop %v3561
    %v3563 = vadd.f32 %v3556, 1.0
    %v3564 = vadd.f32 %v3558, 1.0
    %v3565 = vadd.f32 %v3560, 1.0
    %v3566 = vadd.f32 %v3562, 1.0
    %v3567 = vrcp.pop %v3563
    %v3568 = vmul.f32 1.0, %v3567
    %v3569 = vrcp.pop %v3564
    %v3570 = vmul.f32 1.0, %v3569
    %v3571 = vrcp.pop %v3565
    %v3572 = vmul.f32 1.0, %v3571
    %v3573 = vrcp.pop %v3566
    %v3574 = vmul.f32 1.0, %v3573
    %v3575 = vtanh.pop %v3547
    %v3576 = vtanh.pop %v3548
    %v3577 = vtanh.pop %v3549
    %v3578 = vtanh.pop %v3550
    %v3579 = vmul.f32 %v3568, %v3411
    %v3580 = vmul.f32 %v3570, %v3412
    %v3581 = vmul.f32 %v3572, %v3413
    %v3582 = vmul.f32 %v3574, %v3414
    %3587 = vrot.lane.b32.xlu0 %v3575, 64
    %v3588 = vpop.permute.xlu0 %3587
    %3589 = vrot.lane.b32.xlu0 %v3576, 64
    %v3590 = vpop.permute.xlu0 %3589
    %3591 = vrot.lane.b32.xlu0 %v3577, 64
    %v3592 = vpop.permute.xlu0 %3591
    %3593 = vrot.lane.b32.xlu0 %v3578, 64
    %v3594 = vpop.permute.xlu0 %3593
    %v3599 = vmul.f32 %v3568, %v3588
    %v3600 = vmul.f32 %v3570, %v3590
    %v3601 = vmul.f32 %v3572, %v3592
    %v3602 = vmul.f32 %v3574, %v3594
    %3607 = vrot.lane.b32.xlu0 %v3599, 32
    %v3608 = vpop.permute.xlu0 %3607
    %3609 = vrot.lane.b32.xlu0 %v3600, 32
    %v3610 = vpop.permute.xlu0 %3609
    %3611 = vrot.lane.b32.xlu0 %v3601, 32
    %v3612 = vpop.permute.xlu0 %3611
    %3613 = vrot.lane.b32.xlu0 %v3602, 32
    %v3614 = vpop.permute.xlu0 %3613
    %v3619 = vadd.f32 %v3579, %v3608
    %v3620 = vadd.f32 %v3580, %v3610
    %v3621 = vadd.f32 %v3581, %v3612
    %v3622 = vadd.f32 %v3582, %v3614
    %v3623 = vtanh.pop %v3619
    %v3624 = vtanh.pop %v3620
    %v3625 = vtanh.pop %v3621
    %v3626 = vtanh.pop %v3622
    %3631 = vrot.lane.b32.xlu0 %v3623, 64
    %v3632 = vpop.permute.xlu0 %3631
    %3633 = vrot.lane.b32.xlu0 %v3624, 64
    %v3634 = vpop.permute.xlu0 %3633
    %3635 = vrot.lane.b32.xlu0 %v3625, 64
    %v3636 = vpop.permute.xlu0 %3635
    %3637 = vrot.lane.b32.xlu0 %v3626, 64
    %v3638 = vpop.permute.xlu0 %3637
    %v3643 = vmul.f32 %v3568, %v3632
    %v3644 = vmul.f32 %v3570, %v3634
    %v3645 = vmul.f32 %v3572, %v3636
    %v3646 = vmul.f32 %v3574, %v3638
    %3651 = vrot.lane.b32.xlu0 %v3643, 32
    %v3652 = vpop.permute.xlu0 %3651
    %3653 = vrot.lane.b32.xlu0 %v3644, 32
    %v3654 = vpop.permute.xlu0 %3653
    %3655 = vrot.lane.b32.xlu0 %v3645, 32
    %v3656 = vpop.permute.xlu0 %3655
    %3657 = vrot.lane.b32.xlu0 %v3646, 32
    %v3658 = vpop.permute.xlu0 %3657
    %3663 = vst.msk [vmem:[#allocation3 + $0x7] sm:$0x1] %vm397, %v3652
    %3664 = vst.msk [vmem:[#allocation3 + $0xf] sm:$0x1] %vm397, %v3654
    %3665 = vst.msk [vmem:[#allocation3 + $0x17] sm:$0x1] %vm397, %v3656
    %3666 = vst.msk [vmem:[#allocation3 + $0x1f] sm:$0x1] %vm397, %v3658
    %v3667 = vld [vmem:[#allocation3] sm:$0xff]
    %v3668 = vld [vmem:[#allocation3 + $0x8] sm:$0xff]
    %v3669 = vld [vmem:[#allocation3 + $0x10] sm:$0xff]
    %v3670 = vld [vmem:[#allocation3 + $0x18] sm:$0xff]
    %v3671 = vlaneseq
    %v3672 = vshrl.u32 %v3671, 7
    %v3673 = vsub.s32 0, %v3672
    %v3674 = vrot.slane %v3643, %v3673
    %v3675 = vlaneseq
    %v3676 = vshrl.u32 %v3675, 7
    %v3677 = vsub.s32 0, %v3676
    %v3678 = vrot.slane %v3644, %v3677
    %v3679 = vlaneseq
    %v3680 = vshrl.u32 %v3679, 7
    %v3681 = vsub.s32 0, %v3680
    %v3682 = vrot.slane %v3645, %v3681
    %v3683 = vlaneseq
    %v3684 = vshrl.u32 %v3683, 7
    %v3685 = vsub.s32 0, %v3684
    %v3686 = vrot.slane %v3646, %v3685
    %3691 = vrot.lane.b32.xlu0 %v3674, 32
    %v3692 = vpop.permute.xlu0 %3691
    %3693 = vrot.lane.b32.xlu0 %v3678, 32
    %v3694 = vpop.permute.xlu0 %3693
    %3695 = vrot.lane.b32.xlu0 %v3682, 32
    %v3696 = vpop.permute.xlu0 %3695
    %3697 = vrot.lane.b32.xlu0 %v3686, 32
    %v3698 = vpop.permute.xlu0 %3697
    %v3703 = vmul.f32 %v3667, %v3692
    %v3704 = vmul.f32 %v3668, %v3694
    %v3705 = vmul.f32 %v3669, %v3696
    %v3706 = vmul.f32 %v3670, %v3698
    %v3707 = vsel %vm199, %v3703, 0.0
    %3708 = vadd.xlane.f32.xlu0 %v3707
    %v3709 = vpop.xlane.xlu0 %3708
    %v3710 = vsel %vm199, %v3704, 0.0
    %3711 = vadd.xlane.f32.xlu0 %v3710
    %v3712 = vpop.xlane.xlu0 %3711
    %v3713 = vsel %vm199, %v3705, 0.0
    %3714 = vadd.xlane.f32.xlu0 %v3713
    %v3715 = vpop.xlane.xlu0 %3714
    %v3716 = vsel %vm199, %v3706, 0.0
    %3717 = vadd.xlane.f32.xlu0 %v3716
    %v3718 = vpop.xlane.xlu0 %3717
    %v3723 = vlaneseq
    %v3724 = vand.u32 %v3723, 127
    %v3725 = vlaneseq
    %v3726 = vshrl.u32 %v3725, 7
    %v3727 = vsub.s32 %v3724, %v3726
    %v3728 = vrot.slane %v3709, %v3727
    %v3729 = vlaneseq
    %v3730 = vshrl.u32 %v3729, 7
    %v3731 = vsub.s32 %v3724, %v3730
    %v3732 = vrot.slane %v3712, %v3731
    %v3733 = vlaneseq
    %v3734 = vshrl.u32 %v3733, 7
    %v3735 = vsub.s32 %v3724, %v3734
    %v3736 = vrot.slane %v3715, %v3735
    %v3737 = vlaneseq
    %v3738 = vshrl.u32 %v3737, 7
    %v3739 = vsub.s32 %v3724, %v3738
    %v3740 = vrot.slane %v3718, %v3739
    %v3741 = vsel %vm403, %v3732, %v3728
    %v3742 = vsel %vm406, %v3736, %v3741
    %v3743 = vsel %vm409, %v3740, %v3742
    %vm3745 = vcmask 60416
    %v3746 = vsel %vm3745, %v3743, -inf
    %3747 = vmax.xlane.f32.xlu0 %v3746
    %v3748 = vpop.xlane.xlu0 %3747
    %v3750 = vlaneseq
    %v3751 = vshrl.u32 %v3750, 7
    %v3752 = vsub.s32 0, %v3751
    %v3753 = vrot.slane %v3748, %v3752
    %v3754 = vlaneseq
    %v3755 = vshrl.u32 %v3754, 7
    %v3756 = vsub.s32 1, %v3755
    %v3757 = vrot.slane %v3748, %v3756
    %v3758 = vlaneseq
    %v3759 = vshrl.u32 %v3758, 7
    %v3760 = vsub.s32 2, %v3759
    %v3761 = vrot.slane %v3748, %v3760
    %v3762 = vlaneseq
    %v3763 = vshrl.u32 %v3762, 7
    %v3764 = vsub.s32 3, %v3763
    %v3765 = vrot.slane %v3748, %v3764
    %v3770 = vsub.f32 %v3709, %v3753
    %v3771 = vsub.f32 %v3712, %v3757
    %v3772 = vsub.f32 %v3715, %v3761
    %v3773 = vsub.f32 %v3718, %v3765
    %v3774 = vmul.f32 %v3770, 1.442695
    %v3775 = vpow.pop %v3774
    %v3776 = vmul.f32 %v3771, 1.442695
    %v3777 = vpow.pop %v3776
    %v3778 = vmul.f32 %v3772, 1.442695
    %v3779 = vpow.pop %v3778
    %v3780 = vmul.f32 %v3773, 1.442695
    %v3781 = vpow.pop %v3780
    %3786 = vset.pattern.permute.xlu0 0
    %3787 = vperm.xlu0 %3786, %v3775
    %v3788 = vpop.permute.xlu0 %3787
    %3789 = vset.pattern.permute.xlu0 0
    %3790 = vperm.xlu0 %3789, %v3777
    %v3791 = vpop.permute.xlu0 %3790
    %3792 = vset.pattern.permute.xlu0 0
    %3793 = vperm.xlu0 %3792, %v3779
    %v3794 = vpop.permute.xlu0 %3793
    %3795 = vset.pattern.permute.xlu0 0
    %3796 = vperm.xlu0 %3795, %v3781
    %v3797 = vpop.permute.xlu0 %3796
    %v3798 = vlaneseq
    %v3799 = vshrl.u32 %v3798, 7
    %v3800 = vsub.s32 %v3724, %v3799
    %v3801 = vrot.slane %v3788, %v3800
    %v3802 = vlaneseq
    %v3803 = vshrl.u32 %v3802, 7
    %v3804 = vsub.s32 %v3724, %v3803
    %v3805 = vrot.slane %v3791, %v3804
    %v3806 = vlaneseq
    %v3807 = vshrl.u32 %v3806, 7
    %v3808 = vsub.s32 %v3724, %v3807
    %v3809 = vrot.slane %v3794, %v3808
    %v3810 = vlaneseq
    %v3811 = vshrl.u32 %v3810, 7
    %v3812 = vsub.s32 %v3724, %v3811
    %v3813 = vrot.slane %v3797, %v3812
    %v3814 = vsel %vm403, %v3805, %v3801
    %v3815 = vsel %vm406, %v3809, %v3814
    %v3816 = vsel %vm409, %v3813, %v3815
    %v3818 = vsel %vm3745, %v3816, 0.0
    %3819 = vadd.xlane.f32.xlu0 %v3818
    %v3820 = vpop.xlane.xlu0 %3819
    %v3821 = vrcp.pop %v3820
    %v3823 = vlaneseq
    %v3824 = vshrl.u32 %v3823, 7
    %v3825 = vsub.s32 0, %v3824
    %v3826 = vrot.slane %v3821, %v3825
    %v3827 = vlaneseq
    %v3828 = vshrl.u32 %v3827, 7
    %v3829 = vsub.s32 1, %v3828
    %v3830 = vrot.slane %v3821, %v3829
    %v3831 = vlaneseq
    %v3832 = vshrl.u32 %v3831, 7
    %v3833 = vsub.s32 2, %v3832
    %v3834 = vrot.slane %v3821, %v3833
    %v3835 = vlaneseq
    %v3836 = vshrl.u32 %v3835, 7
    %v3837 = vsub.s32 3, %v3836
    %v3838 = vrot.slane %v3821, %v3837
    %v3843 = vmul.f32 %v3775, %v3826
    %v3844 = vmul.f32 %v3777, %v3830
    %v3845 = vmul.f32 %v3779, %v3834
    %v3846 = vmul.f32 %v3781, %v3838
    %3848 = vset.pattern.permute.xlu0 0
    %3849 = vperm.xlu0 %3848, %v3843
    %v3850 = vpop.permute.xlu0 %3849
    %3853 = vset.pattern.permute.xlu0 0
    %3854 = vperm.xlu0 %3853, %v3844
    %v3855 = vpop.permute.xlu0 %3854
    %3858 = vset.pattern.permute.xlu0 0
    %3859 = vperm.xlu0 %3858, %v3845
    %v3860 = vpop.permute.xlu0 %3859
    %3863 = vset.pattern.permute.xlu0 0
    %3864 = vperm.xlu0 %3863, %v3846
    %v3865 = vpop.permute.xlu0 %3864
    %v3867 = vmul.f32 %v3667, %v3850
    %v3868 = vmul.f32 %v3668, %v3855
    %v3869 = vmul.f32 %v3669, %v3860
    %v3870 = vmul.f32 %v3670, %v3865
    %v3871 = vsel %vm199, %v3867, 0.0
    %v3872 = vrot.slane %v3871, 4
    %v3873 = vadd.f32 %v3871, %v3872
    %v3874 = vrot.slane %v3873, 2
    %v3875 = vadd.f32 %v3873, %v3874
    %v3876 = vrot.slane %v3875, 1
    %v3877 = vadd.f32 %v3875, %v3876
    %v3878 = vsel %vm199, %v3868, 0.0
    %v3879 = vrot.slane %v3878, 4
    %v3880 = vadd.f32 %v3878, %v3879
    %v3881 = vrot.slane %v3880, 2
    %v3882 = vadd.f32 %v3880, %v3881
    %v3883 = vrot.slane %v3882, 1
    %v3884 = vadd.f32 %v3882, %v3883
    %v3885 = vsel %vm199, %v3869, 0.0
    %v3886 = vrot.slane %v3885, 4
    %v3887 = vadd.f32 %v3885, %v3886
    %v3888 = vrot.slane %v3887, 2
    %v3889 = vadd.f32 %v3887, %v3888
    %v3890 = vrot.slane %v3889, 1
    %v3891 = vadd.f32 %v3889, %v3890
    %v3892 = vsel %vm199, %v3870, 0.0
    %v3893 = vrot.slane %v3892, 4
    %v3894 = vadd.f32 %v3892, %v3893
    %v3895 = vrot.slane %v3894, 2
    %v3896 = vadd.f32 %v3894, %v3895
    %v3897 = vrot.slane %v3896, 1
    %v3898 = vadd.f32 %v3896, %v3897
    %v3899 = vld [vmem:[%s7] sm:$0xff]
    %v3900 = vld [vmem:[%s7 + $0x8] sm:$0xff]
    %v3901 = vld [vmem:[%s7 + $0x10] sm:$0xff]
    %v3902 = vld [vmem:[%s7 + $0x18] sm:$0xff]
    %v3903 = vld [vmem:[%s8] sm:$0x1]
    %v3905 = vlaneseq
    %v3906 = vshrl.u32 %v3905, 7
    %v3907 = vsub.s32 0, %v3906
    %v3908 = vrot.slane %v3903, %v3907
    %v3914 = vsel %vm403, %v3884, %v3877
    %v3915 = vsel %vm406, %v3891, %v3914
    %v3916 = vsel %vm409, %v3898, %v3915
    %v3917 = vsel %vm199, %v3916, 0
    %3919 = vmatprep.subr.mxu0 0.0
    %3920 = vmatpush1.msra.mxu0 0.0
    %3921 = vmatprep.subr.mxu0 0.0
    %3922 = vmatpush1.msra.mxu0 0.0
    %3923 = vmatprep.subr.mxu0 0.0
    %3924 = vmatpush1.msra.mxu0 0.0
    %3925 = vmatprep.subr.mxu0 0.0
    %3926 = vmatpush1.msra.mxu0 0.0
    %3927 = vmatprep.subr.mxu0 0.0
    %3928 = vmatpush1.msra.mxu0 0.0
    %3929 = vmatprep.subr.mxu0 0.0
    %3930 = vmatpush1.msra.mxu0 0.0
    %3931 = vmatprep.subr.mxu0 0.0
    %3932 = vmatpush1.msra.mxu0 0.0
    %3933 = vmatprep.subr.mxu0 0.0
    %3934 = vmatpush1.msra.mxu0 0.0
    %3935 = vmatprep.subr.mxu0 0.0
    %3936 = vmatpush1.msra.mxu0 0.0
    %3937 = vmatprep.subr.mxu0 0.0
    %3938 = vmatpush1.msra.mxu0 0.0
    %3939 = vmatprep.subr.mxu0 0.0
    %3940 = vmatpush1.msra.mxu0 0.0
    %3941 = vmatprep.subr.mxu0 0.0
    %3942 = vmatpush1.msra.mxu0 0.0
    %3943 = vmatprep.subr.mxu0 0.0
    %3944 = vmatpush1.msra.mxu0 %v3902
    %3945 = vmatprep.subr.mxu0 0.0
    %3946 = vmatpush1.msra.mxu0 %v3901
    %3947 = vmatprep.subr.mxu0 0.0
    %3948 = vmatpush1.msra.mxu0 %v3900
    %3949 = vmatprep.subr.mxu0 0.0
    %3950 = vmatpush1.msra.mxu0 %v3899
    %3951 = vmatprep.subr.mxu0 0.0
    %3952 = vmatpush2.msra.mxu0 0.0
    %3953 = vmatprep.subr.mxu0 0.0
    %3954 = vmatpush2.msra.mxu0 0.0
    %3955 = vmatprep.subr.mxu0 0.0
    %3956 = vmatpush2.msra.mxu0 0.0
    %3957 = vmatprep.subr.mxu0 0.0
    %3958 = vmatpush2.msra.mxu0 0.0
    %3959 = vmatprep.subr.mxu0 0.0
    %3960 = vmatpush2.msra.mxu0 0.0
    %3961 = vmatprep.subr.mxu0 0.0
    %3962 = vmatpush2.msra.mxu0 0.0
    %3963 = vmatprep.subr.mxu0 0.0
    %3964 = vmatpush2.msra.mxu0 0.0
    %3965 = vmatprep.subr.mxu0 0.0
    %3966 = vmatpush2.msra.mxu0 0.0
    %3967 = vmatprep.subr.mxu0 0.0
    %3968 = vmatpush2.msra.mxu0 0.0
    %3969 = vmatprep.subr.mxu0 0.0
    %3970 = vmatpush2.msra.mxu0 0.0
    %3971 = vmatprep.subr.mxu0 0.0
    %3972 = vmatpush2.msra.mxu0 0.0
    %3973 = vmatprep.subr.mxu0 0.0
    %3974 = vmatpush2.msra.mxu0 0.0
    %3975 = vmatprep.subr.mxu0 0.0
    %3976 = vmatpush2.msra.mxu0 0.0
    %3977 = vmatprep.subr.mxu0 0.0
    %3978 = vmatpush2.msra.mxu0 0.0
    %3979 = vmatprep.subr.mxu0 0.0
    %3980 = vmatpush2.msra.mxu0 0.0
    %3981 = vmatprep.subr.mxu0 0.0
    %3982 = vmatpush2.msra.mxu0 0.0
    %3983 = vmatprep.mubr.f32.mxu0 0.0
    %3984 = vmatmul.mubr.f32.gmra.mxu0 %v3917
    %v3985 = vpop.f32.mrf.mxu0
    %v3986 = vadd.f32 %v3908, %v3985
    %v3987 = vpop.f32.mrf.mxu0
    %3988 = vdwg.mxu0
    %vm3989 = vcmask 125952
    %3990 = vst.msk [vmem:[#allocation7] sm:$0xf] %vm3989, %v3986
    // Predicated region
    $region42: #{tpu_custom_call.1} parent=1 // pred_check
      _
    $region43: #{tpu_custom_call.1} parent=1 // pred_check_branch
      %3992 = sbr.rel (0) target = $region45
    $region44: #{tpu_custom_call.1} parent=1 // pred_region
      %s3994 = ssub.s32 64, 64
      %3995 = vsyncadd [#allocation6], %s3994
      %s3997 = sshll.u32 [#allocation7], 4
      %s3998 = int_to_ptr.vmem [resolvable:$true] %s3997
      %4000 = dma.vmem_to_hbm [thread:$0]  %s3998, 64, %s9, [#allocation6]
    $region45: #{tpu_custom_call.1} parent=1 // pred_fallthru
      _
    // Predicated region
    $region46: #{tpu_custom_call.1} parent=1 // pred_check
      _
    $region47: #{tpu_custom_call.1} parent=1 // pred_check_branch
      %4002 = sbr.rel (0) target = $region49
    $region48: #{tpu_custom_call.1} parent=1 // pred_region
      %4003 = dma.done [#allocation6], 64
    $region49: #{tpu_custom_call.1} parent=1 // pred_fallthru
      _
    %4004 = vsyncpa [#allocation5], 1
    %4005 = vsyncpa [#allocation6], 1

</llo_original>
